<compile_context>
chip_gen: v7x
topology: tpu7x:2x2x1
jax: 0.10.0
libtpu: 0.0.40
codegen_flags: <defaults>
</compile_context>

<pallas_src>
import functools
import math

import jax
import jax.numpy as jnp
from jax import lax
from jax.experimental import pallas as pl
from jax.experimental.pallas import tpu as pltpu

LN_EPS = 1e-5


def _layernorm(x, gamma, beta):
    # x: (N, D) f32; gamma/beta: (1, D) f32
    mean = jnp.mean(x, axis=-1, keepdims=True)
    var = jnp.mean((x - mean) ** 2, axis=-1, keepdims=True)
    xn = (x - mean) * lax.rsqrt(var + LN_EPS)
    return xn * gamma + beta


def layer_kernel(x_ref, a_g_ref, a_b_ref, wqkv_ref, wo_ref, bo_ref,
                 f_g_ref, f_b_ref, w1_ref, b1_ref, w2_ref, b2_ref, o_ref,
                 *, heads, dim_head):
    # x_ref: (N, D) f32 (leading batch dim squeezed out by BlockSpec).
    x = x_ref[...]
    n = x.shape[0]
    inner = heads * dim_head
    scale = dim_head ** (-0.5)
    bf16 = jnp.bfloat16

    # ---------------- PreNorm + Attention + residual ----------------
    xn = _layernorm(x, a_g_ref[...], a_b_ref[...])                      # f32
    qkv = jnp.dot(xn.astype(bf16), wqkv_ref[...],
                  preferred_element_type=jnp.float32)                   # (N, 3*inner) f32

    # fold 1/sqrt(dh) into q (cheap (N, inner) VPU pass instead of per-head (N,N) scale)
    q = (qkv[:, 0 * inner:1 * inner] * scale).reshape(n, heads, dim_head)
    k = qkv[:, 1 * inner:2 * inner].reshape(n, heads, dim_head)
    v = qkv[:, 2 * inner:3 * inner].reshape(n, heads, dim_head)

    # head-batched attention: one batched contraction per step, no per-head slices/concat
    dots = jnp.einsum("nhd,mhd->hnm", q.astype(bf16), k.astype(bf16),
                      preferred_element_type=jnp.float32)               # (H, N, N) f32
    dots = dots - jnp.max(dots, axis=-1, keepdims=True)
    p = jnp.exp(dots)                                                   # f32 (EUP)
    attn = p * pl.reciprocal(jnp.sum(p, axis=-1, keepdims=True), approx=True)
    ctx = jnp.einsum("hnm,mhd->nhd", attn.astype(bf16), v.astype(bf16),
                     preferred_element_type=jnp.float32)                # (N, H, dh) f32
    ctx = ctx.reshape(n, inner)

    attn_out = jnp.dot(ctx.astype(bf16), wo_ref[...],
                       preferred_element_type=jnp.float32) + bo_ref[...]
    x1 = attn_out + x                                                   # residual, f32

    # ---------------- PreNorm + FeedForward + residual ----------------
    xn2 = _layernorm(x1, f_g_ref[...], f_b_ref[...])
    h = jnp.dot(xn2.astype(bf16), w1_ref[...],
                preferred_element_type=jnp.float32) + b1_ref[...]
    # exact (erf-based) GELU in f32, matching torch.nn.GELU() default
    h = 0.5 * h * (1.0 + lax.erf(h * (1.0 / math.sqrt(2.0))))
    ff_out = jnp.dot(h.astype(bf16), w2_ref[...],
                     preferred_element_type=jnp.float32) + b2_ref[...]

    o_ref[...] = (ff_out + x1).astype(o_ref.dtype)


def _layer_vmem_bytes(N, D, inner, mlp_dim, heads):
    # bf16 weights (double-buffered), f32 biases/LN, f32 in/out activation blocks
    weights = 2 * 2 * (D * 3 * inner + inner * D + D * mlp_dim + mlp_dim * D)
    small = 2 * 4 * (6 * D + mlp_dim)
    acts = 2 * 4 * (2 * N * D)
    # in-kernel intermediates (qkv, per-head scores, MLP hidden), generous headroom
    inter = 4 * (N * 3 * inner + heads * N * N + N * mlp_dim + 4 * N * D)
    total = weights + small + acts + 4 * inter + (2 << 20)
    return int(min(max(total, 32 << 20), 100 << 20))


def transformer_layer(x, attn_p, ff_p, heads, dim_head):
    B, N, D = x.shape
    inner = heads * dim_head
    mlp_dim = ff_p["w1"].shape[1]
    kernel = functools.partial(layer_kernel, heads=heads, dim_head=dim_head)

    def wspec(shape):
        return pl.BlockSpec(shape, lambda b: tuple(0 for _ in shape))

    return pl.pallas_call(
        kernel,
        out_shape=jax.ShapeDtypeStruct((B, N, D), x.dtype),
        grid_spec=pltpu.PrefetchScalarGridSpec(
            num_scalar_prefetch=0,
            grid=(B,),
            in_specs=[
                pl.BlockSpec((None, N, D), lambda b: (b, 0, 0)),   # x (batch-squeezed)
                wspec((1, D)),               # attn ln gamma (f32)
                wspec((1, D)),               # attn ln beta  (f32)
                wspec((D, 3 * inner)),       # W_qkv (bf16)
                wspec((inner, D)),           # W_out (bf16)
                wspec((1, D)),               # b_out (f32)
                wspec((1, D)),               # ff ln gamma (f32)
                wspec((1, D)),               # ff ln beta  (f32)
                wspec((D, mlp_dim)),         # W1 (bf16)
                wspec((1, mlp_dim)),         # b1 (f32)
                wspec((mlp_dim, D)),         # W2 (bf16)
                wspec((1, D)),               # b2 (f32)
            ],
            out_specs=pl.BlockSpec((None, N, D), lambda b: (b, 0, 0)),
        ),
        compiler_params=pltpu.CompilerParams(
            dimension_semantics=("parallel",),
            vmem_limit_bytes=_layer_vmem_bytes(N, D, inner, mlp_dim, heads),
        ),
    )(x,
      attn_p["ln_g"], attn_p["ln_b"], attn_p["w_qkv"], attn_p["w_out"], attn_p["b_out"],
      ff_p["ln_g"], ff_p["ln_b"], ff_p["w1"], ff_p["b1"], ff_p["w2"], ff_p["b2"])


def transformer_forward(x, layers, *, heads, dim_head):
    for attn_p, ff_p in layers:
        x = transformer_layer(x, attn_p, ff_p, heads, dim_head)
    return x


def init_transformer_params(key, dim, depth, heads, dim_head, mlp_dim):
    inner = heads * dim_head
    layers = []
    for _ in range(depth):
        keys = jax.random.split(key, 7)
        key = keys[0]

        def u(k, shape, fan_in, dtype):
            bound = 1.0 / math.sqrt(fan_in)
            return jax.random.uniform(k, shape, jnp.float32, -bound, bound).astype(dtype)

        attn_p = {
            "ln_g": jnp.ones((1, dim), jnp.float32),
            "ln_b": jnp.zeros((1, dim), jnp.float32),
            "w_qkv": u(keys[1], (dim, 3 * inner), dim, jnp.bfloat16),
            "w_out": u(keys[2], (inner, dim), inner, jnp.bfloat16),
            "b_out": u(keys[3], (1, dim), inner, jnp.float32),
        }
        ff_p = {
            "ln_g": jnp.ones((1, dim), jnp.float32),
            "ln_b": jnp.zeros((1, dim), jnp.float32),
            "w1": u(keys[4], (dim, mlp_dim), dim, jnp.bfloat16),
            "b1": u(keys[5], (1, mlp_dim), dim, jnp.float32),
            "w2": u(keys[6], (mlp_dim, dim), mlp_dim, jnp.bfloat16),
            "b2": jnp.zeros((1, dim), jnp.float32),
        }
        layers.append((attn_p, ff_p))
    return layers


# --- clean pure-JAX reference with matching numerics (bf16 matmul inputs, f32 accum) ---
def _ref_forward(x, layers, heads, dim_head):
    bf16 = jnp.bfloat16

    def ln(t, g, b):
        m = jnp.mean(t, -1, keepdims=True)
        v = jnp.mean((t - m) ** 2, -1, keepdims=True)
        return (t - m) * lax.rsqrt(v + LN_EPS) * g + b

    def mm(a, w):
        return jnp.einsum("...k,kn->...n", a.astype(bf16), w.astype(bf16),
                          preferred_element_type=jnp.float32)

    inner = heads * dim_head
    B, N, _ = x.shape
    scale = dim_head ** (-0.5)
    for ap, fp in layers:
        xn = ln(x, ap["ln_g"], ap["ln_b"])
        qkv = mm(xn, ap["w_qkv"])
        q, k, v = jnp.split(qkv, 3, axis=-1)
        resh = lambda t: t.reshape(B, N, heads, dim_head).transpose(0, 2, 1, 3)
        q, k, v = resh(q) * scale, resh(k), resh(v)
        dots = jnp.einsum("bhnd,bhmd->bhnm", q.astype(bf16), k.astype(bf16),
                          preferred_element_type=jnp.float32)
        attn = jax.nn.softmax(dots, axis=-1)
        o = jnp.einsum("bhnm,bhmd->bhnd", attn.astype(bf16), v.astype(bf16),
                       preferred_element_type=jnp.float32)
        o = o.transpose(0, 2, 1, 3).reshape(B, N, inner)
        x = mm(o, ap["w_out"]) + ap["b_out"] + x
        xn2 = ln(x, fp["ln_g"], fp["ln_b"])
        h = mm(xn2, fp["w1"]) + fp["b1"]
        h = 0.5 * h * (1.0 + lax.erf(h / math.sqrt(2.0)))
        x = mm(h, fp["w2"]) + fp["b2"] + x
    return x


if __name__ == "__main__":
    dim, depth, heads, dim_head, mlp_dim = 32, 2, 4, 8, 64
    B, N = 2, 8

    key = jax.random.PRNGKey(0)
    kx, kp = jax.random.split(key)
    x = jax.random.normal(kx, (B, N, dim), jnp.float32)
    layers = init_transformer_params(kp, dim, depth, heads, dim_head, mlp_dim)

    fwd = jax.jit(functools.partial(transformer_forward, heads=heads, dim_head=dim_head))
    out = jax.block_until_ready(fwd(x, layers))

    ref = _ref_forward(x, layers, heads, dim_head)
    assert out.shape == (B, N, dim)
    # bf16 MXU inputs + approx reciprocal in softmax -> slightly widened tolerance
    assert jnp.allclose(out, ref, atol=1e-2, rtol=1e-2), "mismatch vs pure-JAX reference"

    print("KERNEL_OK")
</pallas_src>

<mosaic_0001>
module attributes {stable_mosaic.version = 11 : i64} {
  func.func @layer_kernel(%arg0: i32, %arg1: memref<1x8x32xf32, #tpu.memory_space<vmem>>, %arg2: memref<1x32xf32, #tpu.memory_space<vmem>>, %arg3: memref<1x32xf32, #tpu.memory_space<vmem>>, %arg4: memref<32x96xbf16, #tpu.memory_space<vmem>>, %arg5: memref<32x32xbf16, #tpu.memory_space<vmem>>, %arg6: memref<1x32xf32, #tpu.memory_space<vmem>>, %arg7: memref<1x32xf32, #tpu.memory_space<vmem>>, %arg8: memref<1x32xf32, #tpu.memory_space<vmem>>, %arg9: memref<32x64xbf16, #tpu.memory_space<vmem>>, %arg10: memref<1x64xf32, #tpu.memory_space<vmem>>, %arg11: memref<64x32xbf16, #tpu.memory_space<vmem>>, %arg12: memref<1x32xf32, #tpu.memory_space<vmem>>, %arg13: memref<1x8x32xf32, #tpu.memory_space<vmem>>) attributes {dimension_semantics = [#tpu.dimension_semantics<parallel>], iteration_bounds = array<i64: 2>, scalar_prefetch = 0 : i64, scratch_operands = 0 : i64, tpu.core_type = #tpu.core_type<tc>, window_params = [{transform_indices = @transform_0, window_bounds = array<i64: 1, 8, 32>}, {pipeline_mode = #tpu.pipeline_mode<synchronous>, transform_indices = @transform_1, window_bounds = array<i64: 1, 32>}, {pipeline_mode = #tpu.pipeline_mode<synchronous>, transform_indices = @transform_2, window_bounds = array<i64: 1, 32>}, {pipeline_mode = #tpu.pipeline_mode<synchronous>, transform_indices = @transform_3, window_bounds = array<i64: 32, 96>}, {pipeline_mode = #tpu.pipeline_mode<synchronous>, transform_indices = @transform_4, window_bounds = array<i64: 32, 32>}, {pipeline_mode = #tpu.pipeline_mode<synchronous>, transform_indices = @transform_5, window_bounds = array<i64: 1, 32>}, {pipeline_mode = #tpu.pipeline_mode<synchronous>, transform_indices = @transform_6, window_bounds = array<i64: 1, 32>}, {pipeline_mode = #tpu.pipeline_mode<synchronous>, transform_indices = @transform_7, window_bounds = array<i64: 1, 32>}, {pipeline_mode = #tpu.pipeline_mode<synchronous>, transform_indices = @transform_8, window_bounds = array<i64: 32, 64>}, {pipeline_mode = #tpu.pipeline_mode<synchronous>, transform_indices = @transform_9, window_bounds = array<i64: 1, 64>}, {pipeline_mode = #tpu.pipeline_mode<synchronous>, transform_indices = @transform_10, window_bounds = array<i64: 64, 32>}, {pipeline_mode = #tpu.pipeline_mode<synchronous>, transform_indices = @transform_11, window_bounds = array<i64: 1, 32>}, {transform_indices = @transform_12, window_bounds = array<i64: 1, 8, 32>}]} {
    %c0 = arith.constant 0 : index
    %c0_0 = arith.constant 0 : index
    %c0_1 = arith.constant 0 : index
    %0 = vector.load %arg1[%c0, %c0_0, %c0_1] : memref<1x8x32xf32, #tpu.memory_space<vmem>>, vector<1x8x32xf32>
    %1 = vector.shape_cast %0 : vector<1x8x32xf32> to vector<8x32xf32>
    %c0_2 = arith.constant 0 : index
    %c0_3 = arith.constant 0 : index
    %2 = vector.load %arg2[%c0_2, %c0_3] : memref<1x32xf32, #tpu.memory_space<vmem>>, vector<1x32xf32>
    %c0_4 = arith.constant 0 : index
    %c0_5 = arith.constant 0 : index
    %3 = vector.load %arg3[%c0_4, %c0_5] : memref<1x32xf32, #tpu.memory_space<vmem>>, vector<1x32xf32>
    %cst = arith.constant dense<0.000000e+00> : vector<8xf32>
    %4 = vector.multi_reduction <add>, %1, %cst [1] : vector<8x32xf32> to vector<8xf32>
    %5 = vector.shape_cast %4 : vector<8xf32> to vector<8x1xf32>
    %cst_6 = arith.constant 3.200000e+01 : f32
    %6 = vector.broadcast %cst_6 : f32 to vector<8x1xf32>
    %7 = arith.divf %5, %6 : vector<8x1xf32>
    %8 = vector.broadcast %7 : vector<8x1xf32> to vector<8x32xf32>
    %9 = arith.subf %1, %8 : vector<8x32xf32>
    %10 = arith.mulf %9, %9 : vector<8x32xf32>
    %cst_7 = arith.constant dense<0.000000e+00> : vector<8xf32>
    %11 = vector.multi_reduction <add>, %10, %cst_7 [1] : vector<8x32xf32> to vector<8xf32>
    %12 = vector.shape_cast %11 : vector<8xf32> to vector<8x1xf32>
    %cst_8 = arith.constant 3.200000e+01 : f32
    %13 = vector.broadcast %cst_8 : f32 to vector<8x1xf32>
    %14 = arith.divf %12, %13 : vector<8x1xf32>
    %15 = vector.broadcast %7 : vector<8x1xf32> to vector<8x32xf32>
    %16 = arith.subf %1, %15 : vector<8x32xf32>
    %cst_9 = arith.constant 9.99999974E-6 : f32
    %17 = vector.broadcast %cst_9 : f32 to vector<8x1xf32>
    %18 = arith.addf %14, %17 : vector<8x1xf32>
    %19 = math.rsqrt %18 : vector<8x1xf32>
    %20 = vector.broadcast %19 : vector<8x1xf32> to vector<8x32xf32>
    %21 = arith.mulf %16, %20 : vector<8x32xf32>
    %22 = vector.broadcast %2 : vector<1x32xf32> to vector<8x32xf32>
    %23 = arith.mulf %21, %22 : vector<8x32xf32>
    %24 = vector.broadcast %3 : vector<1x32xf32> to vector<8x32xf32>
    %25 = arith.addf %23, %24 : vector<8x32xf32>
    %26 = arith.truncf %25 : vector<8x32xf32> to vector<8x32xbf16>
    %c0_10 = arith.constant 0 : index
    %c0_11 = arith.constant 0 : index
    %27 = vector.load %arg4[%c0_10, %c0_11] : memref<32x96xbf16, #tpu.memory_space<vmem>>, vector<32x96xbf16>
    %cst_12 = arith.constant dense<0.000000e+00> : vector<8x96xf32>
    %28 = tpu.matmul %26, %27, %cst_12 {dimension_numbers = #tpu.dot_dimension_numbers<[1], [0], [0], [1], [0, 0, 1, 1], [], []>} : vector<8x32xbf16>, vector<32x96xbf16>, vector<8x96xf32> -> vector<8x96xf32>
    %29 = vector.extract_strided_slice %28 {offsets = [0, 0], sizes = [8, 32], strides = [1, 1]} : vector<8x96xf32> to vector<8x32xf32>
    %cst_13 = arith.constant 0.353553385 : f32
    %30 = vector.broadcast %cst_13 : f32 to vector<8x32xf32>
    %31 = arith.mulf %29, %30 : vector<8x32xf32>
    %32 = vector.shape_cast %31 : vector<8x32xf32> to vector<8x4x8xf32>
    %33 = vector.extract_strided_slice %28 {offsets = [0, 32], sizes = [8, 32], strides = [1, 1]} : vector<8x96xf32> to vector<8x32xf32>
    %34 = vector.shape_cast %33 : vector<8x32xf32> to vector<8x4x8xf32>
    %35 = vector.extract_strided_slice %28 {offsets = [0, 64], sizes = [8, 32], strides = [1, 1]} : vector<8x96xf32> to vector<8x32xf32>
    %36 = vector.shape_cast %35 : vector<8x32xf32> to vector<8x4x8xf32>
    %37 = arith.truncf %32 : vector<8x4x8xf32> to vector<8x4x8xbf16>
    %38 = arith.truncf %34 : vector<8x4x8xf32> to vector<8x4x8xbf16>
    "tpu.trace_start"() <{level = 10 : i32, message = "nhd,mhd->hnm"}> : () -> ()
    %cst_14 = arith.constant dense<0.000000e+00> : vector<4x8x8xf32>
    %39 = tpu.matmul %37, %38, %cst_14 {dimension_numbers = #tpu.dot_dimension_numbers<[2], [2], [0], [0], [0, 1, 0, 0, 1, 0], [1], [1]>} : vector<8x4x8xbf16>, vector<8x4x8xbf16>, vector<4x8x8xf32> -> vector<4x8x8xf32>
    "tpu.trace_stop"() : () -> ()
    %cst_15 = arith.constant dense<0xFF800000> : vector<4x8xf32>
    %40 = vector.multi_reduction <maximumf>, %39, %cst_15 [2] : vector<4x8x8xf32> to vector<4x8xf32>
    %41 = vector.shape_cast %40 : vector<4x8xf32> to vector<4x8x1xf32>
    %42 = vector.broadcast %41 : vector<4x8x1xf32> to vector<4x8x8xf32>
    %43 = arith.subf %39, %42 : vector<4x8x8xf32>
    %44 = math.exp %43 : vector<4x8x8xf32>
    %cst_16 = arith.constant dense<0.000000e+00> : vector<4x8xf32>
    %45 = vector.multi_reduction <add>, %44, %cst_16 [2] : vector<4x8x8xf32> to vector<4x8xf32>
    %46 = vector.shape_cast %45 : vector<4x8xf32> to vector<4x8x1xf32>
    %47 = tpu.reciprocal %46 {approx = true} : vector<4x8x1xf32> -> vector<4x8x1xf32>
    %48 = vector.broadcast %47 : vector<4x8x1xf32> to vector<4x8x8xf32>
    %49 = arith.mulf %44, %48 : vector<4x8x8xf32>
    %50 = arith.truncf %49 : vector<4x8x8xf32> to vector<4x8x8xbf16>
    %51 = arith.truncf %36 : vector<8x4x8xf32> to vector<8x4x8xbf16>
    "tpu.trace_start"() <{level = 10 : i32, message = "hnm,mhd->nhd"}> : () -> ()
    %cst_17 = arith.constant dense<0.000000e+00> : vector<4x8x8xf32>
    %52 = tpu.matmul %51, %50, %cst_17 {dimension_numbers = #tpu.dot_dimension_numbers<[0], [2], [2], [1], [0, 1, 0, 2, 1, 1], [1], [0]>} : vector<8x4x8xbf16>, vector<4x8x8xbf16>, vector<4x8x8xf32> -> vector<4x8x8xf32>
    %53 = tpu.transpose %52, [2, 0, 1] : vector<4x8x8xf32> -> vector<8x4x8xf32>
    "tpu.trace_stop"() : () -> ()
    %54 = vector.shape_cast %53 : vector<8x4x8xf32> to vector<8x32xf32>
    %55 = arith.truncf %54 : vector<8x32xf32> to vector<8x32xbf16>
    %c0_18 = arith.constant 0 : index
    %c0_19 = arith.constant 0 : index
    %56 = vector.load %arg5[%c0_18, %c0_19] : memref<32x32xbf16, #tpu.memory_space<vmem>>, vector<32x32xbf16>
    %cst_20 = arith.constant dense<0.000000e+00> : vector<8x32xf32>
    %57 = tpu.matmul %55, %56, %cst_20 {dimension_numbers = #tpu.dot_dimension_numbers<[1], [0], [0], [1], [0, 0, 1, 1], [], []>} : vector<8x32xbf16>, vector<32x32xbf16>, vector<8x32xf32> -> vector<8x32xf32>
    %c0_21 = arith.constant 0 : index
    %c0_22 = arith.constant 0 : index
    %58 = vector.load %arg6[%c0_21, %c0_22] : memref<1x32xf32, #tpu.memory_space<vmem>>, vector<1x32xf32>
    %59 = vector.broadcast %58 : vector<1x32xf32> to vector<8x32xf32>
    %60 = arith.addf %57, %59 : vector<8x32xf32>
    %61 = arith.addf %60, %1 : vector<8x32xf32>
    %c0_23 = arith.constant 0 : index
    %c0_24 = arith.constant 0 : index
    %62 = vector.load %arg7[%c0_23, %c0_24] : memref<1x32xf32, #tpu.memory_space<vmem>>, vector<1x32xf32>
    %c0_25 = arith.constant 0 : index
    %c0_26 = arith.constant 0 : index
    %63 = vector.load %arg8[%c0_25, %c0_26] : memref<1x32xf32, #tpu.memory_space<vmem>>, vector<1x32xf32>
    %cst_27 = arith.constant dense<0.000000e+00> : vector<8xf32>
    %64 = vector.multi_reduction <add>, %61, %cst_27 [1] : vector<8x32xf32> to vector<8xf32>
    %65 = vector.shape_cast %64 : vector<8xf32> to vector<8x1xf32>
    %cst_28 = arith.constant 3.200000e+01 : f32
    %66 = vector.broadcast %cst_28 : f32 to vector<8x1xf32>
    %67 = arith.divf %65, %66 : vector<8x1xf32>
    %68 = vector.broadcast %67 : vector<8x1xf32> to vector<8x32xf32>
    %69 = arith.subf %61, %68 : vector<8x32xf32>
    %70 = arith.mulf %69, %69 : vector<8x32xf32>
    %cst_29 = arith.constant dense<0.000000e+00> : vector<8xf32>
    %71 = vector.multi_reduction <add>, %70, %cst_29 [1] : vector<8x32xf32> to vector<8xf32>
    %72 = vector.shape_cast %71 : vector<8xf32> to vector<8x1xf32>
    %cst_30 = arith.constant 3.200000e+01 : f32
    %73 = vector.broadcast %cst_30 : f32 to vector<8x1xf32>
    %74 = arith.divf %72, %73 : vector<8x1xf32>
    %75 = vector.broadcast %67 : vector<8x1xf32> to vector<8x32xf32>
    %76 = arith.subf %61, %75 : vector<8x32xf32>
    %cst_31 = arith.constant 9.99999974E-6 : f32
    %77 = vector.broadcast %cst_31 : f32 to vector<8x1xf32>
    %78 = arith.addf %74, %77 : vector<8x1xf32>
    %79 = math.rsqrt %78 : vector<8x1xf32>
    %80 = vector.broadcast %79 : vector<8x1xf32> to vector<8x32xf32>
    %81 = arith.mulf %76, %80 : vector<8x32xf32>
    %82 = vector.broadcast %62 : vector<1x32xf32> to vector<8x32xf32>
    %83 = arith.mulf %81, %82 : vector<8x32xf32>
    %84 = vector.broadcast %63 : vector<1x32xf32> to vector<8x32xf32>
    %85 = arith.addf %83, %84 : vector<8x32xf32>
    %86 = arith.truncf %85 : vector<8x32xf32> to vector<8x32xbf16>
    %c0_32 = arith.constant 0 : index
    %c0_33 = arith.constant 0 : index
    %87 = vector.load %arg9[%c0_32, %c0_33] : memref<32x64xbf16, #tpu.memory_space<vmem>>, vector<32x64xbf16>
    %cst_34 = arith.constant dense<0.000000e+00> : vector<8x64xf32>
    %88 = tpu.matmul %86, %87, %cst_34 {dimension_numbers = #tpu.dot_dimension_numbers<[1], [0], [0], [1], [0, 0, 1, 1], [], []>} : vector<8x32xbf16>, vector<32x64xbf16>, vector<8x64xf32> -> vector<8x64xf32>
    %c0_35 = arith.constant 0 : index
    %c0_36 = arith.constant 0 : index
    %89 = vector.load %arg10[%c0_35, %c0_36] : memref<1x64xf32, #tpu.memory_space<vmem>>, vector<1x64xf32>
    %90 = vector.broadcast %89 : vector<1x64xf32> to vector<8x64xf32>
    %91 = arith.addf %88, %90 : vector<8x64xf32>
    %cst_37 = arith.constant 5.000000e-01 : f32
    %92 = vector.broadcast %cst_37 : f32 to vector<8x64xf32>
    %93 = arith.mulf %92, %91 : vector<8x64xf32>
    %cst_38 = arith.constant 0.707106769 : f32
    %94 = vector.broadcast %cst_38 : f32 to vector<8x64xf32>
    %95 = arith.mulf %91, %94 : vector<8x64xf32>
    %96 = math.erf %95 : vector<8x64xf32>
    %cst_39 = arith.constant 1.000000e+00 : f32
    %97 = vector.broadcast %cst_39 : f32 to vector<8x64xf32>
    %98 = arith.addf %97, %96 : vector<8x64xf32>
    %99 = arith.mulf %93, %98 : vector<8x64xf32>
    %100 = arith.truncf %99 : vector<8x64xf32> to vector<8x64xbf16>
    %c0_40 = arith.constant 0 : index
    %c0_41 = arith.constant 0 : index
    %101 = vector.load %arg11[%c0_40, %c0_41] : memref<64x32xbf16, #tpu.memory_space<vmem>>, vector<64x32xbf16>
    %cst_42 = arith.constant dense<0.000000e+00> : vector<8x32xf32>
    %102 = tpu.matmul %100, %101, %cst_42 {dimension_numbers = #tpu.dot_dimension_numbers<[1], [0], [0], [1], [0, 0, 1, 1], [], []>} : vector<8x64xbf16>, vector<64x32xbf16>, vector<8x32xf32> -> vector<8x32xf32>
    %c0_43 = arith.constant 0 : index
    %c0_44 = arith.constant 0 : index
    %103 = vector.load %arg12[%c0_43, %c0_44] : memref<1x32xf32, #tpu.memory_space<vmem>>, vector<1x32xf32>
    %104 = vector.broadcast %103 : vector<1x32xf32> to vector<8x32xf32>
    %105 = arith.addf %102, %104 : vector<8x32xf32>
    %106 = arith.addf %105, %61 : vector<8x32xf32>
    %c0_45 = arith.constant 0 : index
    %c0_46 = arith.constant 0 : index
    %c0_47 = arith.constant 0 : index
    %107 = vector.load %arg13[%c0_45, %c0_46, %c0_47] : memref<1x8x32xf32, #tpu.memory_space<vmem>>, vector<1x8x32xf32>
    %108 = vector.shape_cast %107 : vector<1x8x32xf32> to vector<8x32xf32>
    %109 = vector.shape_cast %106 : vector<8x32xf32> to vector<1x8x32xf32>
    tpu.vector_store %arg13[%c0_45, %c0_46, %c0_47], %109 {strides = array<i32>} : memref<1x8x32xf32, #tpu.memory_space<vmem>>, vector<1x8x32xf32>,
    return
  }
  func.func @transform_0(%arg0: i32) -> (i32, i32, i32) {
    %c0_i32 = arith.constant 0 : i32
    %c0_i32_0 = arith.constant 0 : i32
    %c0_i32_1 = arith.constant 0 : i32
    return %arg0, %c0_i32, %c0_i32_0 : i32, i32, i32
  }
  func.func @transform_1(%arg0: i32) -> (i32, i32) {
    %c0_i32 = arith.constant 0 : i32
    %c0_i32_0 = arith.constant 0 : i32
    %c0_i32_1 = arith.constant 0 : i32
    return %c0_i32, %c0_i32_0 : i32, i32
  }
  func.func @transform_2(%arg0: i32) -> (i32, i32) {
    %c0_i32 = arith.constant 0 : i32
    %c0_i32_0 = arith.constant 0 : i32
    %c0_i32_1 = arith.constant 0 : i32
    return %c0_i32, %c0_i32_0 : i32, i32
  }
  func.func @transform_3(%arg0: i32) -> (i32, i32) {
    %c0_i32 = arith.constant 0 : i32
    %c0_i32_0 = arith.constant 0 : i32
    %c0_i32_1 = arith.constant 0 : i32
    return %c0_i32, %c0_i32_0 : i32, i32
  }
  func.func @transform_4(%arg0: i32) -> (i32, i32) {
    %c0_i32 = arith.constant 0 : i32
    %c0_i32_0 = arith.constant 0 : i32
    %c0_i32_1 = arith.constant 0 : i32
    return %c0_i32, %c0_i32_0 : i32, i32
  }
  func.func @transform_5(%arg0: i32) -> (i32, i32) {
    %c0_i32 = arith.constant 0 : i32
    %c0_i32_0 = arith.constant 0 : i32
    %c0_i32_1 = arith.constant 0 : i32
    return %c0_i32, %c0_i32_0 : i32, i32
  }
  func.func @transform_6(%arg0: i32) -> (i32, i32) {
    %c0_i32 = arith.constant 0 : i32
    %c0_i32_0 = arith.constant 0 : i32
    %c0_i32_1 = arith.constant 0 : i32
    return %c0_i32, %c0_i32_0 : i32, i32
  }
  func.func @transform_7(%arg0: i32) -> (i32, i32) {
    %c0_i32 = arith.constant 0 : i32
    %c0_i32_0 = arith.constant 0 : i32
    %c0_i32_1 = arith.constant 0 : i32
    return %c0_i32, %c0_i32_0 : i32, i32
  }
  func.func @transform_8(%arg0: i32) -> (i32, i32) {
    %c0_i32 = arith.constant 0 : i32
    %c0_i32_0 = arith.constant 0 : i32
    %c0_i32_1 = arith.constant 0 : i32
    return %c0_i32, %c0_i32_0 : i32, i32
  }
  func.func @transform_9(%arg0: i32) -> (i32, i32) {
    %c0_i32 = arith.constant 0 : i32
    %c0_i32_0 = arith.constant 0 : i32
    %c0_i32_1 = arith.constant 0 : i32
    return %c0_i32, %c0_i32_0 : i32, i32
  }
  func.func @transform_10(%arg0: i32) -> (i32, i32) {
    %c0_i32 = arith.constant 0 : i32
    %c0_i32_0 = arith.constant 0 : i32
    %c0_i32_1 = arith.constant 0 : i32
    return %c0_i32, %c0_i32_0 : i32, i32
  }
  func.func @transform_11(%arg0: i32) -> (i32, i32) {
    %c0_i32 = arith.constant 0 : i32
    %c0_i32_0 = arith.constant 0 : i32
    %c0_i32_1 = arith.constant 0 : i32
    return %c0_i32, %c0_i32_0 : i32, i32
  }
  func.func @transform_12(%arg0: i32) -> (i32, i32, i32) {
    %c0_i32 = arith.constant 0 : i32
    %c0_i32_0 = arith.constant 0 : i32
    %c0_i32_1 = arith.constant 0 : i32
    return %arg0, %c0_i32, %c0_i32_0 : i32, i32, i32
  }
}

module attributes {stable_mosaic.version = 11 : i64} {
  func.func @layer_kernel(%arg0: i32, %arg1: memref<1x8x32xf32, #tpu.memory_space<vmem>>, %arg2: memref<1x32xf32, #tpu.memory_space<vmem>>, %arg3: memref<1x32xf32, #tpu.memory_space<vmem>>, %arg4: memref<32x96xbf16, #tpu.memory_space<vmem>>, %arg5: memref<32x32xbf16, #tpu.memory_space<vmem>>, %arg6: memref<1x32xf32, #tpu.memory_space<vmem>>, %arg7: memref<1x32xf32, #tpu.memory_space<vmem>>, %arg8: memref<1x32xf32, #tpu.memory_space<vmem>>, %arg9: memref<32x64xbf16, #tpu.memory_space<vmem>>, %arg10: memref<1x64xf32, #tpu.memory_space<vmem>>, %arg11: memref<64x32xbf16, #tpu.memory_space<vmem>>, %arg12: memref<1x32xf32, #tpu.memory_space<vmem>>, %arg13: memref<1x8x32xf32, #tpu.memory_space<vmem>>) attributes {dimension_semantics = [#tpu.dimension_semantics<parallel>], iteration_bounds = array<i64: 2>, scalar_prefetch = 0 : i64, scratch_operands = 0 : i64, tpu.core_type = #tpu.core_type<tc>, window_params = [{transform_indices = @transform_0, window_bounds = array<i64: 1, 8, 32>}, {pipeline_mode = #tpu.pipeline_mode<synchronous>, transform_indices = @transform_1, window_bounds = array<i64: 1, 32>}, {pipeline_mode = #tpu.pipeline_mode<synchronous>, transform_indices = @transform_2, window_bounds = array<i64: 1, 32>}, {pipeline_mode = #tpu.pipeline_mode<synchronous>, transform_indices = @transform_3, window_bounds = array<i64: 32, 96>}, {pipeline_mode = #tpu.pipeline_mode<synchronous>, transform_indices = @transform_4, window_bounds = array<i64: 32, 32>}, {pipeline_mode = #tpu.pipeline_mode<synchronous>, transform_indices = @transform_5, window_bounds = array<i64: 1, 32>}, {pipeline_mode = #tpu.pipeline_mode<synchronous>, transform_indices = @transform_6, window_bounds = array<i64: 1, 32>}, {pipeline_mode = #tpu.pipeline_mode<synchronous>, transform_indices = @transform_7, window_bounds = array<i64: 1, 32>}, {pipeline_mode = #tpu.pipeline_mode<synchronous>, transform_indices = @transform_8, window_bounds = array<i64: 32, 64>}, {pipeline_mode = #tpu.pipeline_mode<synchronous>, transform_indices = @transform_9, window_bounds = array<i64: 1, 64>}, {pipeline_mode = #tpu.pipeline_mode<synchronous>, transform_indices = @transform_10, window_bounds = array<i64: 64, 32>}, {pipeline_mode = #tpu.pipeline_mode<synchronous>, transform_indices = @transform_11, window_bounds = array<i64: 1, 32>}, {transform_indices = @transform_12, window_bounds = array<i64: 1, 8, 32>}]} {
    %c0 = arith.constant 0 : index
    %c0_0 = arith.constant 0 : index
    %c0_1 = arith.constant 0 : index
    %0 = vector.load %arg1[%c0, %c0_0, %c0_1] : memref<1x8x32xf32, #tpu.memory_space<vmem>>, vector<1x8x32xf32>
    %1 = vector.shape_cast %0 : vector<1x8x32xf32> to vector<8x32xf32>
    %c0_2 = arith.constant 0 : index
    %c0_3 = arith.constant 0 : index
    %2 = vector.load %arg2[%c0_2, %c0_3] : memref<1x32xf32, #tpu.memory_space<vmem>>, vector<1x32xf32>
    %c0_4 = arith.constant 0 : index
    %c0_5 = arith.constant 0 : index
    %3 = vector.load %arg3[%c0_4, %c0_5] : memref<1x32xf32, #tpu.memory_space<vmem>>, vector<1x32xf32>
    %cst = arith.constant dense<0.000000e+00> : vector<8xf32>
    %4 = vector.multi_reduction <add>, %1, %cst [1] : vector<8x32xf32> to vector<8xf32>
    %5 = vector.shape_cast %4 : vector<8xf32> to vector<8x1xf32>
    %cst_6 = arith.constant 3.200000e+01 : f32
    %6 = vector.broadcast %cst_6 : f32 to vector<8x1xf32>
    %7 = arith.divf %5, %6 : vector<8x1xf32>
    %8 = vector.broadcast %7 : vector<8x1xf32> to vector<8x32xf32>
    %9 = arith.subf %1, %8 : vector<8x32xf32>
    %10 = arith.mulf %9, %9 : vector<8x32xf32>
    %cst_7 = arith.constant dense<0.000000e+00> : vector<8xf32>
    %11 = vector.multi_reduction <add>, %10, %cst_7 [1] : vector<8x32xf32> to vector<8xf32>
    %12 = vector.shape_cast %11 : vector<8xf32> to vector<8x1xf32>
    %cst_8 = arith.constant 3.200000e+01 : f32
    %13 = vector.broadcast %cst_8 : f32 to vector<8x1xf32>
    %14 = arith.divf %12, %13 : vector<8x1xf32>
    %15 = vector.broadcast %7 : vector<8x1xf32> to vector<8x32xf32>
    %16 = arith.subf %1, %15 : vector<8x32xf32>
    %cst_9 = arith.constant 9.99999974E-6 : f32
    %17 = vector.broadcast %cst_9 : f32 to vector<8x1xf32>
    %18 = arith.addf %14, %17 : vector<8x1xf32>
    %19 = math.rsqrt %18 : vector<8x1xf32>
    %20 = vector.broadcast %19 : vector<8x1xf32> to vector<8x32xf32>
    %21 = arith.mulf %16, %20 : vector<8x32xf32>
    %22 = vector.broadcast %2 : vector<1x32xf32> to vector<8x32xf32>
    %23 = arith.mulf %21, %22 : vector<8x32xf32>
    %24 = vector.broadcast %3 : vector<1x32xf32> to vector<8x32xf32>
    %25 = arith.addf %23, %24 : vector<8x32xf32>
    %26 = arith.truncf %25 : vector<8x32xf32> to vector<8x32xbf16>
    %c0_10 = arith.constant 0 : index
    %c0_11 = arith.constant 0 : index
    %27 = vector.load %arg4[%c0_10, %c0_11] : memref<32x96xbf16, #tpu.memory_space<vmem>>, vector<32x96xbf16>
    %cst_12 = arith.constant dense<0.000000e+00> : vector<8x96xf32>
    %28 = tpu.matmul %26, %27, %cst_12 {dimension_numbers = #tpu.dot_dimension_numbers<[1], [0], [0], [1], [0, 0, 1, 1], [], []>} : vector<8x32xbf16>, vector<32x96xbf16>, vector<8x96xf32> -> vector<8x96xf32>
    %29 = vector.extract_strided_slice %28 {offsets = [0, 0], sizes = [8, 32], strides = [1, 1]} : vector<8x96xf32> to vector<8x32xf32>
    %cst_13 = arith.constant 0.353553385 : f32
    %30 = vector.broadcast %cst_13 : f32 to vector<8x32xf32>
    %31 = arith.mulf %29, %30 : vector<8x32xf32>
    %32 = vector.shape_cast %31 : vector<8x32xf32> to vector<8x4x8xf32>
    %33 = vector.extract_strided_slice %28 {offsets = [0, 32], sizes = [8, 32], strides = [1, 1]} : vector<8x96xf32> to vector<8x32xf32>
    %34 = vector.shape_cast %33 : vector<8x32xf32> to vector<8x4x8xf32>
    %35 = vector.extract_strided_slice %28 {offsets = [0, 64], sizes = [8, 32], strides = [1, 1]} : vector<8x96xf32> to vector<8x32xf32>
    %36 = vector.shape_cast %35 : vector<8x32xf32> to vector<8x4x8xf32>
    %37 = arith.truncf %32 : vector<8x4x8xf32> to vector<8x4x8xbf16>
    %38 = arith.truncf %34 : vector<8x4x8xf32> to vector<8x4x8xbf16>
    "tpu.trace_start"() <{level = 10 : i32, message = "nhd,mhd->hnm"}> : () -> ()
    %cst_14 = arith.constant dense<0.000000e+00> : vector<4x8x8xf32>
    %39 = tpu.matmul %37, %38, %cst_14 {dimension_numbers = #tpu.dot_dimension_numbers<[2], [2], [0], [0], [0, 1, 0, 0, 1, 0], [1], [1]>} : vector<8x4x8xbf16>, vector<8x4x8xbf16>, vector<4x8x8xf32> -> vector<4x8x8xf32>
    "tpu.trace_stop"() : () -> ()
    %cst_15 = arith.constant dense<0xFF800000> : vector<4x8xf32>
    %40 = vector.multi_reduction <maximumf>, %39, %cst_15 [2] : vector<4x8x8xf32> to vector<4x8xf32>
    %41 = vector.shape_cast %40 : vector<4x8xf32> to vector<4x8x1xf32>
    %42 = vector.broadcast %41 : vector<4x8x1xf32> to vector<4x8x8xf32>
    %43 = arith.subf %39, %42 : vector<4x8x8xf32>
    %44 = math.exp %43 : vector<4x8x8xf32>
    %cst_16 = arith.constant dense<0.000000e+00> : vector<4x8xf32>
    %45 = vector.multi_reduction <add>, %44, %cst_16 [2] : vector<4x8x8xf32> to vector<4x8xf32>
    %46 = vector.shape_cast %45 : vector<4x8xf32> to vector<4x8x1xf32>
    %47 = tpu.reciprocal %46 {approx = true} : vector<4x8x1xf32> -> vector<4x8x1xf32>
    %48 = vector.broadcast %47 : vector<4x8x1xf32> to vector<4x8x8xf32>
    %49 = arith.mulf %44, %48 : vector<4x8x8xf32>
    %50 = arith.truncf %49 : vector<4x8x8xf32> to vector<4x8x8xbf16>
    %51 = arith.truncf %36 : vector<8x4x8xf32> to vector<8x4x8xbf16>
    "tpu.trace_start"() <{level = 10 : i32, message = "hnm,mhd->nhd"}> : () -> ()
    %cst_17 = arith.constant dense<0.000000e+00> : vector<4x8x8xf32>
    %52 = tpu.matmul %51, %50, %cst_17 {dimension_numbers = #tpu.dot_dimension_numbers<[0], [2], [2], [1], [0, 1, 0, 2, 1, 1], [1], [0]>} : vector<8x4x8xbf16>, vector<4x8x8xbf16>, vector<4x8x8xf32> -> vector<4x8x8xf32>
    %53 = tpu.transpose %52, [2, 0, 1] : vector<4x8x8xf32> -> vector<8x4x8xf32>
    "tpu.trace_stop"() : () -> ()
    %54 = vector.shape_cast %53 : vector<8x4x8xf32> to vector<8x32xf32>
    %55 = arith.truncf %54 : vector<8x32xf32> to vector<8x32xbf16>
    %c0_18 = arith.constant 0 : index
    %c0_19 = arith.constant 0 : index
    %56 = vector.load %arg5[%c0_18, %c0_19] : memref<32x32xbf16, #tpu.memory_space<vmem>>, vector<32x32xbf16>
    %cst_20 = arith.constant dense<0.000000e+00> : vector<8x32xf32>
    %57 = tpu.matmul %55, %56, %cst_20 {dimension_numbers = #tpu.dot_dimension_numbers<[1], [0], [0], [1], [0, 0, 1, 1], [], []>} : vector<8x32xbf16>, vector<32x32xbf16>, vector<8x32xf32> -> vector<8x32xf32>
    %c0_21 = arith.constant 0 : index
    %c0_22 = arith.constant 0 : index
    %58 = vector.load %arg6[%c0_21, %c0_22] : memref<1x32xf32, #tpu.memory_space<vmem>>, vector<1x32xf32>
    %59 = vector.broadcast %58 : vector<1x32xf32> to vector<8x32xf32>
    %60 = arith.addf %57, %59 : vector<8x32xf32>
    %61 = arith.addf %60, %1 : vector<8x32xf32>
    %c0_23 = arith.constant 0 : index
    %c0_24 = arith.constant 0 : index
    %62 = vector.load %arg7[%c0_23, %c0_24] : memref<1x32xf32, #tpu.memory_space<vmem>>, vector<1x32xf32>
    %c0_25 = arith.constant 0 : index
    %c0_26 = arith.constant 0 : index
    %63 = vector.load %arg8[%c0_25, %c0_26] : memref<1x32xf32, #tpu.memory_space<vmem>>, vector<1x32xf32>
    %cst_27 = arith.constant dense<0.000000e+00> : vector<8xf32>
    %64 = vector.multi_reduction <add>, %61, %cst_27 [1] : vector<8x32xf32> to vector<8xf32>
    %65 = vector.shape_cast %64 : vector<8xf32> to vector<8x1xf32>
    %cst_28 = arith.constant 3.200000e+01 : f32
    %66 = vector.broadcast %cst_28 : f32 to vector<8x1xf32>
    %67 = arith.divf %65, %66 : vector<8x1xf32>
    %68 = vector.broadcast %67 : vector<8x1xf32> to vector<8x32xf32>
    %69 = arith.subf %61, %68 : vector<8x32xf32>
    %70 = arith.mulf %69, %69 : vector<8x32xf32>
    %cst_29 = arith.constant dense<0.000000e+00> : vector<8xf32>
    %71 = vector.multi_reduction <add>, %70, %cst_29 [1] : vector<8x32xf32> to vector<8xf32>
    %72 = vector.shape_cast %71 : vector<8xf32> to vector<8x1xf32>
    %cst_30 = arith.constant 3.200000e+01 : f32
    %73 = vector.broadcast %cst_30 : f32 to vector<8x1xf32>
    %74 = arith.divf %72, %73 : vector<8x1xf32>
    %75 = vector.broadcast %67 : vector<8x1xf32> to vector<8x32xf32>
    %76 = arith.subf %61, %75 : vector<8x32xf32>
    %cst_31 = arith.constant 9.99999974E-6 : f32
    %77 = vector.broadcast %cst_31 : f32 to vector<8x1xf32>
    %78 = arith.addf %74, %77 : vector<8x1xf32>
    %79 = math.rsqrt %78 : vector<8x1xf32>
    %80 = vector.broadcast %79 : vector<8x1xf32> to vector<8x32xf32>
    %81 = arith.mulf %76, %80 : vector<8x32xf32>
    %82 = vector.broadcast %62 : vector<1x32xf32> to vector<8x32xf32>
    %83 = arith.mulf %81, %82 : vector<8x32xf32>
    %84 = vector.broadcast %63 : vector<1x32xf32> to vector<8x32xf32>
    %85 = arith.addf %83, %84 : vector<8x32xf32>
    %86 = arith.truncf %85 : vector<8x32xf32> to vector<8x32xbf16>
    %c0_32 = arith.constant 0 : index
    %c0_33 = arith.constant 0 : index
    %87 = vector.load %arg9[%c0_32, %c0_33] : memref<32x64xbf16, #tpu.memory_space<vmem>>, vector<32x64xbf16>
    %cst_34 = arith.constant dense<0.000000e+00> : vector<8x64xf32>
    %88 = tpu.matmul %86, %87, %cst_34 {dimension_numbers = #tpu.dot_dimension_numbers<[1], [0], [0], [1], [0, 0, 1, 1], [], []>} : vector<8x32xbf16>, vector<32x64xbf16>, vector<8x64xf32> -> vector<8x64xf32>
    %c0_35 = arith.constant 0 : index
    %c0_36 = arith.constant 0 : index
    %89 = vector.load %arg10[%c0_35, %c0_36] : memref<1x64xf32, #tpu.memory_space<vmem>>, vector<1x64xf32>
    %90 = vector.broadcast %89 : vector<1x64xf32> to vector<8x64xf32>
    %91 = arith.addf %88, %90 : vector<8x64xf32>
    %cst_37 = arith.constant 5.000000e-01 : f32
    %92 = vector.broadcast %cst_37 : f32 to vector<8x64xf32>
    %93 = arith.mulf %92, %91 : vector<8x64xf32>
    %cst_38 = arith.constant 0.707106769 : f32
    %94 = vector.broadcast %cst_38 : f32 to vector<8x64xf32>
    %95 = arith.mulf %91, %94 : vector<8x64xf32>
    %96 = math.erf %95 : vector<8x64xf32>
    %cst_39 = arith.constant 1.000000e+00 : f32
    %97 = vector.broadcast %cst_39 : f32 to vector<8x64xf32>
    %98 = arith.addf %97, %96 : vector<8x64xf32>
    %99 = arith.mulf %93, %98 : vector<8x64xf32>
    %100 = arith.truncf %99 : vector<8x64xf32> to vector<8x64xbf16>
    %c0_40 = arith.constant 0 : index
    %c0_41 = arith.constant 0 : index
    %101 = vector.load %arg11[%c0_40, %c0_41] : memref<64x32xbf16, #tpu.memory_space<vmem>>, vector<64x32xbf16>
    %cst_42 = arith.constant dense<0.000000e+00> : vector<8x32xf32>
    %102 = tpu.matmul %100, %101, %cst_42 {dimension_numbers = #tpu.dot_dimension_numbers<[1], [0], [0], [1], [0, 0, 1, 1], [], []>} : vector<8x64xbf16>, vector<64x32xbf16>, vector<8x32xf32> -> vector<8x32xf32>
    %c0_43 = arith.constant 0 : index
    %c0_44 = arith.constant 0 : index
    %103 = vector.load %arg12[%c0_43, %c0_44] : memref<1x32xf32, #tpu.memory_space<vmem>>, vector<1x32xf32>
    %104 = vector.broadcast %103 : vector<1x32xf32> to vector<8x32xf32>
    %105 = arith.addf %102, %104 : vector<8x32xf32>
    %106 = arith.addf %105, %61 : vector<8x32xf32>
    %c0_45 = arith.constant 0 : index
    %c0_46 = arith.constant 0 : index
    %c0_47 = arith.constant 0 : index
    %107 = vector.load %arg13[%c0_45, %c0_46, %c0_47] : memref<1x8x32xf32, #tpu.memory_space<vmem>>, vector<1x8x32xf32>
    %108 = vector.shape_cast %107 : vector<1x8x32xf32> to vector<8x32xf32>
    %109 = vector.shape_cast %106 : vector<8x32xf32> to vector<1x8x32xf32>
    tpu.vector_store %arg13[%c0_45, %c0_46, %c0_47], %109 {strides = array<i32>} : memref<1x8x32xf32, #tpu.memory_space<vmem>>, vector<1x8x32xf32>,
    return
  }
  func.func @transform_0(%arg0: i32) -> (i32, i32, i32) {
    %c0_i32 = arith.constant 0 : i32
    %c0_i32_0 = arith.constant 0 : i32
    %c0_i32_1 = arith.constant 0 : i32
    return %arg0, %c0_i32, %c0_i32_0 : i32, i32, i32
  }
  func.func @transform_1(%arg0: i32) -> (i32, i32) {
    %c0_i32 = arith.constant 0 : i32
    %c0_i32_0 = arith.constant 0 : i32
    %c0_i32_1 = arith.constant 0 : i32
    return %c0_i32, %c0_i32_0 : i32, i32
  }
  func.func @transform_2(%arg0: i32) -> (i32, i32) {
    %c0_i32 = arith.constant 0 : i32
    %c0_i32_0 = arith.constant 0 : i32
    %c0_i32_1 = arith.constant 0 : i32
    return %c0_i32, %c0_i32_0 : i32, i32
  }
  func.func @transform_3(%arg0: i32) -> (i32, i32) {
    %c0_i32 = arith.constant 0 : i32
    %c0_i32_0 = arith.constant 0 : i32
    %c0_i32_1 = arith.constant 0 : i32
    return %c0_i32, %c0_i32_0 : i32, i32
  }
  func.func @transform_4(%arg0: i32) -> (i32, i32) {
    %c0_i32 = arith.constant 0 : i32
    %c0_i32_0 = arith.constant 0 : i32
    %c0_i32_1 = arith.constant 0 : i32
    return %c0_i32, %c0_i32_0 : i32, i32
  }
  func.func @transform_5(%arg0: i32) -> (i32, i32) {
    %c0_i32 = arith.constant 0 : i32
    %c0_i32_0 = arith.constant 0 : i32
    %c0_i32_1 = arith.constant 0 : i32
    return %c0_i32, %c0_i32_0 : i32, i32
  }
  func.func @transform_6(%arg0: i32) -> (i32, i32) {
    %c0_i32 = arith.constant 0 : i32
    %c0_i32_0 = arith.constant 0 : i32
    %c0_i32_1 = arith.constant 0 : i32
    return %c0_i32, %c0_i32_0 : i32, i32
  }
  func.func @transform_7(%arg0: i32) -> (i32, i32) {
    %c0_i32 = arith.constant 0 : i32
    %c0_i32_0 = arith.constant 0 : i32
    %c0_i32_1 = arith.constant 0 : i32
    return %c0_i32, %c0_i32_0 : i32, i32
  }
  func.func @transform_8(%arg0: i32) -> (i32, i32) {
    %c0_i32 = arith.constant 0 : i32
    %c0_i32_0 = arith.constant 0 : i32
    %c0_i32_1 = arith.constant 0 : i32
    return %c0_i32, %c0_i32_0 : i32, i32
  }
  func.func @transform_9(%arg0: i32) -> (i32, i32) {
    %c0_i32 = arith.constant 0 : i32
    %c0_i32_0 = arith.constant 0 : i32
    %c0_i32_1 = arith.constant 0 : i32
    return %c0_i32, %c0_i32_0 : i32, i32
  }
  func.func @transform_10(%arg0: i32) -> (i32, i32) {
    %c0_i32 = arith.constant 0 : i32
    %c0_i32_0 = arith.constant 0 : i32
    %c0_i32_1 = arith.constant 0 : i32
    return %c0_i32, %c0_i32_0 : i32, i32
  }
  func.func @transform_11(%arg0: i32) -> (i32, i32) {
    %c0_i32 = arith.constant 0 : i32
    %c0_i32_0 = arith.constant 0 : i32
    %c0_i32_1 = arith.constant 0 : i32
    return %c0_i32, %c0_i32_0 : i32, i32
  }
  func.func @transform_12(%arg0: i32) -> (i32, i32, i32) {
    %c0_i32 = arith.constant 0 : i32
    %c0_i32_0 = arith.constant 0 : i32
    %c0_i32_1 = arith.constant 0 : i32
    return %arg0, %c0_i32, %c0_i32_0 : i32, i32, i32
  }
}

</mosaic_0001>

<llo_original>
// kernel: transformer_forward.3
$region0: #{transformer_forward.3}
  #allocation0 [shape = 'u32[]', space=smem, size = 0x4, offset = 0x4, fixed_abs, tag = 'smem constant byte address 0x4 - core index']
  #allocation1 [shape = 'u32[144,128]{1,0:T(1,128)}', space=vmem, size = 0x12000, scoped, tag = 'internal scratch']
  %s0 = inlined_call_operand.vmem [shape: f32[2,8,32], index: 0, kind: input, shape index: {}]
  %s1 = inlined_call_operand.vmem [shape: f32[1,32], index: 1, kind: input, shape index: {}]
  %s2 = inlined_call_operand.vmem [shape: f32[1,32], index: 2, kind: input, shape index: {}]
  %s3 = inlined_call_operand.vmem [shape: bf16[32,96], index: 3, kind: input, shape index: {}]
  %s4 = inlined_call_operand.vmem [shape: bf16[32,32], index: 4, kind: input, shape index: {}]
  %s5 = inlined_call_operand.vmem [shape: f32[1,32], index: 5, kind: input, shape index: {}]
  %s6 = inlined_call_operand.vmem [shape: f32[1,32], index: 6, kind: input, shape index: {}]
  %s7 = inlined_call_operand.vmem [shape: f32[1,32], index: 7, kind: input, shape index: {}]
  %s8 = inlined_call_operand.vmem [shape: bf16[32,64], index: 8, kind: input, shape index: {}]
  %s9 = inlined_call_operand.vmem [shape: f32[1,64], index: 9, kind: input, shape index: {}]
  %s10 = inlined_call_operand.vmem [shape: bf16[64,32], index: 10, kind: input, shape index: {}]
  %s11 = inlined_call_operand.vmem [shape: f32[1,32], index: 11, kind: input, shape index: {}]
  %s12 = inlined_call_operand.hbm [shape: f32[2,8,32], index: 12, kind: output, shape index: {}]
  %s13 = sld [smem:[#allocation0]]
  $region81: #{transformer_forward.3} parent=0
    _
  %s15 = ssub.s32 1, %s13
  %s16 = scalar_select 0, %s15, %s13
  $region1: #{transformer_forward.3} parent=0
    #allocation2 [shape = 'u8[8192]{0}', space=vmem, size = 0x2000, scoped, tag = 'output window, operand 0']
    #allocation3 [shape = 's32[2]{0}', space=sflag, size = 0x8, scoped, tag = 'scoped memory for transformer_forward.3']
    %17 = vsyncpa [#allocation3], 0
    %s18 = scalar_lea.sflag [#allocation3], 1
    %19 = vsyncpa %s18, 0
    loop: start=0, step=1, limit=4
    $region2: #{transformer_forward.3} parent=1 // loop_pre_header
      _
    $region3: #{transformer_forward.3} parent=1 // loop_header
      %s21 = sphi 0, %s25
      %p22 = scmp.ge.s32.totalorder %s21, 4
      %s31 = sphi 0, %s33
      %s34 = sphi 0, %s31
      %s35 = sphi 0, %s34
      %s51 = sphi 0, %s35
      %s55 = sphi 0, %s55
      %s57 = sphi 0, %s55
      %s58 = sphi 0, %s57
      %s72 = sphi 0, %s58
      %s76 = sphi 0, %s76
      %s78 = sphi 0, %s76
      %s79 = sphi 0, %s78
      %s93 = sphi 0, %s79
      %s97 = sphi 0, %s97
      %s99 = sphi 0, %s97
      %s100 = sphi 0, %s99
      %s114 = sphi 0, %s100
      %s118 = sphi 0, %s118
      %s120 = sphi 0, %s118
      %s121 = sphi 0, %s120
      %s135 = sphi 0, %s121
      %s139 = sphi 0, %s139
      %s141 = sphi 0, %s139
      %s142 = sphi 0, %s141
      %s156 = sphi 0, %s142
      %s160 = sphi 0, %s160
      %s162 = sphi 0, %s160
      %s163 = sphi 0, %s162
      %s177 = sphi 0, %s163
      %s181 = sphi 0, %s181
      %s183 = sphi 0, %s181
      %s184 = sphi 0, %s183
      %s198 = sphi 0, %s184
      %s202 = sphi 0, %s202
      %s204 = sphi 0, %s202
      %s205 = sphi 0, %s204
      %s219 = sphi 0, %s205
      %s223 = sphi 0, %s223
      %s225 = sphi 0, %s223
      %s226 = sphi 0, %s225
      %s240 = sphi 0, %s226
      %s244 = sphi 0, %s244
      %s246 = sphi 0, %s244
      %s247 = sphi 0, %s246
      %s261 = sphi 0, %s247
      %s265 = sphi 0, %s265
      %s267 = sphi 0, %s265
      %s268 = sphi 0, %s267
      %s282 = sphi 0, %s268
      %s288 = sphi 0, %s290
      %s291 = sphi 0, %s288
      %s292 = sphi 0, %s291
      %s308 = sphi 0, %s292
    $region4: #{transformer_forward.3} parent=1 // loop_header_branch
      %24 = sbr.rel (%p22) target = $region8
    $region5: #{transformer_forward.3} parent=1 // loop_body
      %s26 = ssub.s32 %s21, 1
      %s27 = ssub.s32 %s21, 2
      %s28 = sadd.s32 %s21, 1
      %s29 = ssub.s32 %s21, %s28
      %p30 = scmp.eq.s32.totalorder %s29, 0
      %s32 = sadd.s32 %s31, 1
      %s33 = scalar_select %p30, %s31, %s32
      %p36 = pneg %p30
      %p37 = scmp.eq.s32.totalorder %s21, 1
      %p38 = por %p36, %p37
      %p39 = scmp.ne.s32.totalorder %s31, %s34
      %p40 = scmp.eq.s32.totalorder %s21, 0
      %p41 = por %p39, %p40
      %p42 = scmp.ne.s32.totalorder %s31, %s34
      %p43 = scmp.eq.s32.totalorder %s26, 1
      %p44 = por %p42, %p43
      %p45 = scmp.ne.s32.totalorder %s34, %s35
      %p46 = scmp.eq.s32.totalorder %s26, 0
      %p47 = por %p45, %p46
      %p48 = scmp.ne.s32.totalorder %s34, %s35
      %p49 = scmp.eq.s32.totalorder %s27, 1
      %p50 = por %p48, %p49
      %p52 = scmp.ne.s32.totalorder %s35, %s51
      %p53 = scmp.eq.s32.totalorder %s27, 0
      %p54 = por %p52, %p53
      %s56 = sadd.s32 %s55, 1
      %p59 = scmp.eq.s32.totalorder %s21, 1
      %p60 = scmp.ne.s32.totalorder %s55, %s57
      %p61 = scmp.eq.s32.totalorder %s21, 0
      %p62 = por %p60, %p61
      %p63 = scmp.ne.s32.totalorder %s55, %s57
      %p64 = scmp.eq.s32.totalorder %s26, 1
      %p65 = por %p63, %p64
      %p66 = scmp.ne.s32.totalorder %s57, %s58
      %p67 = scmp.eq.s32.totalorder %s26, 0
      %p68 = por %p66, %p67
      %p69 = scmp.ne.s32.totalorder %s57, %s58
      %p70 = scmp.eq.s32.totalorder %s27, 1
      %p71 = por %p69, %p70
      %p73 = scmp.ne.s32.totalorder %s58, %s72
      %p74 = scmp.eq.s32.totalorder %s27, 0
      %p75 = por %p73, %p74
      %s77 = sadd.s32 %s76, 1
      %p80 = scmp.eq.s32.totalorder %s21, 1
      %p81 = scmp.ne.s32.totalorder %s76, %s78
      %p82 = scmp.eq.s32.totalorder %s21, 0
      %p83 = por %p81, %p82
      %p84 = scmp.ne.s32.totalorder %s76, %s78
      %p85 = scmp.eq.s32.totalorder %s26, 1
      %p86 = por %p84, %p85
      %p87 = scmp.ne.s32.totalorder %s78, %s79
      %p88 = scmp.eq.s32.totalorder %s26, 0
      %p89 = por %p87, %p88
      %p90 = scmp.ne.s32.totalorder %s78, %s79
      %p91 = scmp.eq.s32.totalorder %s27, 1
      %p92 = por %p90, %p91
      %p94 = scmp.ne.s32.totalorder %s79, %s93
      %p95 = scmp.eq.s32.totalorder %s27, 0
      %p96 = por %p94, %p95
      %s98 = sadd.s32 %s97, 1
      %p101 = scmp.eq.s32.totalorder %s21, 1
      %p102 = scmp.ne.s32.totalorder %s97, %s99
      %p103 = scmp.eq.s32.totalorder %s21, 0
      %p104 = por %p102, %p103
      %p105 = scmp.ne.s32.totalorder %s97, %s99
      %p106 = scmp.eq.s32.totalorder %s26, 1
      %p107 = por %p105, %p106
      %p108 = scmp.ne.s32.totalorder %s99, %s100
      %p109 = scmp.eq.s32.totalorder %s26, 0
      %p110 = por %p108, %p109
      %p111 = scmp.ne.s32.totalorder %s99, %s100
      %p112 = scmp.eq.s32.totalorder %s27, 1
      %p113 = por %p111, %p112
      %p115 = scmp.ne.s32.totalorder %s100, %s114
      %p116 = scmp.eq.s32.totalorder %s27, 0
      %p117 = por %p115, %p116
      %s119 = sadd.s32 %s118, 1
      %p122 = scmp.eq.s32.totalorder %s21, 1
      %p123 = scmp.ne.s32.totalorder %s118, %s120
      %p124 = scmp.eq.s32.totalorder %s21, 0
      %p125 = por %p123, %p124
      %p126 = scmp.ne.s32.totalorder %s118, %s120
      %p127 = scmp.eq.s32.totalorder %s26, 1
      %p128 = por %p126, %p127
      %p129 = scmp.ne.s32.totalorder %s120, %s121
      %p130 = scmp.eq.s32.totalorder %s26, 0
      %p131 = por %p129, %p130
      %p132 = scmp.ne.s32.totalorder %s120, %s121
      %p133 = scmp.eq.s32.totalorder %s27, 1
      %p134 = por %p132, %p133
      %p136 = scmp.ne.s32.totalorder %s121, %s135
      %p137 = scmp.eq.s32.totalorder %s27, 0
      %p138 = por %p136, %p137
      %s140 = sadd.s32 %s139, 1
      %p143 = scmp.eq.s32.totalorder %s21, 1
      %p144 = scmp.ne.s32.totalorder %s139, %s141
      %p145 = scmp.eq.s32.totalorder %s21, 0
      %p146 = por %p144, %p145
      %p147 = scmp.ne.s32.totalorder %s139, %s141
      %p148 = scmp.eq.s32.totalorder %s26, 1
      %p149 = por %p147, %p148
      %p150 = scmp.ne.s32.totalorder %s141, %s142
      %p151 = scmp.eq.s32.totalorder %s26, 0
      %p152 = por %p150, %p151
      %p153 = scmp.ne.s32.totalorder %s141, %s142
      %p154 = scmp.eq.s32.totalorder %s27, 1
      %p155 = por %p153, %p154
      %p157 = scmp.ne.s32.totalorder %s142, %s156
      %p158 = scmp.eq.s32.totalorder %s27, 0
      %p159 = por %p157, %p158
      %s161 = sadd.s32 %s160, 1
      %p164 = scmp.eq.s32.totalorder %s21, 1
      %p165 = scmp.ne.s32.totalorder %s160, %s162
      %p166 = scmp.eq.s32.totalorder %s21, 0
      %p167 = por %p165, %p166
      %p168 = scmp.ne.s32.totalorder %s160, %s162
      %p169 = scmp.eq.s32.totalorder %s26, 1
      %p170 = por %p168, %p169
      %p171 = scmp.ne.s32.totalorder %s162, %s163
      %p172 = scmp.eq.s32.totalorder %s26, 0
      %p173 = por %p171, %p172
      %p174 = scmp.ne.s32.totalorder %s162, %s163
      %p175 = scmp.eq.s32.totalorder %s27, 1
      %p176 = por %p174, %p175
      %p178 = scmp.ne.s32.totalorder %s163, %s177
      %p179 = scmp.eq.s32.totalorder %s27, 0
      %p180 = por %p178, %p179
      %s182 = sadd.s32 %s181, 1
      %p185 = scmp.eq.s32.totalorder %s21, 1
      %p186 = scmp.ne.s32.totalorder %s181, %s183
      %p187 = scmp.eq.s32.totalorder %s21, 0
      %p188 = por %p186, %p187
      %p189 = scmp.ne.s32.totalorder %s181, %s183
      %p190 = scmp.eq.s32.totalorder %s26, 1
      %p191 = por %p189, %p190
      %p192 = scmp.ne.s32.totalorder %s183, %s184
      %p193 = scmp.eq.s32.totalorder %s26, 0
      %p194 = por %p192, %p193
      %p195 = scmp.ne.s32.totalorder %s183, %s184
      %p196 = scmp.eq.s32.totalorder %s27, 1
      %p197 = por %p195, %p196
      %p199 = scmp.ne.s32.totalorder %s184, %s198
      %p200 = scmp.eq.s32.totalorder %s27, 0
      %p201 = por %p199, %p200
      %s203 = sadd.s32 %s202, 1
      %p206 = scmp.eq.s32.totalorder %s21, 1
      %p207 = scmp.ne.s32.totalorder %s202, %s204
      %p208 = scmp.eq.s32.totalorder %s21, 0
      %p209 = por %p207, %p208
      %p210 = scmp.ne.s32.totalorder %s202, %s204
      %p211 = scmp.eq.s32.totalorder %s26, 1
      %p212 = por %p210, %p211
      %p213 = scmp.ne.s32.totalorder %s204, %s205
      %p214 = scmp.eq.s32.totalorder %s26, 0
      %p215 = por %p213, %p214
      %p216 = scmp.ne.s32.totalorder %s204, %s205
      %p217 = scmp.eq.s32.totalorder %s27, 1
      %p218 = por %p216, %p217
      %p220 = scmp.ne.s32.totalorder %s205, %s219
      %p221 = scmp.eq.s32.totalorder %s27, 0
      %p222 = por %p220, %p221
      %s224 = sadd.s32 %s223, 1
      %p227 = scmp.eq.s32.totalorder %s21, 1
      %p228 = scmp.ne.s32.totalorder %s223, %s225
      %p229 = scmp.eq.s32.totalorder %s21, 0
      %p230 = por %p228, %p229
      %p231 = scmp.ne.s32.totalorder %s223, %s225
      %p232 = scmp.eq.s32.totalorder %s26, 1
      %p233 = por %p231, %p232
      %p234 = scmp.ne.s32.totalorder %s225, %s226
      %p235 = scmp.eq.s32.totalorder %s26, 0
      %p236 = por %p234, %p235
      %p237 = scmp.ne.s32.totalorder %s225, %s226
      %p238 = scmp.eq.s32.totalorder %s27, 1
      %p239 = por %p237, %p238
      %p241 = scmp.ne.s32.totalorder %s226, %s240
      %p242 = scmp.eq.s32.totalorder %s27, 0
      %p243 = por %p241, %p242
      %s245 = sadd.s32 %s244, 1
      %p248 = scmp.eq.s32.totalorder %s21, 1
      %p249 = scmp.ne.s32.totalorder %s244, %s246
      %p250 = scmp.eq.s32.totalorder %s21, 0
      %p251 = por %p249, %p250
      %p252 = scmp.ne.s32.totalorder %s244, %s246
      %p253 = scmp.eq.s32.totalorder %s26, 1
      %p254 = por %p252, %p253
      %p255 = scmp.ne.s32.totalorder %s246, %s247
      %p256 = scmp.eq.s32.totalorder %s26, 0
      %p257 = por %p255, %p256
      %p258 = scmp.ne.s32.totalorder %s246, %s247
      %p259 = scmp.eq.s32.totalorder %s27, 1
      %p260 = por %p258, %p259
      %p262 = scmp.ne.s32.totalorder %s247, %s261
      %p263 = scmp.eq.s32.totalorder %s27, 0
      %p264 = por %p262, %p263
      %s266 = sadd.s32 %s265, 1
      %p269 = scmp.eq.s32.totalorder %s21, 1
      %p270 = scmp.ne.s32.totalorder %s265, %s267
      %p271 = scmp.eq.s32.totalorder %s21, 0
      %p272 = por %p270, %p271
      %p273 = scmp.ne.s32.totalorder %s265, %s267
      %p274 = scmp.eq.s32.totalorder %s26, 1
      %p275 = por %p273, %p274
      %p276 = scmp.ne.s32.totalorder %s267, %s268
      %p277 = scmp.eq.s32.totalorder %s26, 0
      %p278 = por %p276, %p277
      %p279 = scmp.ne.s32.totalorder %s267, %s268
      %p280 = scmp.eq.s32.totalorder %s27, 1
      %p281 = por %p279, %p280
      %p283 = scmp.ne.s32.totalorder %s268, %s282
      %p284 = scmp.eq.s32.totalorder %s27, 0
      %p285 = por %p283, %p284
      %s286 = ssub.s32 %s21, %s28
      %p287 = scmp.eq.s32.totalorder %s286, 0
      %s289 = sadd.s32 %s288, 1
      %s290 = scalar_select %p287, %s288, %s289
      %p293 = pneg %p287
      %p294 = scmp.eq.s32.totalorder %s21, 1
      %p295 = por %p293, %p294
      %p296 = scmp.ne.s32.totalorder %s288, %s291
      %p297 = scmp.eq.s32.totalorder %s21, 0
      %p298 = por %p296, %p297
      %p299 = scmp.ne.s32.totalorder %s288, %s291
      %p300 = scmp.eq.s32.totalorder %s26, 1
      %p301 = por %p299, %p300
      %p302 = scmp.ne.s32.totalorder %s291, %s292
      %p303 = scmp.eq.s32.totalorder %s26, 0
      %p304 = por %p302, %p303
      %p305 = scmp.ne.s32.totalorder %s291, %s292
      %p306 = scmp.eq.s32.totalorder %s27, 1
      %p307 = por %p305, %p306
      %p309 = scmp.ne.s32.totalorder %s292, %s308
      %p310 = scmp.eq.s32.totalorder %s27, 0
      %p311 = por %p309, %p310
      %p312 = scmp.le.s32.totalorder 1, %s21
      %p313 = scmp.lt.s32.totalorder %s21, 3
      %p314 = pnand %p312, %p313
      %p315 = pneg %p314
      // Predicated region
      $region9: #{transformer_forward.3} parent=5 // pred_check
        _
      $region10: #{transformer_forward.3} parent=5 // pred_check_branch
        %317 = sbr.rel (%p314) target = $region12
      $region11: #{transformer_forward.3} parent=5 // pred_region
        %s318 = ssub.s32 %s21, 1
        // Predicated region
        $region13: #{transformer_forward.3} parent=11 // pred_check
          %p319 = pneg %p68
        $region14: #{transformer_forward.3} parent=11 // pred_check_branch
          %321 = sbr.rel (%p319) target = $region16
        $region15: #{transformer_forward.3} parent=11 // pred_region
          _
        $region16: #{transformer_forward.3} parent=11 // pred_fallthru
          _
        // Predicated region
        $region17: #{transformer_forward.3} parent=11 // pred_check
          %p322 = pneg %p89
        $region18: #{transformer_forward.3} parent=11 // pred_check_branch
          %324 = sbr.rel (%p322) target = $region20
        $region19: #{transformer_forward.3} parent=11 // pred_region
          _
        $region20: #{transformer_forward.3} parent=11 // pred_fallthru
          _
        // Predicated region
        $region21: #{transformer_forward.3} parent=11 // pred_check
          %p325 = pneg %p110
        $region22: #{transformer_forward.3} parent=11 // pred_check_branch
          %327 = sbr.rel (%p325) target = $region24
        $region23: #{transformer_forward.3} parent=11 // pred_region
          _
        $region24: #{transformer_forward.3} parent=11 // pred_fallthru
          _
        // Predicated region
        $region25: #{transformer_forward.3} parent=11 // pred_check
          %p328 = pneg %p131
        $region26: #{transformer_forward.3} parent=11 // pred_check_branch
          %330 = sbr.rel (%p328) target = $region28
        $region27: #{transformer_forward.3} parent=11 // pred_region
          _
        $region28: #{transformer_forward.3} parent=11 // pred_fallthru
          _
        // Predicated region
        $region29: #{transformer_forward.3} parent=11 // pred_check
          %p331 = pneg %p152
        $region30: #{transformer_forward.3} parent=11 // pred_check_branch
          %333 = sbr.rel (%p331) target = $region32
        $region31: #{transformer_forward.3} parent=11 // pred_region
          _
        $region32: #{transformer_forward.3} parent=11 // pred_fallthru
          _
        // Predicated region
        $region33: #{transformer_forward.3} parent=11 // pred_check
          %p334 = pneg %p173
        $region34: #{transformer_forward.3} parent=11 // pred_check_branch
          %336 = sbr.rel (%p334) target = $region36
        $region35: #{transformer_forward.3} parent=11 // pred_region
          _
        $region36: #{transformer_forward.3} parent=11 // pred_fallthru
          _
        // Predicated region
        $region37: #{transformer_forward.3} parent=11 // pred_check
          %p337 = pneg %p194
        $region38: #{transformer_forward.3} parent=11 // pred_check_branch
          %339 = sbr.rel (%p337) target = $region40
        $region39: #{transformer_forward.3} parent=11 // pred_region
          _
        $region40: #{transformer_forward.3} parent=11 // pred_fallthru
          _
        // Predicated region
        $region41: #{transformer_forward.3} parent=11 // pred_check
          %p340 = pneg %p215
        $region42: #{transformer_forward.3} parent=11 // pred_check_branch
          %342 = sbr.rel (%p340) target = $region44
        $region43: #{transformer_forward.3} parent=11 // pred_region
          _
        $region44: #{transformer_forward.3} parent=11 // pred_fallthru
          _
        // Predicated region
        $region45: #{transformer_forward.3} parent=11 // pred_check
          %p343 = pneg %p236
        $region46: #{transformer_forward.3} parent=11 // pred_check_branch
          %345 = sbr.rel (%p343) target = $region48
        $region47: #{transformer_forward.3} parent=11 // pred_region
          _
        $region48: #{transformer_forward.3} parent=11 // pred_fallthru
          _
        // Predicated region
        $region49: #{transformer_forward.3} parent=11 // pred_check
          %p346 = pneg %p257
        $region50: #{transformer_forward.3} parent=11 // pred_check_branch
          %348 = sbr.rel (%p346) target = $region52
        $region51: #{transformer_forward.3} parent=11 // pred_region
          _
        $region52: #{transformer_forward.3} parent=11 // pred_fallthru
          _
        // Predicated region
        $region53: #{transformer_forward.3} parent=11 // pred_check
          %p349 = pneg %p278
        $region54: #{transformer_forward.3} parent=11 // pred_check_branch
          %351 = sbr.rel (%p349) target = $region56
        $region55: #{transformer_forward.3} parent=11 // pred_region
          _
        $region56: #{transformer_forward.3} parent=11 // pred_fallthru
          _
      $region12: #{transformer_forward.3} parent=5 // pred_fallthru
        _
      %p352 = scmp.lt.s32.totalorder %s21, 2
      // Predicated region
      $region57: #{transformer_forward.3} parent=5 // pred_check
        %p353 = pneg %p352
      $region58: #{transformer_forward.3} parent=5 // pred_check_branch
        %355 = sbr.rel (%p353) target = $region60
      $region59: #{transformer_forward.3} parent=5 // pred_region
        // Predicated region
        $region61: #{transformer_forward.3} parent=59 // pred_check
          %p356 = pneg %p41
        $region62: #{transformer_forward.3} parent=59 // pred_check_branch
          %358 = sbr.rel (%p356) target = $region64
        $region63: #{transformer_forward.3} parent=59 // pred_region
          %p359 = scmp.lt.s32.totalorder %s21, 1
          %s360 = scalar_select %p359, %s21, 1
          %s361 = smul.addr %s360, 8
          %s362 = scalar_lea.vmem %s0, %s361
        $region64: #{transformer_forward.3} parent=59 // pred_fallthru
          _
      $region60: #{transformer_forward.3} parent=5 // pred_fallthru
        _
      %p363 = scmp.le.s32.totalorder 1, %s21
      %p364 = scmp.lt.s32.totalorder %s21, 3
      %p365 = pnand %p363, %p364
      %p366 = pneg %p365
      // Predicated region
      $region65: #{transformer_forward.3} parent=5 // pred_check
        _
      $region66: #{transformer_forward.3} parent=5 // pred_check_branch
        %368 = sbr.rel (%p365) target = $region68
      $region67: #{transformer_forward.3} parent=5 // pred_region
        %s369 = ssub.s32 %s21, 1
        %p370 = scmp.lt.s32.totalorder %s26, 1
        %s371 = scalar_select %p370, %s26, 1
        %s372 = smul.addr %s371, 8
        %s373 = scalar_lea.vmem %s0, %s372
        %p374 = pneg %p47
        %p375 = pneg %p44
        %p376 = pneg %p68
        %p377 = pneg %p65
        %p378 = pneg %p89
        %p379 = pneg %p86
        %p380 = pneg %p110
        %p381 = pneg %p107
        %p382 = pneg %p131
        %p383 = pneg %p128
        %p384 = pneg %p152
        %p385 = pneg %p149
        %p386 = pneg %p173
        %p387 = pneg %p170
        %p388 = pneg %p194
        %p389 = pneg %p191
        %p390 = pneg %p215
        %p391 = pneg %p212
        %p392 = pneg %p236
        %p393 = pneg %p233
        %p394 = pneg %p257
        %p395 = pneg %p254
        %p396 = pneg %p278
        %p397 = pneg %p275
        %p398 = pneg %p304
        %p399 = pneg %p301
        %s400 = sand.u32 %s291, 1
        %s401 = scalar_lea.sflag [#allocation3], %s400
        %s402 = sand.u32 %s291, 1
        %s403 = smul.addr %s402, 8
        %s404 = scalar_lea.vmem [#allocation2], %s403
        %p405 = scmp.lt.s32.totalorder %s26, 1
        %s406 = scalar_select %p405, %s26, 1
        %s407 = smul.addr %s406, 8
        %s408 = scalar_lea.vmem %s0, %s407
        %v410 = vld [vmem:[%s408] sm:$0xff]
        %v411 = vld [vmem:[%s1] sm:$0x1]
        %v412 = vld [vmem:[%s2] sm:$0x1]
        %vm413 = vcmask 261120
        %v414 = vsel %vm413, %v410, 0.0
        %415 = vadd.xlane.f32.xlu0 %v414
        %v416 = vpop.xlane.xlu0 %415
        %v417 = vrcp.pop 32.0
        %v418 = vmul.f32 %v416, %v417
        %v419 = vsub.f32 %v410, %v418
        %v420 = vmul.f32 %v419, %v419
        %v421 = vsel %vm413, %v420, 0.0
        %422 = vadd.xlane.f32.xlu0 %v421
        %v423 = vpop.xlane.xlu0 %422
        %v424 = vmul.f32 %v423, %v417
        %v425 = vadd.f32 %v424, 1e-05
        %v426 = vrsqrt.pop %v425
        %v427 = vmul.f32 %v419, %v426
        %v429 = vlaneseq
        %v430 = vshrl.u32 %v429, 7
        %v431 = vsub.s32 0, %v430
        %v432 = vrot.slane %v411, %v431
        %v434 = vmul.f32 %v427, %v432
        %v436 = vlaneseq
        %v437 = vshrl.u32 %v436, 7
        %v438 = vsub.s32 0, %v437
        %v439 = vrot.slane %v412, %v438
        %v441 = vadd.f32 %v434, %v439
        %v442 = vpack.c.bf16 %v441, %v441
        %v443 = vld [vmem:[%s3] sm:$0xf]
        %v444 = vld [vmem:[%s3 + $0x4] sm:$0xf]
        %v445 = vld [vmem:[%s3 + $0x8] sm:$0xf]
        %v446 = vld [vmem:[%s3 + $0xc] sm:$0xf]
        %v451 = vunpack.c.l.b16 %v443
        %v452 = vunpack.c.l.b16 %v444
        %v453 = vunpack.c.l.b16 %v445
        %v454 = vunpack.c.l.b16 %v446
        %v455 = vpack.c.b16 %v452, %v451
        %v456 = vpack.c.b16 %v454, %v453
        %v460 = vsel %vm413, %v442, 0
        %462 = vmatprep.subr.bf16.mxu0 0
        %463 = vmatpush1.bf16.msra.mxu0 %v455
        %464 = vmatprep.subr.bf16.mxu0 0
        %465 = vmatpush1.bf16.msra.mxu0 %v456
        %466 = vmatprep.subr.bf16.mxu0 0
        %467 = vmatpush1.bf16.msra.mxu0 0
        %468 = vmatprep.subr.bf16.mxu0 0
        %469 = vmatpush1.bf16.msra.mxu0 0
        %470 = vmatprep.subr.bf16.mxu0 0
        %471 = vmatpush1.bf16.msra.mxu0 0
        %472 = vmatprep.subr.bf16.mxu0 0
        %473 = vmatpush1.bf16.msra.mxu0 0
        %474 = vmatprep.subr.bf16.mxu0 0
        %475 = vmatpush1.bf16.msra.mxu0 0
        %476 = vmatprep.subr.bf16.mxu0 0
        %477 = vmatpush1.bf16.msra.mxu0 0
        %478 = vmatprep.subr.bf16.mxu0 0
        %479 = vmatpush1.bf16.msra.mxu0 0
        %480 = vmatprep.subr.bf16.mxu0 0
        %481 = vmatpush1.bf16.msra.mxu0 0
        %482 = vmatprep.subr.bf16.mxu0 0
        %483 = vmatpush1.bf16.msra.mxu0 0
        %484 = vmatprep.subr.bf16.mxu0 0
        %485 = vmatpush1.bf16.msra.mxu0 0
        %486 = vmatprep.subr.bf16.mxu0 0
        %487 = vmatpush1.bf16.msra.mxu0 0
        %488 = vmatprep.subr.bf16.mxu0 0
        %489 = vmatpush1.bf16.msra.mxu0 0
        %490 = vmatprep.subr.bf16.mxu0 0
        %491 = vmatpush1.bf16.msra.mxu0 0
        %492 = vmatprep.subr.bf16.mxu0 0
        %493 = vmatpush1.bf16.msra.mxu0 0
        %494 = vmatprep.mubr.bf16.mxu0 0
        %495 = vmatmul.mubr.bf16.gmra.mrb[0].mxu0 %v460
        %v496 = vpop.f32.mrb[0].mxu0
        %v497 = vadd.f32 0.0, %v496
        %v498 = vpop.f32.mrb[0].mxu0
        %v499 = vpop.f32.mrb[0].mxu0
        %v500 = vpop.f32.mrb[0].mxu0
        %501 = vdwg.mxu0
        %v502 = vmul.f32 %v497, 0.35355338
        %504 = vrot.lane.b32.xlu0 %v502, 120
        %v505 = vpop.permute.xlu0 %504
        %507 = vrot.lane.b32.xlu0 %v502, 112
        %v508 = vpop.permute.xlu0 %507
        %510 = vrot.lane.b32.xlu0 %v502, 104
        %v511 = vpop.permute.xlu0 %510
        %v513 = vcombine.low %v502, %v508
        %v514 = vcombine.high %v502, %v508
        %v516 = vunpack.c.l.s4 1983009808
        %v517 = vunpack.c.0.s8 %v516
        %v518 = vlaneseq
        %v519 = vshrl.u32 %v518, 7
        %v520 = vsub.s32 %v517, %v519
        %v521 = vrot.slane %v513, %v520
        %v523 = vunpack.c.l.s4 1983009808
        %v524 = vunpack.c.0.s8 %v523
        %v525 = vlaneseq
        %v526 = vshrl.u32 %v525, 7
        %v527 = vsub.s32 %v524, %v526
        %v528 = vrot.slane %v514, %v527
        %v529 = vcombine.low %v505, %v511
        %v530 = vcombine.high %v505, %v511
        %v532 = vunpack.c.l.s4 1983009808
        %v533 = vunpack.c.0.s8 %v532
        %v534 = vlaneseq
        %v535 = vshrl.u32 %v534, 7
        %v536 = vsub.s32 %v533, %v535
        %v537 = vrot.slane %v529, %v536
        %v539 = vunpack.c.l.s4 1983009808
        %v540 = vunpack.c.0.s8 %v539
        %v541 = vlaneseq
        %v542 = vshrl.u32 %v541, 7
        %v543 = vsub.s32 %v540, %v542
        %v544 = vrot.slane %v530, %v543
        %v545 = vcombine.low %v521, %v537
        %v546 = vcombine.high %v521, %v537
        %v548 = vunpack.c.l.s4 1934713408
        %v549 = vunpack.c.0.s8 %v548
        %v550 = vlaneseq
        %v551 = vshrl.u32 %v550, 7
        %v552 = vsub.s32 %v549, %v551
        %v553 = vrot.slane %v545, %v552
        %v555 = vunpack.c.l.s4 1934713408
        %v556 = vunpack.c.0.s8 %v555
        %v557 = vlaneseq
        %v558 = vshrl.u32 %v557, 7
        %v559 = vsub.s32 %v556, %v558
        %v560 = vrot.slane %v546, %v559
        %v561 = vcombine.low %v528, %v544
        %v562 = vcombine.high %v528, %v544
        %v564 = vunpack.c.l.s4 1934713408
        %v565 = vunpack.c.0.s8 %v564
        %v566 = vlaneseq
        %v567 = vshrl.u32 %v566, 7
        %v568 = vsub.s32 %v565, %v567
        %v569 = vrot.slane %v561, %v568
        %v571 = vunpack.c.l.s4 1934713408
        %v572 = vunpack.c.0.s8 %v571
        %v573 = vlaneseq
        %v574 = vshrl.u32 %v573, 7
        %v575 = vsub.s32 %v572, %v574
        %v576 = vrot.slane %v562, %v575
        %v577 = vcombine.high %v553, 0.0
        %v578 = vcombine.high %v560, 0.0
        %v579 = vcombine.high %v569, 0.0
        %v580 = vcombine.high %v576, 0.0
        %582 = vrot.lane.b32.xlu0 %v497, 120
        %v583 = vpop.permute.xlu0 %582
        %584 = vrot.lane.b32.xlu0 %v497, 112
        %v585 = vpop.permute.xlu0 %584
        %586 = vrot.lane.b32.xlu0 %v497, 104
        %v587 = vpop.permute.xlu0 %586
        %588 = vrot.lane.b32.xlu0 %v497, 96
        %v589 = vpop.permute.xlu0 %588
        %590 = vrot.lane.b32.xlu0 %v583, 96
        %v591 = vpop.permute.xlu0 %590
        %592 = vrot.lane.b32.xlu0 %v585, 96
        %v593 = vpop.permute.xlu0 %592
        %594 = vrot.lane.b32.xlu0 %v587, 96
        %v595 = vpop.permute.xlu0 %594
        %v600 = vcombine.low %v589, %v593
        %v601 = vcombine.high %v589, %v593
        %v603 = vunpack.c.l.s4 1983009808
        %v604 = vunpack.c.0.s8 %v603
        %v605 = vlaneseq
        %v606 = vshrl.u32 %v605, 7
        %v607 = vsub.s32 %v604, %v606
        %v608 = vrot.slane %v600, %v607
        %v610 = vunpack.c.l.s4 1983009808
        %v611 = vunpack.c.0.s8 %v610
        %v612 = vlaneseq
        %v613 = vshrl.u32 %v612, 7
        %v614 = vsub.s32 %v611, %v613
        %v615 = vrot.slane %v601, %v614
        %v616 = vcombine.low %v591, %v595
        %v617 = vcombine.high %v591, %v595
        %v619 = vunpack.c.l.s4 1983009808
        %v620 = vunpack.c.0.s8 %v619
        %v621 = vlaneseq
        %v622 = vshrl.u32 %v621, 7
        %v623 = vsub.s32 %v620, %v622
        %v624 = vrot.slane %v616, %v623
        %v626 = vunpack.c.l.s4 1983009808
        %v627 = vunpack.c.0.s8 %v626
        %v628 = vlaneseq
        %v629 = vshrl.u32 %v628, 7
        %v630 = vsub.s32 %v627, %v629
        %v631 = vrot.slane %v617, %v630
        %v632 = vcombine.low %v608, %v624
        %v633 = vcombine.high %v608, %v624
        %v635 = vunpack.c.l.s4 1934713408
        %v636 = vunpack.c.0.s8 %v635
        %v637 = vlaneseq
        %v638 = vshrl.u32 %v637, 7
        %v639 = vsub.s32 %v636, %v638
        %v640 = vrot.slane %v632, %v639
        %v642 = vunpack.c.l.s4 1934713408
        %v643 = vunpack.c.0.s8 %v642
        %v644 = vlaneseq
        %v645 = vshrl.u32 %v644, 7
        %v646 = vsub.s32 %v643, %v645
        %v647 = vrot.slane %v633, %v646
        %v648 = vcombine.low %v615, %v631
        %v649 = vcombine.high %v615, %v631
        %v651 = vunpack.c.l.s4 1934713408
        %v652 = vunpack.c.0.s8 %v651
        %v653 = vlaneseq
        %v654 = vshrl.u32 %v653, 7
        %v655 = vsub.s32 %v652, %v654
        %v656 = vrot.slane %v648, %v655
        %v658 = vunpack.c.l.s4 1934713408
        %v659 = vunpack.c.0.s8 %v658
        %v660 = vlaneseq
        %v661 = vshrl.u32 %v660, 7
        %v662 = vsub.s32 %v659, %v661
        %v663 = vrot.slane %v649, %v662
        %v664 = vcombine.high %v640, 0.0
        %v665 = vcombine.high %v647, 0.0
        %v666 = vcombine.high %v656, 0.0
        %v667 = vcombine.high %v663, 0.0
        %668 = vrot.lane.b32.xlu0 %v497, 64
        %v669 = vpop.permute.xlu0 %668
        %670 = vrot.lane.b32.xlu0 %v583, 64
        %v671 = vpop.permute.xlu0 %670
        %672 = vrot.lane.b32.xlu0 %v585, 64
        %v673 = vpop.permute.xlu0 %672
        %674 = vrot.lane.b32.xlu0 %v587, 64
        %v675 = vpop.permute.xlu0 %674
        %v680 = vcombine.low %v669, %v673
        %v681 = vcombine.high %v669, %v673
        %v683 = vunpack.c.l.s4 1983009808
        %v684 = vunpack.c.0.s8 %v683
        %v685 = vlaneseq
        %v686 = vshrl.u32 %v685, 7
        %v687 = vsub.s32 %v684, %v686
        %v688 = vrot.slane %v680, %v687
        %v690 = vunpack.c.l.s4 1983009808
        %v691 = vunpack.c.0.s8 %v690
        %v692 = vlaneseq
        %v693 = vshrl.u32 %v692, 7
        %v694 = vsub.s32 %v691, %v693
        %v695 = vrot.slane %v681, %v694
        %v696 = vcombine.low %v671, %v675
        %v697 = vcombine.high %v671, %v675
        %v699 = vunpack.c.l.s4 1983009808
        %v700 = vunpack.c.0.s8 %v699
        %v701 = vlaneseq
        %v702 = vshrl.u32 %v701, 7
        %v703 = vsub.s32 %v700, %v702
        %v704 = vrot.slane %v696, %v703
        %v706 = vunpack.c.l.s4 1983009808
        %v707 = vunpack.c.0.s8 %v706
        %v708 = vlaneseq
        %v709 = vshrl.u32 %v708, 7
        %v710 = vsub.s32 %v707, %v709
        %v711 = vrot.slane %v697, %v710
        %v712 = vcombine.low %v688, %v704
        %v713 = vcombine.high %v688, %v704
        %v715 = vunpack.c.l.s4 1934713408
        %v716 = vunpack.c.0.s8 %v715
        %v717 = vlaneseq
        %v718 = vshrl.u32 %v717, 7
        %v719 = vsub.s32 %v716, %v718
        %v720 = vrot.slane %v712, %v719
        %v722 = vunpack.c.l.s4 1934713408
        %v723 = vunpack.c.0.s8 %v722
        %v724 = vlaneseq
        %v725 = vshrl.u32 %v724, 7
        %v726 = vsub.s32 %v723, %v725
        %v727 = vrot.slane %v713, %v726
        %v728 = vcombine.low %v695, %v711
        %v729 = vcombine.high %v695, %v711
        %v731 = vunpack.c.l.s4 1934713408
        %v732 = vunpack.c.0.s8 %v731
        %v733 = vlaneseq
        %v734 = vshrl.u32 %v733, 7
        %v735 = vsub.s32 %v732, %v734
        %v736 = vrot.slane %v728, %v735
        %v738 = vunpack.c.l.s4 1934713408
        %v739 = vunpack.c.0.s8 %v738
        %v740 = vlaneseq
        %v741 = vshrl.u32 %v740, 7
        %v742 = vsub.s32 %v739, %v741
        %v743 = vrot.slane %v729, %v742
        %v744 = vcombine.high %v720, 0.0
        %v745 = vcombine.high %v727, 0.0
        %v746 = vcombine.high %v736, 0.0
        %v747 = vcombine.high %v743, 0.0
        %v748 = vpack.c.bf16 %v553, %v553
        %v749 = vpack.c.bf16 %v577, %v577
        %v750 = vpack.c.bf16 %v560, %v560
        %v751 = vpack.c.bf16 %v578, %v578
        %v752 = vpack.c.bf16 %v569, %v569
        %v753 = vpack.c.bf16 %v579, %v579
        %v754 = vpack.c.bf16 %v576, %v576
        %v755 = vpack.c.bf16 %v580, %v580
        %v756 = vpack.c.bf16 %v640, %v640
        %v757 = vpack.c.bf16 %v664, %v664
        %v758 = vpack.c.bf16 %v647, %v647
        %v759 = vpack.c.bf16 %v665, %v665
        %v760 = vpack.c.bf16 %v656, %v656
        %v761 = vpack.c.bf16 %v666, %v666
        %v762 = vpack.c.bf16 %v663, %v663
        %v763 = vpack.c.bf16 %v667, %v667
        %v764 = vcombine.low %v748, %v752
        %v766 = vunpack.c.l.s4 1983009808
        %v767 = vunpack.c.0.s8 %v766
        %v768 = vlaneseq
        %v769 = vshrl.u32 %v768, 7
        %v770 = vsub.s32 %v767, %v769
        %v771 = vrot.slane %v764, %v770
        %v772 = vcombine.low %v750, %v754
        %v774 = vunpack.c.l.s4 1983009808
        %v775 = vunpack.c.0.s8 %v774
        %v776 = vlaneseq
        %v777 = vshrl.u32 %v776, 7
        %v778 = vsub.s32 %v775, %v777
        %v779 = vrot.slane %v772, %v778
        %v780 = vcombine.low %v771, %v779
        %v782 = vunpack.c.l.s4 1934713408
        %v783 = vunpack.c.0.s8 %v782
        %v784 = vlaneseq
        %v785 = vshrl.u32 %v784, 7
        %v786 = vsub.s32 %v783, %v785
        %v787 = vrot.slane %v780, %v786
        %v788 = vcombine.high %v787, 0
        %v789 = vcombine.low %v749, %v753
        %v791 = vunpack.c.l.s4 1983009808
        %v792 = vunpack.c.0.s8 %v791
        %v793 = vlaneseq
        %v794 = vshrl.u32 %v793, 7
        %v795 = vsub.s32 %v792, %v794
        %v796 = vrot.slane %v789, %v795
        %v797 = vcombine.low %v751, %v755
        %v799 = vunpack.c.l.s4 1983009808
        %v800 = vunpack.c.0.s8 %v799
        %v801 = vlaneseq
        %v802 = vshrl.u32 %v801, 7
        %v803 = vsub.s32 %v800, %v802
        %v804 = vrot.slane %v797, %v803
        %v805 = vcombine.low %v796, %v804
        %v807 = vunpack.c.l.s4 1934713408
        %v808 = vunpack.c.0.s8 %v807
        %v809 = vlaneseq
        %v810 = vshrl.u32 %v809, 7
        %v811 = vsub.s32 %v808, %v810
        %v812 = vrot.slane %v805, %v811
        %v813 = vcombine.high %v812, 0
        %v816 = vpack.i.b16 %v812, %v787
        %v817 = vshrl.u32 %v787, 16
        %v818 = vshrl.u32 %v812, 16
        %v819 = vpack.i.b16 %v818, %v817
        %v822 = vpack.i.b16 %v813, %v788
        %v823 = vshrl.u32 %v788, 16
        %v824 = vshrl.u32 %v813, 16
        %v825 = vpack.i.b16 %v824, %v823
        %826 = vxpose.xlu0.c.b16.start [1/8] %v756, 128
        %827 = vxpose.xlu0.c.b16.cont [2/8] 0, 128
        %828 = vxpose.xlu0.c.b16.cont [3/8] 0, 128
        %829 = vxpose.xlu0.c.b16.cont [4/8] 0, 128
        %830 = vxpose.xlu0.c.b16.cont [5/8] 0, 128
        %831 = vxpose.xlu0.c.b16.cont [6/8] 0, 128
        %832 = vxpose.xlu0.c.b16.cont [7/8] 0, 128
        %833 = vxpose.xlu0.c.b16.end [8/8] 0, 128
        %v834 = vpop.trf.xlu0
        %v835 = vpop.trf.xlu0
        %v836 = vpop.trf.xlu0
        %v837 = vpop.trf.xlu0
        %v838 = vpop.trf.xlu0
        %v839 = vpop.trf.xlu0
        %v840 = vpop.trf.xlu0
        %v841 = vpop.trf.xlu0
        %842 = vxpose.xlu0.c.b16.start [1/8] %v757, 128
        %843 = vxpose.xlu0.c.b16.cont [2/8] 0, 128
        %844 = vxpose.xlu0.c.b16.cont [3/8] 0, 128
        %845 = vxpose.xlu0.c.b16.cont [4/8] 0, 128
        %846 = vxpose.xlu0.c.b16.cont [5/8] 0, 128
        %847 = vxpose.xlu0.c.b16.cont [6/8] 0, 128
        %848 = vxpose.xlu0.c.b16.cont [7/8] 0, 128
        %849 = vxpose.xlu0.c.b16.end [8/8] 0, 128
        %v850 = vpop.trf.xlu0
        %v851 = vpop.trf.xlu0
        %v852 = vpop.trf.xlu0
        %v853 = vpop.trf.xlu0
        %v854 = vpop.trf.xlu0
        %v855 = vpop.trf.xlu0
        %v856 = vpop.trf.xlu0
        %v857 = vpop.trf.xlu0
        %858 = vxpose.xlu0.c.b16.start [1/8] %v758, 128
        %859 = vxpose.xlu0.c.b16.cont [2/8] 0, 128
        %860 = vxpose.xlu0.c.b16.cont [3/8] 0, 128
        %861 = vxpose.xlu0.c.b16.cont [4/8] 0, 128
        %862 = vxpose.xlu0.c.b16.cont [5/8] 0, 128
        %863 = vxpose.xlu0.c.b16.cont [6/8] 0, 128
        %864 = vxpose.xlu0.c.b16.cont [7/8] 0, 128
        %865 = vxpose.xlu0.c.b16.end [8/8] 0, 128
        %v866 = vpop.trf.xlu0
        %v867 = vpop.trf.xlu0
        %v868 = vpop.trf.xlu0
        %v869 = vpop.trf.xlu0
        %v870 = vpop.trf.xlu0
        %v871 = vpop.trf.xlu0
        %v872 = vpop.trf.xlu0
        %v873 = vpop.trf.xlu0
        %874 = vxpose.xlu0.c.b16.start [1/8] %v759, 128
        %875 = vxpose.xlu0.c.b16.cont [2/8] 0, 128
        %876 = vxpose.xlu0.c.b16.cont [3/8] 0, 128
        %877 = vxpose.xlu0.c.b16.cont [4/8] 0, 128
        %878 = vxpose.xlu0.c.b16.cont [5/8] 0, 128
        %879 = vxpose.xlu0.c.b16.cont [6/8] 0, 128
        %880 = vxpose.xlu0.c.b16.cont [7/8] 0, 128
        %881 = vxpose.xlu0.c.b16.end [8/8] 0, 128
        %v882 = vpop.trf.xlu0
        %v883 = vpop.trf.xlu0
        %v884 = vpop.trf.xlu0
        %v885 = vpop.trf.xlu0
        %v886 = vpop.trf.xlu0
        %v887 = vpop.trf.xlu0
        %v888 = vpop.trf.xlu0
        %v889 = vpop.trf.xlu0
        %890 = vxpose.xlu0.c.b16.start [1/8] %v760, 128
        %891 = vxpose.xlu0.c.b16.cont [2/8] 0, 128
        %892 = vxpose.xlu0.c.b16.cont [3/8] 0, 128
        %893 = vxpose.xlu0.c.b16.cont [4/8] 0, 128
        %894 = vxpose.xlu0.c.b16.cont [5/8] 0, 128
        %895 = vxpose.xlu0.c.b16.cont [6/8] 0, 128
        %896 = vxpose.xlu0.c.b16.cont [7/8] 0, 128
        %897 = vxpose.xlu0.c.b16.end [8/8] 0, 128
        %v898 = vpop.trf.xlu0
        %v899 = vpop.trf.xlu0
        %v900 = vpop.trf.xlu0
        %v901 = vpop.trf.xlu0
        %v902 = vpop.trf.xlu0
        %v903 = vpop.trf.xlu0
        %v904 = vpop.trf.xlu0
        %v905 = vpop.trf.xlu0
        %906 = vxpose.xlu0.c.b16.start [1/8] %v761, 128
        %907 = vxpose.xlu0.c.b16.cont [2/8] 0, 128
        %908 = vxpose.xlu0.c.b16.cont [3/8] 0, 128
        %909 = vxpose.xlu0.c.b16.cont [4/8] 0, 128
        %910 = vxpose.xlu0.c.b16.cont [5/8] 0, 128
        %911 = vxpose.xlu0.c.b16.cont [6/8] 0, 128
        %912 = vxpose.xlu0.c.b16.cont [7/8] 0, 128
        %913 = vxpose.xlu0.c.b16.end [8/8] 0, 128
        %v914 = vpop.trf.xlu0
        %v915 = vpop.trf.xlu0
        %v916 = vpop.trf.xlu0
        %v917 = vpop.trf.xlu0
        %v918 = vpop.trf.xlu0
        %v919 = vpop.trf.xlu0
        %v920 = vpop.trf.xlu0
        %v921 = vpop.trf.xlu0
        %922 = vxpose.xlu0.c.b16.start [1/8] %v762, 128
        %923 = vxpose.xlu0.c.b16.cont [2/8] 0, 128
        %924 = vxpose.xlu0.c.b16.cont [3/8] 0, 128
        %925 = vxpose.xlu0.c.b16.cont [4/8] 0, 128
        %926 = vxpose.xlu0.c.b16.cont [5/8] 0, 128
        %927 = vxpose.xlu0.c.b16.cont [6/8] 0, 128
        %928 = vxpose.xlu0.c.b16.cont [7/8] 0, 128
        %929 = vxpose.xlu0.c.b16.end [8/8] 0, 128
        %v930 = vpop.trf.xlu0
        %v931 = vpop.trf.xlu0
        %v932 = vpop.trf.xlu0
        %v933 = vpop.trf.xlu0
        %v934 = vpop.trf.xlu0
        %v935 = vpop.trf.xlu0
        %v936 = vpop.trf.xlu0
        %v937 = vpop.trf.xlu0
        %938 = vxpose.xlu0.c.b16.start [1/8] %v763, 128
        %939 = vxpose.xlu0.c.b16.cont [2/8] 0, 128
        %940 = vxpose.xlu0.c.b16.cont [3/8] 0, 128
        %941 = vxpose.xlu0.c.b16.cont [4/8] 0, 128
        %942 = vxpose.xlu0.c.b16.cont [5/8] 0, 128
        %943 = vxpose.xlu0.c.b16.cont [6/8] 0, 128
        %944 = vxpose.xlu0.c.b16.cont [7/8] 0, 128
        %945 = vxpose.xlu0.c.b16.end [8/8] 0, 128
        %v946 = vpop.trf.xlu0
        %v947 = vpop.trf.xlu0
        %v948 = vpop.trf.xlu0
        %v949 = vpop.trf.xlu0
        %v950 = vpop.trf.xlu0
        %v951 = vpop.trf.xlu0
        %v952 = vpop.trf.xlu0
        %v953 = vpop.trf.xlu0
        %v954 = vcombine.low %v834, %v898
        %v956 = vunpack.c.l.s4 1983009808
        %v957 = vunpack.c.0.s8 %v956
        %v958 = vlaneseq
        %v959 = vshrl.u32 %v958, 7
        %v960 = vsub.s32 %v957, %v959
        %v961 = vrot.slane %v954, %v960
        %v962 = vcombine.low %v866, %v930
        %v964 = vunpack.c.l.s4 1983009808
        %v965 = vunpack.c.0.s8 %v964
        %v966 = vlaneseq
        %v967 = vshrl.u32 %v966, 7
        %v968 = vsub.s32 %v965, %v967
        %v969 = vrot.slane %v962, %v968
        %v970 = vcombine.low %v961, %v969
        %v971 = vcombine.high %v961, %v969
        %v973 = vunpack.c.l.s4 1934713408
        %v974 = vunpack.c.0.s8 %v973
        %v975 = vlaneseq
        %v976 = vshrl.u32 %v975, 7
        %v977 = vsub.s32 %v974, %v976
        %v978 = vrot.slane %v970, %v977
        %v980 = vunpack.c.l.s4 1934713408
        %v981 = vunpack.c.0.s8 %v980
        %v982 = vlaneseq
        %v983 = vshrl.u32 %v982, 7
        %v984 = vsub.s32 %v981, %v983
        %v985 = vrot.slane %v971, %v984
        %v986 = vcombine.high %v978, 0
        %v987 = vcombine.high %v985, 0
        %v988 = vcombine.low %v850, %v914
        %v990 = vunpack.c.l.s4 1983009808
        %v991 = vunpack.c.0.s8 %v990
        %v992 = vlaneseq
        %v993 = vshrl.u32 %v992, 7
        %v994 = vsub.s32 %v991, %v993
        %v995 = vrot.slane %v988, %v994
        %v996 = vcombine.low %v882, %v946
        %v998 = vunpack.c.l.s4 1983009808
        %v999 = vunpack.c.0.s8 %v998
        %v1000 = vlaneseq
        %v1001 = vshrl.u32 %v1000, 7
        %v1002 = vsub.s32 %v999, %v1001
        %v1003 = vrot.slane %v996, %v1002
        %v1004 = vcombine.low %v995, %v1003
        %v1005 = vcombine.high %v995, %v1003
        %v1007 = vunpack.c.l.s4 1934713408
        %v1008 = vunpack.c.0.s8 %v1007
        %v1009 = vlaneseq
        %v1010 = vshrl.u32 %v1009, 7
        %v1011 = vsub.s32 %v1008, %v1010
        %v1012 = vrot.slane %v1004, %v1011
        %v1014 = vunpack.c.l.s4 1934713408
        %v1015 = vunpack.c.0.s8 %v1014
        %v1016 = vlaneseq
        %v1017 = vshrl.u32 %v1016, 7
        %v1018 = vsub.s32 %v1015, %v1017
        %v1019 = vrot.slane %v1005, %v1018
        %v1020 = vcombine.high %v1012, 0
        %v1021 = vcombine.high %v1019, 0
        %v1024 = vpack.i.b16 %v1012, %v978
        %v1026 = vshrl.u32 %v978, 16
        %v1027 = vshrl.u32 %v1012, 16
        %v1028 = vpack.i.b16 %v1027, %v1026
        %v1032 = vpack.i.b16 %v1020, %v986
        %v1034 = vshrl.u32 %v986, 16
        %v1035 = vshrl.u32 %v1020, 16
        %v1036 = vpack.i.b16 %v1035, %v1034
        %v1040 = vpack.i.b16 %v1019, %v985
        %v1042 = vshrl.u32 %v985, 16
        %v1043 = vshrl.u32 %v1019, 16
        %v1044 = vpack.i.b16 %v1043, %v1042
        %v1048 = vpack.i.b16 %v1021, %v987
        %v1050 = vshrl.u32 %v987, 16
        %v1051 = vshrl.u32 %v1021, 16
        %v1052 = vpack.i.b16 %v1051, %v1050
        %1054 = vxpose.xlu0.c.b16.start [1/8] %v1024, 128
        %1055 = vxpose.xlu0.c.b16.cont [2/8] 0, 128
        %1056 = vxpose.xlu0.c.b16.cont [3/8] 0, 128
        %1057 = vxpose.xlu0.c.b16.cont [4/8] 0, 128
        %1058 = vxpose.xlu0.c.b16.cont [5/8] 0, 128
        %1059 = vxpose.xlu0.c.b16.cont [6/8] 0, 128
        %1060 = vxpose.xlu0.c.b16.cont [7/8] 0, 128
        %1061 = vxpose.xlu0.c.b16.end [8/8] 0, 128
        %v1062 = vpop.trf.xlu0
        %v1063 = vpop.trf.xlu0
        %v1064 = vpop.trf.xlu0
        %v1065 = vpop.trf.xlu0
        %v1066 = vpop.trf.xlu0
        %v1067 = vpop.trf.xlu0
        %v1068 = vpop.trf.xlu0
        %v1069 = vpop.trf.xlu0
        %1070 = vxpose.xlu0.c.b16.start [1/8] %v1028, 128
        %1071 = vxpose.xlu0.c.b16.cont [2/8] 0, 128
        %1072 = vxpose.xlu0.c.b16.cont [3/8] 0, 128
        %1073 = vxpose.xlu0.c.b16.cont [4/8] 0, 128
        %1074 = vxpose.xlu0.c.b16.cont [5/8] 0, 128
        %1075 = vxpose.xlu0.c.b16.cont [6/8] 0, 128
        %1076 = vxpose.xlu0.c.b16.cont [7/8] 0, 128
        %1077 = vxpose.xlu0.c.b16.end [8/8] 0, 128
        %v1078 = vpop.trf.xlu0
        %v1079 = vpop.trf.xlu0
        %v1080 = vpop.trf.xlu0
        %v1081 = vpop.trf.xlu0
        %v1082 = vpop.trf.xlu0
        %v1083 = vpop.trf.xlu0
        %v1084 = vpop.trf.xlu0
        %v1085 = vpop.trf.xlu0
        %1086 = vxpose.xlu0.c.b16.start [1/8] %v1032, 128
        %1087 = vxpose.xlu0.c.b16.cont [2/8] 0, 128
        %1088 = vxpose.xlu0.c.b16.cont [3/8] 0, 128
        %1089 = vxpose.xlu0.c.b16.cont [4/8] 0, 128
        %1090 = vxpose.xlu0.c.b16.cont [5/8] 0, 128
        %1091 = vxpose.xlu0.c.b16.cont [6/8] 0, 128
        %1092 = vxpose.xlu0.c.b16.cont [7/8] 0, 128
        %1093 = vxpose.xlu0.c.b16.end [8/8] 0, 128
        %v1094 = vpop.trf.xlu0
        %v1095 = vpop.trf.xlu0
        %v1096 = vpop.trf.xlu0
        %v1097 = vpop.trf.xlu0
        %v1098 = vpop.trf.xlu0
        %v1099 = vpop.trf.xlu0
        %v1100 = vpop.trf.xlu0
        %v1101 = vpop.trf.xlu0
        %1102 = vxpose.xlu0.c.b16.start [1/8] %v1036, 128
        %1103 = vxpose.xlu0.c.b16.cont [2/8] 0, 128
        %1104 = vxpose.xlu0.c.b16.cont [3/8] 0, 128
        %1105 = vxpose.xlu0.c.b16.cont [4/8] 0, 128
        %1106 = vxpose.xlu0.c.b16.cont [5/8] 0, 128
        %1107 = vxpose.xlu0.c.b16.cont [6/8] 0, 128
        %1108 = vxpose.xlu0.c.b16.cont [7/8] 0, 128
        %1109 = vxpose.xlu0.c.b16.end [8/8] 0, 128
        %v1110 = vpop.trf.xlu0
        %v1111 = vpop.trf.xlu0
        %v1112 = vpop.trf.xlu0
        %v1113 = vpop.trf.xlu0
        %v1114 = vpop.trf.xlu0
        %v1115 = vpop.trf.xlu0
        %v1116 = vpop.trf.xlu0
        %v1117 = vpop.trf.xlu0
        %1118 = vxpose.xlu0.c.b16.start [1/8] %v1040, 128
        %1119 = vxpose.xlu0.c.b16.cont [2/8] 0, 128
        %1120 = vxpose.xlu0.c.b16.cont [3/8] 0, 128
        %1121 = vxpose.xlu0.c.b16.cont [4/8] 0, 128
        %1122 = vxpose.xlu0.c.b16.cont [5/8] 0, 128
        %1123 = vxpose.xlu0.c.b16.cont [6/8] 0, 128
        %1124 = vxpose.xlu0.c.b16.cont [7/8] 0, 128
        %1125 = vxpose.xlu0.c.b16.end [8/8] 0, 128
        %v1126 = vpop.trf.xlu0
        %v1127 = vpop.trf.xlu0
        %v1128 = vpop.trf.xlu0
        %v1129 = vpop.trf.xlu0
        %v1130 = vpop.trf.xlu0
        %v1131 = vpop.trf.xlu0
        %v1132 = vpop.trf.xlu0
        %v1133 = vpop.trf.xlu0
        %1134 = vxpose.xlu0.c.b16.start [1/8] %v1044, 128
        %1135 = vxpose.xlu0.c.b16.cont [2/8] 0, 128
        %1136 = vxpose.xlu0.c.b16.cont [3/8] 0, 128
        %1137 = vxpose.xlu0.c.b16.cont [4/8] 0, 128
        %1138 = vxpose.xlu0.c.b16.cont [5/8] 0, 128
        %1139 = vxpose.xlu0.c.b16.cont [6/8] 0, 128
        %1140 = vxpose.xlu0.c.b16.cont [7/8] 0, 128
        %1141 = vxpose.xlu0.c.b16.end [8/8] 0, 128
        %v1142 = vpop.trf.xlu0
        %v1143 = vpop.trf.xlu0
        %v1144 = vpop.trf.xlu0
        %v1145 = vpop.trf.xlu0
        %v1146 = vpop.trf.xlu0
        %v1147 = vpop.trf.xlu0
        %v1148 = vpop.trf.xlu0
        %v1149 = vpop.trf.xlu0
        %1150 = vxpose.xlu0.c.b16.start [1/8] %v1048, 128
        %1151 = vxpose.xlu0.c.b16.cont [2/8] 0, 128
        %1152 = vxpose.xlu0.c.b16.cont [3/8] 0, 128
        %1153 = vxpose.xlu0.c.b16.cont [4/8] 0, 128
        %1154 = vxpose.xlu0.c.b16.cont [5/8] 0, 128
        %1155 = vxpose.xlu0.c.b16.cont [6/8] 0, 128
        %1156 = vxpose.xlu0.c.b16.cont [7/8] 0, 128
        %1157 = vxpose.xlu0.c.b16.end [8/8] 0, 128
        %v1158 = vpop.trf.xlu0
        %v1159 = vpop.trf.xlu0
        %v1160 = vpop.trf.xlu0
        %v1161 = vpop.trf.xlu0
        %v1162 = vpop.trf.xlu0
        %v1163 = vpop.trf.xlu0
        %v1164 = vpop.trf.xlu0
        %v1165 = vpop.trf.xlu0
        %1166 = vxpose.xlu0.c.b16.start [1/8] %v1052, 128
        %1167 = vxpose.xlu0.c.b16.cont [2/8] 0, 128
        %1168 = vxpose.xlu0.c.b16.cont [3/8] 0, 128
        %1169 = vxpose.xlu0.c.b16.cont [4/8] 0, 128
        %1170 = vxpose.xlu0.c.b16.cont [5/8] 0, 128
        %1171 = vxpose.xlu0.c.b16.cont [6/8] 0, 128
        %1172 = vxpose.xlu0.c.b16.cont [7/8] 0, 128
        %1173 = vxpose.xlu0.c.b16.end [8/8] 0, 128
        %v1174 = vpop.trf.xlu0
        %v1175 = vpop.trf.xlu0
        %v1176 = vpop.trf.xlu0
        %v1177 = vpop.trf.xlu0
        %v1178 = vpop.trf.xlu0
        %v1179 = vpop.trf.xlu0
        %v1180 = vpop.trf.xlu0
        %v1181 = vpop.trf.xlu0
        %v1182 = vcombine.low %v1062, %v1126
        %v1184 = vunpack.c.l.s4 1983009808
        %v1185 = vunpack.c.0.s8 %v1184
        %v1186 = vlaneseq
        %v1187 = vshrl.u32 %v1186, 7
        %v1188 = vsub.s32 %v1185, %v1187
        %v1189 = vrot.slane %v1182, %v1188
        %v1190 = vcombine.low %v1094, %v1158
        %v1192 = vunpack.c.l.s4 1983009808
        %v1193 = vunpack.c.0.s8 %v1192
        %v1194 = vlaneseq
        %v1195 = vshrl.u32 %v1194, 7
        %v1196 = vsub.s32 %v1193, %v1195
        %v1197 = vrot.slane %v1190, %v1196
        %v1198 = vcombine.low %v1189, %v1197
        %v1200 = vunpack.c.l.s4 1934713408
        %v1201 = vunpack.c.0.s8 %v1200
        %v1202 = vlaneseq
        %v1203 = vshrl.u32 %v1202, 7
        %v1204 = vsub.s32 %v1201, %v1203
        %v1205 = vrot.slane %v1198, %v1204
        %v1206 = vcombine.high %v1205, 0
        %v1207 = vcombine.low %v1078, %v1142
        %v1209 = vunpack.c.l.s4 1983009808
        %v1210 = vunpack.c.0.s8 %v1209
        %v1211 = vlaneseq
        %v1212 = vshrl.u32 %v1211, 7
        %v1213 = vsub.s32 %v1210, %v1212
        %v1214 = vrot.slane %v1207, %v1213
        %v1215 = vcombine.low %v1110, %v1174
        %v1217 = vunpack.c.l.s4 1983009808
        %v1218 = vunpack.c.0.s8 %v1217
        %v1219 = vlaneseq
        %v1220 = vshrl.u32 %v1219, 7
        %v1221 = vsub.s32 %v1218, %v1220
        %v1222 = vrot.slane %v1215, %v1221
        %v1223 = vcombine.low %v1214, %v1222
        %v1225 = vunpack.c.l.s4 1934713408
        %v1226 = vunpack.c.0.s8 %v1225
        %v1227 = vlaneseq
        %v1228 = vshrl.u32 %v1227, 7
        %v1229 = vsub.s32 %v1226, %v1228
        %v1230 = vrot.slane %v1223, %v1229
        %v1231 = vcombine.high %v1230, 0
        %v1234 = vpack.i.b16 %v1230, %v1205
        %v1235 = vshrl.u32 %v1205, 16
        %v1236 = vshrl.u32 %v1230, 16
        %v1237 = vpack.i.b16 %v1236, %v1235
        %v1240 = vpack.i.b16 %v1231, %v1206
        %v1241 = vshrl.u32 %v1206, 16
        %v1242 = vshrl.u32 %v1231, 16
        %v1243 = vpack.i.b16 %v1242, %v1241
        %vm1244 = vcmask 64512
        %v1246 = vsel %vm1244, %v816, 0
        %vm1248 = vcmask 1043456
        %v1250 = vsel %vm1248, %v1234, 0
        %1252 = vmatprep.subr.bf16.mxu0 0
        %1253 = vmatpush1.bf16.msra.mxu0 %v1250
        %1254 = vmatprep.subr.bf16.mxu0 0
        %1255 = vmatpush1.bf16.msra.mxu0 0
        %1256 = vmatprep.subr.bf16.mxu0 0
        %1257 = vmatpush1.bf16.msra.mxu0 0
        %1258 = vmatprep.subr.bf16.mxu0 0
        %1259 = vmatpush1.bf16.msra.mxu0 0
        %1260 = vmatprep.subr.bf16.mxu0 0
        %1261 = vmatpush1.bf16.msra.mxu0 0
        %1262 = vmatprep.subr.bf16.mxu0 0
        %1263 = vmatpush1.bf16.msra.mxu0 0
        %1264 = vmatprep.subr.bf16.mxu0 0
        %1265 = vmatpush1.bf16.msra.mxu0 0
        %1266 = vmatprep.subr.bf16.mxu0 0
        %1267 = vmatpush1.bf16.msra.mxu0 0
        %1268 = vmatprep.subr.bf16.mxu0 0
        %1269 = vmatpush1.bf16.msra.mxu0 0
        %1270 = vmatprep.subr.bf16.mxu0 0
        %1271 = vmatpush1.bf16.msra.mxu0 0
        %1272 = vmatprep.subr.bf16.mxu0 0
        %1273 = vmatpush1.bf16.msra.mxu0 0
        %1274 = vmatprep.subr.bf16.mxu0 0
        %1275 = vmatpush1.bf16.msra.mxu0 0
        %1276 = vmatprep.subr.bf16.mxu0 0
        %1277 = vmatpush1.bf16.msra.mxu0 0
        %1278 = vmatprep.subr.bf16.mxu0 0
        %1279 = vmatpush1.bf16.msra.mxu0 0
        %1280 = vmatprep.subr.bf16.mxu0 0
        %1281 = vmatpush1.bf16.msra.mxu0 0
        %1282 = vmatprep.subr.bf16.mxu0 0
        %1283 = vmatpush1.bf16.msra.mxu0 0
        %1284 = vmatprep.mubr.bf16.mxu0 0
        %1285 = vmatmul.mubr.bf16.gmra.mrb[0].mxu0 %v1246
        %v1286 = vpop.f32.mrb[0].mxu0
        %v1287 = vadd.f32 0.0, %v1286
        %v1288 = vpop.f32.mrb[0].mxu0
        %v1289 = vpop.f32.mrb[0].mxu0
        %v1290 = vpop.f32.mrb[0].mxu0
        %1291 = vdwg.mxu0
        %v1293 = vsel %vm1244, %v819, 0
        %v1296 = vsel %vm1248, %v1237, 0
        %1298 = vmatprep.subr.bf16.mxu0 0
        %1299 = vmatpush1.bf16.msra.mxu0 %v1296
        %1300 = vmatprep.subr.bf16.mxu0 0
        %1301 = vmatpush1.bf16.msra.mxu0 0
        %1302 = vmatprep.subr.bf16.mxu0 0
        %1303 = vmatpush1.bf16.msra.mxu0 0
        %1304 = vmatprep.subr.bf16.mxu0 0
        %1305 = vmatpush1.bf16.msra.mxu0 0
        %1306 = vmatprep.subr.bf16.mxu0 0
        %1307 = vmatpush1.bf16.msra.mxu0 0
        %1308 = vmatprep.subr.bf16.mxu0 0
        %1309 = vmatpush1.bf16.msra.mxu0 0
        %1310 = vmatprep.subr.bf16.mxu0 0
        %1311 = vmatpush1.bf16.msra.mxu0 0
        %1312 = vmatprep.subr.bf16.mxu0 0
        %1313 = vmatpush1.bf16.msra.mxu0 0
        %1314 = vmatprep.subr.bf16.mxu0 0
        %1315 = vmatpush1.bf16.msra.mxu0 0
        %1316 = vmatprep.subr.bf16.mxu0 0
        %1317 = vmatpush1.bf16.msra.mxu0 0
        %1318 = vmatprep.subr.bf16.mxu0 0
        %1319 = vmatpush1.bf16.msra.mxu0 0
        %1320 = vmatprep.subr.bf16.mxu0 0
        %1321 = vmatpush1.bf16.msra.mxu0 0
        %1322 = vmatprep.subr.bf16.mxu0 0
        %1323 = vmatpush1.bf16.msra.mxu0 0
        %1324 = vmatprep.subr.bf16.mxu0 0
        %1325 = vmatpush1.bf16.msra.mxu0 0
        %1326 = vmatprep.subr.bf16.mxu0 0
        %1327 = vmatpush1.bf16.msra.mxu0 0
        %1328 = vmatprep.subr.bf16.mxu0 0
        %1329 = vmatpush1.bf16.msra.mxu0 0
        %1330 = vmatprep.mubr.bf16.mxu0 0
        %1331 = vmatmul.mubr.bf16.gmra.mrb[0].mxu0 %v1293
        %v1332 = vpop.f32.mrb[0].mxu0
        %v1333 = vadd.f32 0.0, %v1332
        %v1334 = vpop.f32.mrb[0].mxu0
        %v1335 = vpop.f32.mrb[0].mxu0
        %v1336 = vpop.f32.mrb[0].mxu0
        %1337 = vdwg.mxu0
        %v1339 = vsel %vm1244, %v822, 0
        %v1342 = vsel %vm1248, %v1240, 0
        %1344 = vmatprep.subr.bf16.mxu0 0
        %1345 = vmatpush1.bf16.msra.mxu0 %v1342
        %1346 = vmatprep.subr.bf16.mxu0 0
        %1347 = vmatpush1.bf16.msra.mxu0 0
        %1348 = vmatprep.subr.bf16.mxu0 0
        %1349 = vmatpush1.bf16.msra.mxu0 0
        %1350 = vmatprep.subr.bf16.mxu0 0
        %1351 = vmatpush1.bf16.msra.mxu0 0
        %1352 = vmatprep.subr.bf16.mxu0 0
        %1353 = vmatpush1.bf16.msra.mxu0 0
        %1354 = vmatprep.subr.bf16.mxu0 0
        %1355 = vmatpush1.bf16.msra.mxu0 0
        %1356 = vmatprep.subr.bf16.mxu0 0
        %1357 = vmatpush1.bf16.msra.mxu0 0
        %1358 = vmatprep.subr.bf16.mxu0 0
        %1359 = vmatpush1.bf16.msra.mxu0 0
        %1360 = vmatprep.subr.bf16.mxu0 0
        %1361 = vmatpush1.bf16.msra.mxu0 0
        %1362 = vmatprep.subr.bf16.mxu0 0
        %1363 = vmatpush1.bf16.msra.mxu0 0
        %1364 = vmatprep.subr.bf16.mxu0 0
        %1365 = vmatpush1.bf16.msra.mxu0 0
        %1366 = vmatprep.subr.bf16.mxu0 0
        %1367 = vmatpush1.bf16.msra.mxu0 0
        %1368 = vmatprep.subr.bf16.mxu0 0
        %1369 = vmatpush1.bf16.msra.mxu0 0
        %1370 = vmatprep.subr.bf16.mxu0 0
        %1371 = vmatpush1.bf16.msra.mxu0 0
        %1372 = vmatprep.subr.bf16.mxu0 0
        %1373 = vmatpush1.bf16.msra.mxu0 0
        %1374 = vmatprep.subr.bf16.mxu0 0
        %1375 = vmatpush1.bf16.msra.mxu0 0
        %1376 = vmatprep.mubr.bf16.mxu0 0
        %1377 = vmatmul.mubr.bf16.gmra.mrb[0].mxu0 %v1339
        %v1378 = vpop.f32.mrb[0].mxu0
        %v1379 = vadd.f32 0.0, %v1378
        %v1380 = vpop.f32.mrb[0].mxu0
        %v1381 = vpop.f32.mrb[0].mxu0
        %v1382 = vpop.f32.mrb[0].mxu0
        %1383 = vdwg.mxu0
        %v1385 = vsel %vm1244, %v825, 0
        %v1388 = vsel %vm1248, %v1243, 0
        %1390 = vmatprep.subr.bf16.mxu0 0
        %1391 = vmatpush1.bf16.msra.mxu0 %v1388
        %1392 = vmatprep.subr.bf16.mxu0 0
        %1393 = vmatpush1.bf16.msra.mxu0 0
        %1394 = vmatprep.subr.bf16.mxu0 0
        %1395 = vmatpush1.bf16.msra.mxu0 0
        %1396 = vmatprep.subr.bf16.mxu0 0
        %1397 = vmatpush1.bf16.msra.mxu0 0
        %1398 = vmatprep.subr.bf16.mxu0 0
        %1399 = vmatpush1.bf16.msra.mxu0 0
        %1400 = vmatprep.subr.bf16.mxu0 0
        %1401 = vmatpush1.bf16.msra.mxu0 0
        %1402 = vmatprep.subr.bf16.mxu0 0
        %1403 = vmatpush1.bf16.msra.mxu0 0
        %1404 = vmatprep.subr.bf16.mxu0 0
        %1405 = vmatpush1.bf16.msra.mxu0 0
        %1406 = vmatprep.subr.bf16.mxu0 0
        %1407 = vmatpush1.bf16.msra.mxu0 0
        %1408 = vmatprep.subr.bf16.mxu0 0
        %1409 = vmatpush1.bf16.msra.mxu0 0
        %1410 = vmatprep.subr.bf16.mxu0 0
        %1411 = vmatpush1.bf16.msra.mxu0 0
        %1412 = vmatprep.subr.bf16.mxu0 0
        %1413 = vmatpush1.bf16.msra.mxu0 0
        %1414 = vmatprep.subr.bf16.mxu0 0
        %1415 = vmatpush1.bf16.msra.mxu0 0
        %1416 = vmatprep.subr.bf16.mxu0 0
        %1417 = vmatpush1.bf16.msra.mxu0 0
        %1418 = vmatprep.subr.bf16.mxu0 0
        %1419 = vmatpush1.bf16.msra.mxu0 0
        %1420 = vmatprep.subr.bf16.mxu0 0
        %1421 = vmatpush1.bf16.msra.mxu0 0
        %1422 = vmatprep.mubr.bf16.mxu0 0
        %1423 = vmatmul.mubr.bf16.gmra.mrb[0].mxu0 %v1385
        %v1424 = vpop.f32.mrb[0].mxu0
        %v1425 = vadd.f32 0.0, %v1424
        %v1426 = vpop.f32.mrb[0].mxu0
        %v1427 = vpop.f32.mrb[0].mxu0
        %v1428 = vpop.f32.mrb[0].mxu0
        %1429 = vdwg.mxu0
        %v1430 = vsel %vm1244, %v1287, -inf
        %1431 = vmax.xlane.f32.xlu0 %v1430
        %v1432 = vpop.xlane.xlu0 %1431
        %v1433 = vsel %vm1244, %v1333, -inf
        %1434 = vmax.xlane.f32.xlu0 %v1433
        %v1435 = vpop.xlane.xlu0 %1434
        %v1436 = vsel %vm1244, %v1379, -inf
        %1437 = vmax.xlane.f32.xlu0 %v1436
        %v1438 = vpop.xlane.xlu0 %1437
        %v1439 = vsel %vm1244, %v1425, -inf
        %1440 = vmax.xlane.f32.xlu0 %v1439
        %v1441 = vpop.xlane.xlu0 %1440
        %v1442 = vsub.f32 %v1287, %v1432
        %v1443 = vsub.f32 %v1333, %v1435
        %v1444 = vsub.f32 %v1379, %v1438
        %v1445 = vsub.f32 %v1425, %v1441
        %v1446 = vmul.f32 %v1442, 1.442695
        %v1447 = vpow.pop %v1446
        %v1448 = vmul.f32 %v1443, 1.442695
        %v1449 = vpow.pop %v1448
        %v1450 = vmul.f32 %v1444, 1.442695
        %v1451 = vpow.pop %v1450
        %v1452 = vmul.f32 %v1445, 1.442695
        %v1453 = vpow.pop %v1452
        %v1454 = vsel %vm1244, %v1447, 0.0
        %1455 = vadd.xlane.f32.xlu0 %v1454
        %v1456 = vpop.xlane.xlu0 %1455
        %v1457 = vsel %vm1244, %v1449, 0.0
        %1458 = vadd.xlane.f32.xlu0 %v1457
        %v1459 = vpop.xlane.xlu0 %1458
        %v1460 = vsel %vm1244, %v1451, 0.0
        %1461 = vadd.xlane.f32.xlu0 %v1460
        %v1462 = vpop.xlane.xlu0 %1461
        %v1463 = vsel %vm1244, %v1453, 0.0
        %1464 = vadd.xlane.f32.xlu0 %v1463
        %v1465 = vpop.xlane.xlu0 %1464
        %v1466 = vrcp.pop %v1456
        %v1467 = vrcp.pop %v1459
        %v1468 = vrcp.pop %v1462
        %v1469 = vrcp.pop %v1465
        %v1470 = vmul.f32 %v1447, %v1466
        %v1471 = vmul.f32 %v1449, %v1467
        %v1472 = vmul.f32 %v1451, %v1468
        %v1473 = vmul.f32 %v1453, %v1469
        %v1474 = vpack.c.bf16 %v1470, %v1470
        %v1475 = vpack.c.bf16 %v1471, %v1471
        %v1476 = vpack.c.bf16 %v1472, %v1472
        %v1477 = vpack.c.bf16 %v1473, %v1473
        %v1478 = vpack.c.bf16 %v720, %v720
        %v1479 = vpack.c.bf16 %v744, %v744
        %v1480 = vpack.c.bf16 %v727, %v727
        %v1481 = vpack.c.bf16 %v745, %v745
        %v1482 = vpack.c.bf16 %v736, %v736
        %v1483 = vpack.c.bf16 %v746, %v746
        %v1484 = vpack.c.bf16 %v743, %v743
        %v1485 = vpack.c.bf16 %v747, %v747
        %1486 = vxpose.xlu0.c.b16.start [1/8] %v1478, 128
        %1487 = vxpose.xlu0.c.b16.cont [2/8] 0, 128
        %1488 = vxpose.xlu0.c.b16.cont [3/8] 0, 128
        %1489 = vxpose.xlu0.c.b16.cont [4/8] 0, 128
        %1490 = vxpose.xlu0.c.b16.cont [5/8] 0, 128
        %1491 = vxpose.xlu0.c.b16.cont [6/8] 0, 128
        %1492 = vxpose.xlu0.c.b16.cont [7/8] 0, 128
        %1493 = vxpose.xlu0.c.b16.end [8/8] 0, 128
        %v1494 = vpop.trf.xlu0
        %v1495 = vpop.trf.xlu0
        %v1496 = vpop.trf.xlu0
        %v1497 = vpop.trf.xlu0
        %v1498 = vpop.trf.xlu0
        %v1499 = vpop.trf.xlu0
        %v1500 = vpop.trf.xlu0
        %v1501 = vpop.trf.xlu0
        %1502 = vxpose.xlu0.c.b16.start [1/8] %v1479, 128
        %1503 = vxpose.xlu0.c.b16.cont [2/8] 0, 128
        %1504 = vxpose.xlu0.c.b16.cont [3/8] 0, 128
        %1505 = vxpose.xlu0.c.b16.cont [4/8] 0, 128
        %1506 = vxpose.xlu0.c.b16.cont [5/8] 0, 128
        %1507 = vxpose.xlu0.c.b16.cont [6/8] 0, 128
        %1508 = vxpose.xlu0.c.b16.cont [7/8] 0, 128
        %1509 = vxpose.xlu0.c.b16.end [8/8] 0, 128
        %v1510 = vpop.trf.xlu0
        %v1511 = vpop.trf.xlu0
        %v1512 = vpop.trf.xlu0
        %v1513 = vpop.trf.xlu0
        %v1514 = vpop.trf.xlu0
        %v1515 = vpop.trf.xlu0
        %v1516 = vpop.trf.xlu0
        %v1517 = vpop.trf.xlu0
        %1518 = vxpose.xlu0.c.b16.start [1/8] %v1480, 128
        %1519 = vxpose.xlu0.c.b16.cont [2/8] 0, 128
        %1520 = vxpose.xlu0.c.b16.cont [3/8] 0, 128
        %1521 = vxpose.xlu0.c.b16.cont [4/8] 0, 128
        %1522 = vxpose.xlu0.c.b16.cont [5/8] 0, 128
        %1523 = vxpose.xlu0.c.b16.cont [6/8] 0, 128
        %1524 = vxpose.xlu0.c.b16.cont [7/8] 0, 128
        %1525 = vxpose.xlu0.c.b16.end [8/8] 0, 128
        %v1526 = vpop.trf.xlu0
        %v1527 = vpop.trf.xlu0
        %v1528 = vpop.trf.xlu0
        %v1529 = vpop.trf.xlu0
        %v1530 = vpop.trf.xlu0
        %v1531 = vpop.trf.xlu0
        %v1532 = vpop.trf.xlu0
        %v1533 = vpop.trf.xlu0
        %1534 = vxpose.xlu0.c.b16.start [1/8] %v1481, 128
        %1535 = vxpose.xlu0.c.b16.cont [2/8] 0, 128
        %1536 = vxpose.xlu0.c.b16.cont [3/8] 0, 128
        %1537 = vxpose.xlu0.c.b16.cont [4/8] 0, 128
        %1538 = vxpose.xlu0.c.b16.cont [5/8] 0, 128
        %1539 = vxpose.xlu0.c.b16.cont [6/8] 0, 128
        %1540 = vxpose.xlu0.c.b16.cont [7/8] 0, 128
        %1541 = vxpose.xlu0.c.b16.end [8/8] 0, 128
        %v1542 = vpop.trf.xlu0
        %v1543 = vpop.trf.xlu0
        %v1544 = vpop.trf.xlu0
        %v1545 = vpop.trf.xlu0
        %v1546 = vpop.trf.xlu0
        %v1547 = vpop.trf.xlu0
        %v1548 = vpop.trf.xlu0
        %v1549 = vpop.trf.xlu0
        %1550 = vxpose.xlu0.c.b16.start [1/8] %v1482, 128
        %1551 = vxpose.xlu0.c.b16.cont [2/8] 0, 128
        %1552 = vxpose.xlu0.c.b16.cont [3/8] 0, 128
        %1553 = vxpose.xlu0.c.b16.cont [4/8] 0, 128
        %1554 = vxpose.xlu0.c.b16.cont [5/8] 0, 128
        %1555 = vxpose.xlu0.c.b16.cont [6/8] 0, 128
        %1556 = vxpose.xlu0.c.b16.cont [7/8] 0, 128
        %1557 = vxpose.xlu0.c.b16.end [8/8] 0, 128
        %v1558 = vpop.trf.xlu0
        %v1559 = vpop.trf.xlu0
        %v1560 = vpop.trf.xlu0
        %v1561 = vpop.trf.xlu0
        %v1562 = vpop.trf.xlu0
        %v1563 = vpop.trf.xlu0
        %v1564 = vpop.trf.xlu0
        %v1565 = vpop.trf.xlu0
        %1566 = vxpose.xlu0.c.b16.start [1/8] %v1483, 128
        %1567 = vxpose.xlu0.c.b16.cont [2/8] 0, 128
        %1568 = vxpose.xlu0.c.b16.cont [3/8] 0, 128
        %1569 = vxpose.xlu0.c.b16.cont [4/8] 0, 128
        %1570 = vxpose.xlu0.c.b16.cont [5/8] 0, 128
        %1571 = vxpose.xlu0.c.b16.cont [6/8] 0, 128
        %1572 = vxpose.xlu0.c.b16.cont [7/8] 0, 128
        %1573 = vxpose.xlu0.c.b16.end [8/8] 0, 128
        %v1574 = vpop.trf.xlu0
        %v1575 = vpop.trf.xlu0
        %v1576 = vpop.trf.xlu0
        %v1577 = vpop.trf.xlu0
        %v1578 = vpop.trf.xlu0
        %v1579 = vpop.trf.xlu0
        %v1580 = vpop.trf.xlu0
        %v1581 = vpop.trf.xlu0
        %1582 = vxpose.xlu0.c.b16.start [1/8] %v1484, 128
        %1583 = vxpose.xlu0.c.b16.cont [2/8] 0, 128
        %1584 = vxpose.xlu0.c.b16.cont [3/8] 0, 128
        %1585 = vxpose.xlu0.c.b16.cont [4/8] 0, 128
        %1586 = vxpose.xlu0.c.b16.cont [5/8] 0, 128
        %1587 = vxpose.xlu0.c.b16.cont [6/8] 0, 128
        %1588 = vxpose.xlu0.c.b16.cont [7/8] 0, 128
        %1589 = vxpose.xlu0.c.b16.end [8/8] 0, 128
        %v1590 = vpop.trf.xlu0
        %v1591 = vpop.trf.xlu0
        %v1592 = vpop.trf.xlu0
        %v1593 = vpop.trf.xlu0
        %v1594 = vpop.trf.xlu0
        %v1595 = vpop.trf.xlu0
        %v1596 = vpop.trf.xlu0
        %v1597 = vpop.trf.xlu0
        %1598 = vxpose.xlu0.c.b16.start [1/8] %v1485, 128
        %1599 = vxpose.xlu0.c.b16.cont [2/8] 0, 128
        %1600 = vxpose.xlu0.c.b16.cont [3/8] 0, 128
        %1601 = vxpose.xlu0.c.b16.cont [4/8] 0, 128
        %1602 = vxpose.xlu0.c.b16.cont [5/8] 0, 128
        %1603 = vxpose.xlu0.c.b16.cont [6/8] 0, 128
        %1604 = vxpose.xlu0.c.b16.cont [7/8] 0, 128
        %1605 = vxpose.xlu0.c.b16.end [8/8] 0, 128
        %v1606 = vpop.trf.xlu0
        %v1607 = vpop.trf.xlu0
        %v1608 = vpop.trf.xlu0
        %v1609 = vpop.trf.xlu0
        %v1610 = vpop.trf.xlu0
        %v1611 = vpop.trf.xlu0
        %v1612 = vpop.trf.xlu0
        %v1613 = vpop.trf.xlu0
        %v1614 = vcombine.low %v1494, %v1558
        %v1616 = vunpack.c.l.s4 1983009808
        %v1617 = vunpack.c.0.s8 %v1616
        %v1618 = vlaneseq
        %v1619 = vshrl.u32 %v1618, 7
        %v1620 = vsub.s32 %v1617, %v1619
        %v1621 = vrot.slane %v1614, %v1620
        %v1622 = vcombine.low %v1526, %v1590
        %v1624 = vunpack.c.l.s4 1983009808
        %v1625 = vunpack.c.0.s8 %v1624
        %v1626 = vlaneseq
        %v1627 = vshrl.u32 %v1626, 7
        %v1628 = vsub.s32 %v1625, %v1627
        %v1629 = vrot.slane %v1622, %v1628
        %v1630 = vcombine.low %v1621, %v1629
        %v1631 = vcombine.high %v1621, %v1629
        %v1633 = vunpack.c.l.s4 1934713408
        %v1634 = vunpack.c.0.s8 %v1633
        %v1635 = vlaneseq
        %v1636 = vshrl.u32 %v1635, 7
        %v1637 = vsub.s32 %v1634, %v1636
        %v1638 = vrot.slane %v1630, %v1637
        %v1640 = vunpack.c.l.s4 1934713408
        %v1641 = vunpack.c.0.s8 %v1640
        %v1642 = vlaneseq
        %v1643 = vshrl.u32 %v1642, 7
        %v1644 = vsub.s32 %v1641, %v1643
        %v1645 = vrot.slane %v1631, %v1644
        %v1646 = vcombine.high %v1638, 0
        %v1647 = vcombine.high %v1645, 0
        %v1648 = vcombine.low %v1510, %v1574
        %v1650 = vunpack.c.l.s4 1983009808
        %v1651 = vunpack.c.0.s8 %v1650
        %v1652 = vlaneseq
        %v1653 = vshrl.u32 %v1652, 7
        %v1654 = vsub.s32 %v1651, %v1653
        %v1655 = vrot.slane %v1648, %v1654
        %v1656 = vcombine.low %v1542, %v1606
        %v1658 = vunpack.c.l.s4 1983009808
        %v1659 = vunpack.c.0.s8 %v1658
        %v1660 = vlaneseq
        %v1661 = vshrl.u32 %v1660, 7
        %v1662 = vsub.s32 %v1659, %v1661
        %v1663 = vrot.slane %v1656, %v1662
        %v1664 = vcombine.low %v1655, %v1663
        %v1665 = vcombine.high %v1655, %v1663
        %v1667 = vunpack.c.l.s4 1934713408
        %v1668 = vunpack.c.0.s8 %v1667
        %v1669 = vlaneseq
        %v1670 = vshrl.u32 %v1669, 7
        %v1671 = vsub.s32 %v1668, %v1670
        %v1672 = vrot.slane %v1664, %v1671
        %v1674 = vunpack.c.l.s4 1934713408
        %v1675 = vunpack.c.0.s8 %v1674
        %v1676 = vlaneseq
        %v1677 = vshrl.u32 %v1676, 7
        %v1678 = vsub.s32 %v1675, %v1677
        %v1679 = vrot.slane %v1665, %v1678
        %v1680 = vcombine.high %v1672, 0
        %v1681 = vcombine.high %v1679, 0
        %v1684 = vpack.i.b16 %v1672, %v1638
        %v1686 = vshrl.u32 %v1638, 16
        %v1687 = vshrl.u32 %v1672, 16
        %v1688 = vpack.i.b16 %v1687, %v1686
        %v1692 = vpack.i.b16 %v1680, %v1646
        %v1694 = vshrl.u32 %v1646, 16
        %v1695 = vshrl.u32 %v1680, 16
        %v1696 = vpack.i.b16 %v1695, %v1694
        %v1700 = vpack.i.b16 %v1679, %v1645
        %v1702 = vshrl.u32 %v1645, 16
        %v1703 = vshrl.u32 %v1679, 16
        %v1704 = vpack.i.b16 %v1703, %v1702
        %v1708 = vpack.i.b16 %v1681, %v1647
        %v1710 = vshrl.u32 %v1647, 16
        %v1711 = vshrl.u32 %v1681, 16
        %v1712 = vpack.i.b16 %v1711, %v1710
        %1714 = vxpose.xlu0.c.b16.start [1/8] %v1684, 128
        %1715 = vxpose.xlu0.c.b16.cont [2/8] 0, 128
        %1716 = vxpose.xlu0.c.b16.cont [3/8] 0, 128
        %1717 = vxpose.xlu0.c.b16.cont [4/8] 0, 128
        %1718 = vxpose.xlu0.c.b16.cont [5/8] 0, 128
        %1719 = vxpose.xlu0.c.b16.cont [6/8] 0, 128
        %1720 = vxpose.xlu0.c.b16.cont [7/8] 0, 128
        %1721 = vxpose.xlu0.c.b16.end [8/8] 0, 128
        %v1722 = vpop.trf.xlu0
        %v1723 = vpop.trf.xlu0
        %v1724 = vpop.trf.xlu0
        %v1725 = vpop.trf.xlu0
        %v1726 = vpop.trf.xlu0
        %v1727 = vpop.trf.xlu0
        %v1728 = vpop.trf.xlu0
        %v1729 = vpop.trf.xlu0
        %1730 = vxpose.xlu0.c.b16.start [1/8] %v1688, 128
        %1731 = vxpose.xlu0.c.b16.cont [2/8] 0, 128
        %1732 = vxpose.xlu0.c.b16.cont [3/8] 0, 128
        %1733 = vxpose.xlu0.c.b16.cont [4/8] 0, 128
        %1734 = vxpose.xlu0.c.b16.cont [5/8] 0, 128
        %1735 = vxpose.xlu0.c.b16.cont [6/8] 0, 128
        %1736 = vxpose.xlu0.c.b16.cont [7/8] 0, 128
        %1737 = vxpose.xlu0.c.b16.end [8/8] 0, 128
        %v1738 = vpop.trf.xlu0
        %v1739 = vpop.trf.xlu0
        %v1740 = vpop.trf.xlu0
        %v1741 = vpop.trf.xlu0
        %v1742 = vpop.trf.xlu0
        %v1743 = vpop.trf.xlu0
        %v1744 = vpop.trf.xlu0
        %v1745 = vpop.trf.xlu0
        %1746 = vxpose.xlu0.c.b16.start [1/8] %v1692, 128
        %1747 = vxpose.xlu0.c.b16.cont [2/8] 0, 128
        %1748 = vxpose.xlu0.c.b16.cont [3/8] 0, 128
        %1749 = vxpose.xlu0.c.b16.cont [4/8] 0, 128
        %1750 = vxpose.xlu0.c.b16.cont [5/8] 0, 128
        %1751 = vxpose.xlu0.c.b16.cont [6/8] 0, 128
        %1752 = vxpose.xlu0.c.b16.cont [7/8] 0, 128
        %1753 = vxpose.xlu0.c.b16.end [8/8] 0, 128
        %v1754 = vpop.trf.xlu0
        %v1755 = vpop.trf.xlu0
        %v1756 = vpop.trf.xlu0
        %v1757 = vpop.trf.xlu0
        %v1758 = vpop.trf.xlu0
        %v1759 = vpop.trf.xlu0
        %v1760 = vpop.trf.xlu0
        %v1761 = vpop.trf.xlu0
        %1762 = vxpose.xlu0.c.b16.start [1/8] %v1696, 128
        %1763 = vxpose.xlu0.c.b16.cont [2/8] 0, 128
        %1764 = vxpose.xlu0.c.b16.cont [3/8] 0, 128
        %1765 = vxpose.xlu0.c.b16.cont [4/8] 0, 128
        %1766 = vxpose.xlu0.c.b16.cont [5/8] 0, 128
        %1767 = vxpose.xlu0.c.b16.cont [6/8] 0, 128
        %1768 = vxpose.xlu0.c.b16.cont [7/8] 0, 128
        %1769 = vxpose.xlu0.c.b16.end [8/8] 0, 128
        %v1770 = vpop.trf.xlu0
        %v1771 = vpop.trf.xlu0
        %v1772 = vpop.trf.xlu0
        %v1773 = vpop.trf.xlu0
        %v1774 = vpop.trf.xlu0
        %v1775 = vpop.trf.xlu0
        %v1776 = vpop.trf.xlu0
        %v1777 = vpop.trf.xlu0
        %1778 = vxpose.xlu0.c.b16.start [1/8] %v1700, 128
        %1779 = vxpose.xlu0.c.b16.cont [2/8] 0, 128
        %1780 = vxpose.xlu0.c.b16.cont [3/8] 0, 128
        %1781 = vxpose.xlu0.c.b16.cont [4/8] 0, 128
        %1782 = vxpose.xlu0.c.b16.cont [5/8] 0, 128
        %1783 = vxpose.xlu0.c.b16.cont [6/8] 0, 128
        %1784 = vxpose.xlu0.c.b16.cont [7/8] 0, 128
        %1785 = vxpose.xlu0.c.b16.end [8/8] 0, 128
        %v1786 = vpop.trf.xlu0
        %v1787 = vpop.trf.xlu0
        %v1788 = vpop.trf.xlu0
        %v1789 = vpop.trf.xlu0
        %v1790 = vpop.trf.xlu0
        %v1791 = vpop.trf.xlu0
        %v1792 = vpop.trf.xlu0
        %v1793 = vpop.trf.xlu0
        %1794 = vxpose.xlu0.c.b16.start [1/8] %v1704, 128
        %1795 = vxpose.xlu0.c.b16.cont [2/8] 0, 128
        %1796 = vxpose.xlu0.c.b16.cont [3/8] 0, 128
        %1797 = vxpose.xlu0.c.b16.cont [4/8] 0, 128
        %1798 = vxpose.xlu0.c.b16.cont [5/8] 0, 128
        %1799 = vxpose.xlu0.c.b16.cont [6/8] 0, 128
        %1800 = vxpose.xlu0.c.b16.cont [7/8] 0, 128
        %1801 = vxpose.xlu0.c.b16.end [8/8] 0, 128
        %v1802 = vpop.trf.xlu0
        %v1803 = vpop.trf.xlu0
        %v1804 = vpop.trf.xlu0
        %v1805 = vpop.trf.xlu0
        %v1806 = vpop.trf.xlu0
        %v1807 = vpop.trf.xlu0
        %v1808 = vpop.trf.xlu0
        %v1809 = vpop.trf.xlu0
        %1810 = vxpose.xlu0.c.b16.start [1/8] %v1708, 128
        %1811 = vxpose.xlu0.c.b16.cont [2/8] 0, 128
        %1812 = vxpose.xlu0.c.b16.cont [3/8] 0, 128
        %1813 = vxpose.xlu0.c.b16.cont [4/8] 0, 128
        %1814 = vxpose.xlu0.c.b16.cont [5/8] 0, 128
        %1815 = vxpose.xlu0.c.b16.cont [6/8] 0, 128
        %1816 = vxpose.xlu0.c.b16.cont [7/8] 0, 128
        %1817 = vxpose.xlu0.c.b16.end [8/8] 0, 128
        %v1818 = vpop.trf.xlu0
        %v1819 = vpop.trf.xlu0
        %v1820 = vpop.trf.xlu0
        %v1821 = vpop.trf.xlu0
        %v1822 = vpop.trf.xlu0
        %v1823 = vpop.trf.xlu0
        %v1824 = vpop.trf.xlu0
        %v1825 = vpop.trf.xlu0
        %1826 = vxpose.xlu0.c.b16.start [1/8] %v1712, 128
        %1827 = vxpose.xlu0.c.b16.cont [2/8] 0, 128
        %1828 = vxpose.xlu0.c.b16.cont [3/8] 0, 128
        %1829 = vxpose.xlu0.c.b16.cont [4/8] 0, 128
        %1830 = vxpose.xlu0.c.b16.cont [5/8] 0, 128
        %1831 = vxpose.xlu0.c.b16.cont [6/8] 0, 128
        %1832 = vxpose.xlu0.c.b16.cont [7/8] 0, 128
        %1833 = vxpose.xlu0.c.b16.end [8/8] 0, 128
        %v1834 = vpop.trf.xlu0
        %v1835 = vpop.trf.xlu0
        %v1836 = vpop.trf.xlu0
        %v1837 = vpop.trf.xlu0
        %v1838 = vpop.trf.xlu0
        %v1839 = vpop.trf.xlu0
        %v1840 = vpop.trf.xlu0
        %v1841 = vpop.trf.xlu0
        %v1842 = vcombine.low %v1722, %v1786
        %v1844 = vunpack.c.l.s4 1983009808
        %v1845 = vunpack.c.0.s8 %v1844
        %v1846 = vlaneseq
        %v1847 = vshrl.u32 %v1846, 7
        %v1848 = vsub.s32 %v1845, %v1847
        %v1849 = vrot.slane %v1842, %v1848
        %v1850 = vcombine.low %v1754, %v1818
        %v1852 = vunpack.c.l.s4 1983009808
        %v1853 = vunpack.c.0.s8 %v1852
        %v1854 = vlaneseq
        %v1855 = vshrl.u32 %v1854, 7
        %v1856 = vsub.s32 %v1853, %v1855
        %v1857 = vrot.slane %v1850, %v1856
        %v1858 = vcombine.low %v1849, %v1857
        %v1860 = vunpack.c.l.s4 1934713408
        %v1861 = vunpack.c.0.s8 %v1860
        %v1862 = vlaneseq
        %v1863 = vshrl.u32 %v1862, 7
        %v1864 = vsub.s32 %v1861, %v1863
        %v1865 = vrot.slane %v1858, %v1864
        %v1866 = vcombine.high %v1865, 0
        %v1867 = vcombine.low %v1738, %v1802
        %v1869 = vunpack.c.l.s4 1983009808
        %v1870 = vunpack.c.0.s8 %v1869
        %v1871 = vlaneseq
        %v1872 = vshrl.u32 %v1871, 7
        %v1873 = vsub.s32 %v1870, %v1872
        %v1874 = vrot.slane %v1867, %v1873
        %v1875 = vcombine.low %v1770, %v1834
        %v1877 = vunpack.c.l.s4 1983009808
        %v1878 = vunpack.c.0.s8 %v1877
        %v1879 = vlaneseq
        %v1880 = vshrl.u32 %v1879, 7
        %v1881 = vsub.s32 %v1878, %v1880
        %v1882 = vrot.slane %v1875, %v1881
        %v1883 = vcombine.low %v1874, %v1882
        %v1885 = vunpack.c.l.s4 1934713408
        %v1886 = vunpack.c.0.s8 %v1885
        %v1887 = vlaneseq
        %v1888 = vshrl.u32 %v1887, 7
        %v1889 = vsub.s32 %v1886, %v1888
        %v1890 = vrot.slane %v1883, %v1889
        %v1891 = vcombine.high %v1890, 0
        %v1894 = vpack.i.b16 %v1890, %v1865
        %v1895 = vshrl.u32 %v1865, 16
        %v1896 = vshrl.u32 %v1890, 16
        %v1897 = vpack.i.b16 %v1896, %v1895
        %v1900 = vpack.i.b16 %v1891, %v1866
        %v1901 = vshrl.u32 %v1866, 16
        %v1902 = vshrl.u32 %v1891, 16
        %v1903 = vpack.i.b16 %v1902, %v1901
        %v1905 = vsel %vm1244, %v1894, 0
        %v1908 = vsel %vm1244, %v1474, 0
        %1910 = vmatprep.subr.bf16.mxu0 0
        %1911 = vmatpush1.bf16.xpose.msra.mxu0 %v1908
        %1912 = vmatprep.subr.bf16.mxu0 0
        %1913 = vmatpush1.bf16.xpose.msra.mxu0 0
        %1914 = vmatprep.subr.bf16.mxu0 0
        %1915 = vmatpush1.bf16.xpose.msra.mxu0 0
        %1916 = vmatprep.subr.bf16.mxu0 0
        %1917 = vmatpush1.bf16.xpose.msra.mxu0 0
        %1918 = vmatprep.subr.bf16.mxu0 0
        %1919 = vmatpush1.bf16.xpose.msra.mxu0 0
        %1920 = vmatprep.subr.bf16.mxu0 0
        %1921 = vmatpush1.bf16.xpose.msra.mxu0 0
        %1922 = vmatprep.subr.bf16.mxu0 0
        %1923 = vmatpush1.bf16.xpose.msra.mxu0 0
        %1924 = vmatprep.subr.bf16.mxu0 0
        %1925 = vmatpush1.bf16.xpose.msra.mxu0 0
        %1926 = vmatprep.subr.bf16.mxu0 0
        %1927 = vmatpush1.bf16.xpose.msra.mxu0 0
        %1928 = vmatprep.subr.bf16.mxu0 0
        %1929 = vmatpush1.bf16.xpose.msra.mxu0 0
        %1930 = vmatprep.subr.bf16.mxu0 0
        %1931 = vmatpush1.bf16.xpose.msra.mxu0 0
        %1932 = vmatprep.subr.bf16.mxu0 0
        %1933 = vmatpush1.bf16.xpose.msra.mxu0 0
        %1934 = vmatprep.subr.bf16.mxu0 0
        %1935 = vmatpush1.bf16.xpose.msra.mxu0 0
        %1936 = vmatprep.subr.bf16.mxu0 0
        %1937 = vmatpush1.bf16.xpose.msra.mxu0 0
        %1938 = vmatprep.subr.bf16.mxu0 0
        %1939 = vmatpush1.bf16.xpose.msra.mxu0 0
        %1940 = vmatprep.subr.bf16.mxu0 0
        %1941 = vmatpush1.bf16.xpose.msra.mxu0 0
        %1942 = vmatprep.mubr.bf16.mxu0 0
        %1943 = vmatmul.mubr.bf16.gmra.mrb[0].mxu0 %v1905
        %v1944 = vpop.f32.mrb[0].mxu0
        %v1945 = vadd.f32 0.0, %v1944
        %v1946 = vpop.f32.mrb[0].mxu0
        %v1947 = vpop.f32.mrb[0].mxu0
        %v1948 = vpop.f32.mrb[0].mxu0
        %1949 = vdwg.mxu0
        %v1951 = vsel %vm1244, %v1897, 0
        %v1954 = vsel %vm1244, %v1475, 0
        %1956 = vmatprep.subr.bf16.mxu0 0
        %1957 = vmatpush1.bf16.xpose.msra.mxu0 %v1954
        %1958 = vmatprep.subr.bf16.mxu0 0
        %1959 = vmatpush1.bf16.xpose.msra.mxu0 0
        %1960 = vmatprep.subr.bf16.mxu0 0
        %1961 = vmatpush1.bf16.xpose.msra.mxu0 0
        %1962 = vmatprep.subr.bf16.mxu0 0
        %1963 = vmatpush1.bf16.xpose.msra.mxu0 0
        %1964 = vmatprep.subr.bf16.mxu0 0
        %1965 = vmatpush1.bf16.xpose.msra.mxu0 0
        %1966 = vmatprep.subr.bf16.mxu0 0
        %1967 = vmatpush1.bf16.xpose.msra.mxu0 0
        %1968 = vmatprep.subr.bf16.mxu0 0
        %1969 = vmatpush1.bf16.xpose.msra.mxu0 0
        %1970 = vmatprep.subr.bf16.mxu0 0
        %1971 = vmatpush1.bf16.xpose.msra.mxu0 0
        %1972 = vmatprep.subr.bf16.mxu0 0
        %1973 = vmatpush1.bf16.xpose.msra.mxu0 0
        %1974 = vmatprep.subr.bf16.mxu0 0
        %1975 = vmatpush1.bf16.xpose.msra.mxu0 0
        %1976 = vmatprep.subr.bf16.mxu0 0
        %1977 = vmatpush1.bf16.xpose.msra.mxu0 0
        %1978 = vmatprep.subr.bf16.mxu0 0
        %1979 = vmatpush1.bf16.xpose.msra.mxu0 0
        %1980 = vmatprep.subr.bf16.mxu0 0
        %1981 = vmatpush1.bf16.xpose.msra.mxu0 0
        %1982 = vmatprep.subr.bf16.mxu0 0
        %1983 = vmatpush1.bf16.xpose.msra.mxu0 0
        %1984 = vmatprep.subr.bf16.mxu0 0
        %1985 = vmatpush1.bf16.xpose.msra.mxu0 0
        %1986 = vmatprep.subr.bf16.mxu0 0
        %1987 = vmatpush1.bf16.xpose.msra.mxu0 0
        %1988 = vmatprep.mubr.bf16.mxu0 0
        %1989 = vmatmul.mubr.bf16.gmra.mrb[0].mxu0 %v1951
        %v1990 = vpop.f32.mrb[0].mxu0
        %v1991 = vadd.f32 0.0, %v1990
        %v1992 = vpop.f32.mrb[0].mxu0
        %v1993 = vpop.f32.mrb[0].mxu0
        %v1994 = vpop.f32.mrb[0].mxu0
        %1995 = vdwg.mxu0
        %v1997 = vsel %vm1244, %v1900, 0
        %v2000 = vsel %vm1244, %v1476, 0
        %2002 = vmatprep.subr.bf16.mxu0 0
        %2003 = vmatpush1.bf16.xpose.msra.mxu0 %v2000
        %2004 = vmatprep.subr.bf16.mxu0 0
        %2005 = vmatpush1.bf16.xpose.msra.mxu0 0
        %2006 = vmatprep.subr.bf16.mxu0 0
        %2007 = vmatpush1.bf16.xpose.msra.mxu0 0
        %2008 = vmatprep.subr.bf16.mxu0 0
        %2009 = vmatpush1.bf16.xpose.msra.mxu0 0
        %2010 = vmatprep.subr.bf16.mxu0 0
        %2011 = vmatpush1.bf16.xpose.msra.mxu0 0
        %2012 = vmatprep.subr.bf16.mxu0 0
        %2013 = vmatpush1.bf16.xpose.msra.mxu0 0
        %2014 = vmatprep.subr.bf16.mxu0 0
        %2015 = vmatpush1.bf16.xpose.msra.mxu0 0
        %2016 = vmatprep.subr.bf16.mxu0 0
        %2017 = vmatpush1.bf16.xpose.msra.mxu0 0
        %2018 = vmatprep.subr.bf16.mxu0 0
        %2019 = vmatpush1.bf16.xpose.msra.mxu0 0
        %2020 = vmatprep.subr.bf16.mxu0 0
        %2021 = vmatpush1.bf16.xpose.msra.mxu0 0
        %2022 = vmatprep.subr.bf16.mxu0 0
        %2023 = vmatpush1.bf16.xpose.msra.mxu0 0
        %2024 = vmatprep.subr.bf16.mxu0 0
        %2025 = vmatpush1.bf16.xpose.msra.mxu0 0
        %2026 = vmatprep.subr.bf16.mxu0 0
        %2027 = vmatpush1.bf16.xpose.msra.mxu0 0
        %2028 = vmatprep.subr.bf16.mxu0 0
        %2029 = vmatpush1.bf16.xpose.msra.mxu0 0
        %2030 = vmatprep.subr.bf16.mxu0 0
        %2031 = vmatpush1.bf16.xpose.msra.mxu0 0
        %2032 = vmatprep.subr.bf16.mxu0 0
        %2033 = vmatpush1.bf16.xpose.msra.mxu0 0
        %2034 = vmatprep.mubr.bf16.mxu0 0
        %2035 = vmatmul.mubr.bf16.gmra.mrb[0].mxu0 %v1997
        %v2036 = vpop.f32.mrb[0].mxu0
        %v2037 = vadd.f32 0.0, %v2036
        %v2038 = vpop.f32.mrb[0].mxu0
        %v2039 = vpop.f32.mrb[0].mxu0
        %v2040 = vpop.f32.mrb[0].mxu0
        %2041 = vdwg.mxu0
        %v2043 = vsel %vm1244, %v1903, 0
        %v2046 = vsel %vm1244, %v1477, 0
        %2048 = vmatprep.subr.bf16.mxu0 0
        %2049 = vmatpush1.bf16.xpose.msra.mxu0 %v2046
        %2050 = vmatprep.subr.bf16.mxu0 0
        %2051 = vmatpush1.bf16.xpose.msra.mxu0 0
        %2052 = vmatprep.subr.bf16.mxu0 0
        %2053 = vmatpush1.bf16.xpose.msra.mxu0 0
        %2054 = vmatprep.subr.bf16.mxu0 0
        %2055 = vmatpush1.bf16.xpose.msra.mxu0 0
        %2056 = vmatprep.subr.bf16.mxu0 0
        %2057 = vmatpush1.bf16.xpose.msra.mxu0 0
        %2058 = vmatprep.subr.bf16.mxu0 0
        %2059 = vmatpush1.bf16.xpose.msra.mxu0 0
        %2060 = vmatprep.subr.bf16.mxu0 0
        %2061 = vmatpush1.bf16.xpose.msra.mxu0 0
        %2062 = vmatprep.subr.bf16.mxu0 0
        %2063 = vmatpush1.bf16.xpose.msra.mxu0 0
        %2064 = vmatprep.subr.bf16.mxu0 0
        %2065 = vmatpush1.bf16.xpose.msra.mxu0 0
        %2066 = vmatprep.subr.bf16.mxu0 0
        %2067 = vmatpush1.bf16.xpose.msra.mxu0 0
        %2068 = vmatprep.subr.bf16.mxu0 0
        %2069 = vmatpush1.bf16.xpose.msra.mxu0 0
        %2070 = vmatprep.subr.bf16.mxu0 0
        %2071 = vmatpush1.bf16.xpose.msra.mxu0 0
        %2072 = vmatprep.subr.bf16.mxu0 0
        %2073 = vmatpush1.bf16.xpose.msra.mxu0 0
        %2074 = vmatprep.subr.bf16.mxu0 0
        %2075 = vmatpush1.bf16.xpose.msra.mxu0 0
        %2076 = vmatprep.subr.bf16.mxu0 0
        %2077 = vmatpush1.bf16.xpose.msra.mxu0 0
        %2078 = vmatprep.subr.bf16.mxu0 0
        %2079 = vmatpush1.bf16.xpose.msra.mxu0 0
        %2080 = vmatprep.mubr.bf16.mxu0 0
        %2081 = vmatmul.mubr.bf16.gmra.mrb[0].mxu0 %v2043
        %v2082 = vpop.f32.mrb[0].mxu0
        %v2083 = vadd.f32 0.0, %v2082
        %v2084 = vpop.f32.mrb[0].mxu0
        %v2085 = vpop.f32.mrb[0].mxu0
        %v2086 = vpop.f32.mrb[0].mxu0
        %2087 = vdwg.mxu0
        %2088 = vxpose.xlu0.b32.start [1/16] %v1945, 128
        %2089 = vxpose.xlu0.b32.cont [2/16] 0.0, 128
        %2090 = vxpose.xlu0.b32.cont [3/16] 0.0, 128
        %2091 = vxpose.xlu0.b32.cont [4/16] 0.0, 128
        %2092 = vxpose.xlu0.b32.cont [5/16] 0.0, 128
        %2093 = vxpose.xlu0.b32.cont [6/16] 0.0, 128
        %2094 = vxpose.xlu0.b32.cont [7/16] 0.0, 128
        %2095 = vxpose.xlu0.b32.cont [8/16] 0.0, 128
        %2096 = vxpose.xlu0.b32.cont [9/16] 0.0, 128
        %2097 = vxpose.xlu0.b32.cont [10/16] 0.0, 128
        %2098 = vxpose.xlu0.b32.cont [11/16] 0.0, 128
        %2099 = vxpose.xlu0.b32.cont [12/16] 0.0, 128
        %2100 = vxpose.xlu0.b32.cont [13/16] 0.0, 128
        %2101 = vxpose.xlu0.b32.cont [14/16] 0.0, 128
        %2102 = vxpose.xlu0.b32.cont [15/16] 0.0, 128
        %2103 = vxpose.xlu0.b32.end [16/16] 0.0, 128
        %v2104 = vpop.trf.xlu0
        %v2105 = vpop.trf.xlu0
        %v2106 = vpop.trf.xlu0
        %v2107 = vpop.trf.xlu0
        %v2108 = vpop.trf.xlu0
        %v2109 = vpop.trf.xlu0
        %v2110 = vpop.trf.xlu0
        %v2111 = vpop.trf.xlu0
        %v2112 = vpop.trf.xlu0
        %v2113 = vpop.trf.xlu0
        %v2114 = vpop.trf.xlu0
        %v2115 = vpop.trf.xlu0
        %v2116 = vpop.trf.xlu0
        %v2117 = vpop.trf.xlu0
        %v2118 = vpop.trf.xlu0
        %v2119 = vpop.trf.xlu0
        %2120 = vxpose.xlu0.b32.start [1/16] %v1991, 128
        %2121 = vxpose.xlu0.b32.cont [2/16] 0.0, 128
        %2122 = vxpose.xlu0.b32.cont [3/16] 0.0, 128
        %2123 = vxpose.xlu0.b32.cont [4/16] 0.0, 128
        %2124 = vxpose.xlu0.b32.cont [5/16] 0.0, 128
        %2125 = vxpose.xlu0.b32.cont [6/16] 0.0, 128
        %2126 = vxpose.xlu0.b32.cont [7/16] 0.0, 128
        %2127 = vxpose.xlu0.b32.cont [8/16] 0.0, 128
        %2128 = vxpose.xlu0.b32.cont [9/16] 0.0, 128
        %2129 = vxpose.xlu0.b32.cont [10/16] 0.0, 128
        %2130 = vxpose.xlu0.b32.cont [11/16] 0.0, 128
        %2131 = vxpose.xlu0.b32.cont [12/16] 0.0, 128
        %2132 = vxpose.xlu0.b32.cont [13/16] 0.0, 128
        %2133 = vxpose.xlu0.b32.cont [14/16] 0.0, 128
        %2134 = vxpose.xlu0.b32.cont [15/16] 0.0, 128
        %2135 = vxpose.xlu0.b32.end [16/16] 0.0, 128
        %v2136 = vpop.trf.xlu0
        %v2137 = vpop.trf.xlu0
        %v2138 = vpop.trf.xlu0
        %v2139 = vpop.trf.xlu0
        %v2140 = vpop.trf.xlu0
        %v2141 = vpop.trf.xlu0
        %v2142 = vpop.trf.xlu0
        %v2143 = vpop.trf.xlu0
        %v2144 = vpop.trf.xlu0
        %v2145 = vpop.trf.xlu0
        %v2146 = vpop.trf.xlu0
        %v2147 = vpop.trf.xlu0
        %v2148 = vpop.trf.xlu0
        %v2149 = vpop.trf.xlu0
        %v2150 = vpop.trf.xlu0
        %v2151 = vpop.trf.xlu0
        %2152 = vxpose.xlu0.b32.start [1/16] %v2037, 128
        %2153 = vxpose.xlu0.b32.cont [2/16] 0.0, 128
        %2154 = vxpose.xlu0.b32.cont [3/16] 0.0, 128
        %2155 = vxpose.xlu0.b32.cont [4/16] 0.0, 128
        %2156 = vxpose.xlu0.b32.cont [5/16] 0.0, 128
        %2157 = vxpose.xlu0.b32.cont [6/16] 0.0, 128
        %2158 = vxpose.xlu0.b32.cont [7/16] 0.0, 128
        %2159 = vxpose.xlu0.b32.cont [8/16] 0.0, 128
        %2160 = vxpose.xlu0.b32.cont [9/16] 0.0, 128
        %2161 = vxpose.xlu0.b32.cont [10/16] 0.0, 128
        %2162 = vxpose.xlu0.b32.cont [11/16] 0.0, 128
        %2163 = vxpose.xlu0.b32.cont [12/16] 0.0, 128
        %2164 = vxpose.xlu0.b32.cont [13/16] 0.0, 128
        %2165 = vxpose.xlu0.b32.cont [14/16] 0.0, 128
        %2166 = vxpose.xlu0.b32.cont [15/16] 0.0, 128
        %2167 = vxpose.xlu0.b32.end [16/16] 0.0, 128
        %v2168 = vpop.trf.xlu0
        %v2169 = vpop.trf.xlu0
        %v2170 = vpop.trf.xlu0
        %v2171 = vpop.trf.xlu0
        %v2172 = vpop.trf.xlu0
        %v2173 = vpop.trf.xlu0
        %v2174 = vpop.trf.xlu0
        %v2175 = vpop.trf.xlu0
        %v2176 = vpop.trf.xlu0
        %v2177 = vpop.trf.xlu0
        %v2178 = vpop.trf.xlu0
        %v2179 = vpop.trf.xlu0
        %v2180 = vpop.trf.xlu0
        %v2181 = vpop.trf.xlu0
        %v2182 = vpop.trf.xlu0
        %v2183 = vpop.trf.xlu0
        %2184 = vxpose.xlu0.b32.start [1/16] %v2083, 128
        %2185 = vxpose.xlu0.b32.cont [2/16] 0.0, 128
        %2186 = vxpose.xlu0.b32.cont [3/16] 0.0, 128
        %2187 = vxpose.xlu0.b32.cont [4/16] 0.0, 128
        %2188 = vxpose.xlu0.b32.cont [5/16] 0.0, 128
        %2189 = vxpose.xlu0.b32.cont [6/16] 0.0, 128
        %2190 = vxpose.xlu0.b32.cont [7/16] 0.0, 128
        %2191 = vxpose.xlu0.b32.cont [8/16] 0.0, 128
        %2192 = vxpose.xlu0.b32.cont [9/16] 0.0, 128
        %2193 = vxpose.xlu0.b32.cont [10/16] 0.0, 128
        %2194 = vxpose.xlu0.b32.cont [11/16] 0.0, 128
        %2195 = vxpose.xlu0.b32.cont [12/16] 0.0, 128
        %2196 = vxpose.xlu0.b32.cont [13/16] 0.0, 128
        %2197 = vxpose.xlu0.b32.cont [14/16] 0.0, 128
        %2198 = vxpose.xlu0.b32.cont [15/16] 0.0, 128
        %2199 = vxpose.xlu0.b32.end [16/16] 0.0, 128
        %v2200 = vpop.trf.xlu0
        %v2201 = vpop.trf.xlu0
        %v2202 = vpop.trf.xlu0
        %v2203 = vpop.trf.xlu0
        %v2204 = vpop.trf.xlu0
        %v2205 = vpop.trf.xlu0
        %v2206 = vpop.trf.xlu0
        %v2207 = vpop.trf.xlu0
        %v2208 = vpop.trf.xlu0
        %v2209 = vpop.trf.xlu0
        %v2210 = vpop.trf.xlu0
        %v2211 = vpop.trf.xlu0
        %v2212 = vpop.trf.xlu0
        %v2213 = vpop.trf.xlu0
        %v2214 = vpop.trf.xlu0
        %v2215 = vpop.trf.xlu0
        %v2216 = vcombine.low %v2104, %v2168
        %v2217 = vcombine.high %v2104, %v2168
        %v2219 = vunpack.c.l.s4 1983009808
        %v2220 = vunpack.c.0.s8 %v2219
        %v2221 = vlaneseq
        %v2222 = vshrl.u32 %v2221, 7
        %v2223 = vsub.s32 %v2220, %v2222
        %v2224 = vrot.slane %v2216, %v2223
        %v2226 = vunpack.c.l.s4 1983009808
        %v2227 = vunpack.c.0.s8 %v2226
        %v2228 = vlaneseq
        %v2229 = vshrl.u32 %v2228, 7
        %v2230 = vsub.s32 %v2227, %v2229
        %v2231 = vrot.slane %v2217, %v2230
        %v2232 = vcombine.low %v2136, %v2200
        %v2233 = vcombine.high %v2136, %v2200
        %v2235 = vunpack.c.l.s4 1983009808
        %v2236 = vunpack.c.0.s8 %v2235
        %v2237 = vlaneseq
        %v2238 = vshrl.u32 %v2237, 7
        %v2239 = vsub.s32 %v2236, %v2238
        %v2240 = vrot.slane %v2232, %v2239
        %v2242 = vunpack.c.l.s4 1983009808
        %v2243 = vunpack.c.0.s8 %v2242
        %v2244 = vlaneseq
        %v2245 = vshrl.u32 %v2244, 7
        %v2246 = vsub.s32 %v2243, %v2245
        %v2247 = vrot.slane %v2233, %v2246
        %v2248 = vcombine.low %v2224, %v2240
        %v2249 = vcombine.high %v2224, %v2240
        %v2251 = vunpack.c.l.s4 1934713408
        %v2252 = vunpack.c.0.s8 %v2251
        %v2253 = vlaneseq
        %v2254 = vshrl.u32 %v2253, 7
        %v2255 = vsub.s32 %v2252, %v2254
        %v2256 = vrot.slane %v2248, %v2255
        %v2258 = vunpack.c.l.s4 1934713408
        %v2259 = vunpack.c.0.s8 %v2258
        %v2260 = vlaneseq
        %v2261 = vshrl.u32 %v2260, 7
        %v2262 = vsub.s32 %v2259, %v2261
        %v2263 = vrot.slane %v2249, %v2262
        %v2264 = vcombine.low %v2231, %v2247
        %v2265 = vcombine.high %v2231, %v2247
        %v2267 = vunpack.c.l.s4 1934713408
        %v2268 = vunpack.c.0.s8 %v2267
        %v2269 = vlaneseq
        %v2270 = vshrl.u32 %v2269, 7
        %v2271 = vsub.s32 %v2268, %v2270
        %v2272 = vrot.slane %v2264, %v2271
        %v2274 = vunpack.c.l.s4 1934713408
        %v2275 = vunpack.c.0.s8 %v2274
        %v2276 = vlaneseq
        %v2277 = vshrl.u32 %v2276, 7
        %v2278 = vsub.s32 %v2275, %v2277
        %v2279 = vrot.slane %v2265, %v2278
        %v2280 = vcombine.high %v2256, 0.0
        %v2281 = vcombine.high %v2263, 0.0
        %v2282 = vcombine.high %v2272, 0.0
        %v2283 = vcombine.high %v2279, 0.0
        %v2284 = vcombine.low %v2256, %v2263
        %v2286 = vunpack.c.l.s4 1983009808
        %v2287 = vunpack.c.0.s8 %v2286
        %v2288 = vlaneseq
        %v2289 = vshrl.u32 %v2288, 7
        %v2290 = vsub.s32 %v2287, %v2289
        %v2291 = vrot.slane %v2284, %v2290
        %v2292 = vcombine.low %v2280, %v2281
        %v2294 = vunpack.c.l.s4 1983009808
        %v2295 = vunpack.c.0.s8 %v2294
        %v2296 = vlaneseq
        %v2297 = vshrl.u32 %v2296, 7
        %v2298 = vsub.s32 %v2295, %v2297
        %v2299 = vrot.slane %v2292, %v2298
        %v2300 = vcombine.low %v2272, %v2279
        %v2302 = vunpack.c.l.s4 1983009808
        %v2303 = vunpack.c.0.s8 %v2302
        %v2304 = vlaneseq
        %v2305 = vshrl.u32 %v2304, 7
        %v2306 = vsub.s32 %v2303, %v2305
        %v2307 = vrot.slane %v2300, %v2306
        %v2308 = vcombine.low %v2282, %v2283
        %v2310 = vunpack.c.l.s4 1983009808
        %v2311 = vunpack.c.0.s8 %v2310
        %v2312 = vlaneseq
        %v2313 = vshrl.u32 %v2312, 7
        %v2314 = vsub.s32 %v2311, %v2313
        %v2315 = vrot.slane %v2308, %v2314
        %v2316 = vcombine.low %v2291, %v2299
        %v2317 = vcombine.high %v2291, %v2299
        %v2319 = vunpack.c.l.s4 1934713408
        %v2320 = vunpack.c.0.s8 %v2319
        %v2321 = vlaneseq
        %v2322 = vshrl.u32 %v2321, 7
        %v2323 = vsub.s32 %v2320, %v2322
        %v2324 = vrot.slane %v2316, %v2323
        %v2326 = vunpack.c.l.s4 1934713408
        %v2327 = vunpack.c.0.s8 %v2326
        %v2328 = vlaneseq
        %v2329 = vshrl.u32 %v2328, 7
        %v2330 = vsub.s32 %v2327, %v2329
        %v2331 = vrot.slane %v2317, %v2330
        %v2332 = vcombine.low %v2307, %v2315
        %v2333 = vcombine.high %v2307, %v2315
        %v2335 = vunpack.c.l.s4 1934713408
        %v2336 = vunpack.c.0.s8 %v2335
        %v2337 = vlaneseq
        %v2338 = vshrl.u32 %v2337, 7
        %v2339 = vsub.s32 %v2336, %v2338
        %v2340 = vrot.slane %v2332, %v2339
        %v2342 = vunpack.c.l.s4 1934713408
        %v2343 = vunpack.c.0.s8 %v2342
        %v2344 = vlaneseq
        %v2345 = vshrl.u32 %v2344, 7
        %v2346 = vsub.s32 %v2343, %v2345
        %v2347 = vrot.slane %v2333, %v2346
        %v2348 = vcombine.low %v2324, %v2340
        %v2349 = vcombine.high %v2324, %v2340
        %v2350 = vcombine.low %v2331, %v2347
        %v2351 = vcombine.high %v2331, %v2347
        %2353 = vrot.lane.b32.xlu0 %v2349, 8
        %v2354 = vpop.permute.xlu0 %2353
        %2357 = vrot.lane.b32.xlu0 %v2350, 16
        %v2358 = vpop.permute.xlu0 %2357
        %2361 = vrot.lane.b32.xlu0 %v2351, 24
        %v2362 = vpop.permute.xlu0 %2361
        %v2364 = vsel %vm1244, %v2348, %v2354
        %vm2365 = vcmask 130048
        %v2366 = vsel %vm2365, %v2364, %v2358
        %vm2367 = vcmask 195584
        %v2368 = vsel %vm2367, %v2366, %v2362
        %v2369 = vpack.c.bf16 %v2368, %v2368
        %v2370 = vld [vmem:[%s4] sm:$0xf]
        %v2371 = vld [vmem:[%s4 + $0x4] sm:$0xf]
        %v2372 = vld [vmem:[%s4 + $0x8] sm:$0xf]
        %v2373 = vld [vmem:[%s4 + $0xc] sm:$0xf]
        %v2374 = vld [vmem:[%s5] sm:$0x1]
        %v2376 = vlaneseq
        %v2377 = vshrl.u32 %v2376, 7
        %v2378 = vsub.s32 0, %v2377
        %v2379 = vrot.slane %v2374, %v2378
        %v2385 = vunpack.c.l.b16 %v2370
        %v2386 = vunpack.c.l.b16 %v2371
        %v2387 = vunpack.c.l.b16 %v2372
        %v2388 = vunpack.c.l.b16 %v2373
        %v2389 = vpack.c.b16 %v2386, %v2385
        %v2390 = vpack.c.b16 %v2388, %v2387
        %v2394 = vsel %vm413, %v2369, 0
        %2396 = vmatprep.subr.bf16.mxu0 0
        %2397 = vmatpush1.bf16.msra.mxu0 %v2389
        %2398 = vmatprep.subr.bf16.mxu0 0
        %2399 = vmatpush1.bf16.msra.mxu0 %v2390
        %2400 = vmatprep.subr.bf16.mxu0 0
        %2401 = vmatpush1.bf16.msra.mxu0 0
        %2402 = vmatprep.subr.bf16.mxu0 0
        %2403 = vmatpush1.bf16.msra.mxu0 0
        %2404 = vmatprep.subr.bf16.mxu0 0
        %2405 = vmatpush1.bf16.msra.mxu0 0
        %2406 = vmatprep.subr.bf16.mxu0 0
        %2407 = vmatpush1.bf16.msra.mxu0 0
        %2408 = vmatprep.subr.bf16.mxu0 0
        %2409 = vmatpush1.bf16.msra.mxu0 0
        %2410 = vmatprep.subr.bf16.mxu0 0
        %2411 = vmatpush1.bf16.msra.mxu0 0
        %2412 = vmatprep.subr.bf16.mxu0 0
        %2413 = vmatpush1.bf16.msra.mxu0 0
        %2414 = vmatprep.subr.bf16.mxu0 0
        %2415 = vmatpush1.bf16.msra.mxu0 0
        %2416 = vmatprep.subr.bf16.mxu0 0
        %2417 = vmatpush1.bf16.msra.mxu0 0
        %2418 = vmatprep.subr.bf16.mxu0 0
        %2419 = vmatpush1.bf16.msra.mxu0 0
        %2420 = vmatprep.subr.bf16.mxu0 0
        %2421 = vmatpush1.bf16.msra.mxu0 0
        %2422 = vmatprep.subr.bf16.mxu0 0
        %2423 = vmatpush1.bf16.msra.mxu0 0
        %2424 = vmatprep.subr.bf16.mxu0 0
        %2425 = vmatpush1.bf16.msra.mxu0 0
        %2426 = vmatprep.subr.bf16.mxu0 0
        %2427 = vmatpush1.bf16.msra.mxu0 0
        %2428 = vmatprep.mubr.bf16.mxu0 0
        %2429 = vmatmul.mubr.bf16.gmra.mrb[0].mxu0 %v2394
        %v2430 = vpop.f32.mrb[0].mxu0
        %v2431 = vadd.f32 %v2379, %v2430
        %v2432 = vpop.f32.mrb[0].mxu0
        %v2433 = vpop.f32.mrb[0].mxu0
        %v2434 = vpop.f32.mrb[0].mxu0
        %2435 = vdwg.mxu0
        %v2436 = vadd.f32 %v2431, %v410
        %v2437 = vld [vmem:[%s6] sm:$0x1]
        %v2438 = vld [vmem:[%s7] sm:$0x1]
        %v2439 = vsel %vm413, %v2436, 0.0
        %2440 = vadd.xlane.f32.xlu0 %v2439
        %v2441 = vpop.xlane.xlu0 %2440
        %v2442 = vmul.f32 %v2441, %v417
        %v2443 = vsub.f32 %v2436, %v2442
        %v2444 = vmul.f32 %v2443, %v2443
        %v2445 = vsel %vm413, %v2444, 0.0
        %2446 = vadd.xlane.f32.xlu0 %v2445
        %v2447 = vpop.xlane.xlu0 %2446
        %v2448 = vmul.f32 %v2447, %v417
        %v2449 = vadd.f32 %v2448, 1e-05
        %v2450 = vrsqrt.pop %v2449
        %v2451 = vmul.f32 %v2443, %v2450
        %v2453 = vlaneseq
        %v2454 = vshrl.u32 %v2453, 7
        %v2455 = vsub.s32 0, %v2454
        %v2456 = vrot.slane %v2437, %v2455
        %v2458 = vmul.f32 %v2451, %v2456
        %v2460 = vlaneseq
        %v2461 = vshrl.u32 %v2460, 7
        %v2462 = vsub.s32 0, %v2461
        %v2463 = vrot.slane %v2438, %v2462
        %v2465 = vadd.f32 %v2458, %v2463
        %v2466 = vpack.c.bf16 %v2465, %v2465
        %v2467 = vld [vmem:[%s8] sm:$0xf]
        %v2468 = vld [vmem:[%s8 + $0x4] sm:$0xf]
        %v2469 = vld [vmem:[%s8 + $0x8] sm:$0xf]
        %v2470 = vld [vmem:[%s8 + $0xc] sm:$0xf]
        %v2471 = vld [vmem:[%s9] sm:$0x1]
        %v2473 = vlaneseq
        %v2474 = vshrl.u32 %v2473, 7
        %v2475 = vsub.s32 0, %v2474
        %v2476 = vrot.slane %v2471, %v2475
        %v2482 = vunpack.c.l.b16 %v2467
        %v2483 = vunpack.c.l.b16 %v2468
        %v2484 = vunpack.c.l.b16 %v2469
        %v2485 = vunpack.c.l.b16 %v2470
        %v2486 = vpack.c.b16 %v2483, %v2482
        %v2487 = vpack.c.b16 %v2485, %v2484
        %v2491 = vsel %vm413, %v2466, 0
        %2493 = vmatprep.subr.bf16.mxu0 0
        %2494 = vmatpush1.bf16.msra.mxu0 %v2486
        %2495 = vmatprep.subr.bf16.mxu0 0
        %2496 = vmatpush1.bf16.msra.mxu0 %v2487
        %2497 = vmatprep.subr.bf16.mxu0 0
        %2498 = vmatpush1.bf16.msra.mxu0 0
        %2499 = vmatprep.subr.bf16.mxu0 0
        %2500 = vmatpush1.bf16.msra.mxu0 0
        %2501 = vmatprep.subr.bf16.mxu0 0
        %2502 = vmatpush1.bf16.msra.mxu0 0
        %2503 = vmatprep.subr.bf16.mxu0 0
        %2504 = vmatpush1.bf16.msra.mxu0 0
        %2505 = vmatprep.subr.bf16.mxu0 0
        %2506 = vmatpush1.bf16.msra.mxu0 0
        %2507 = vmatprep.subr.bf16.mxu0 0
        %2508 = vmatpush1.bf16.msra.mxu0 0
        %2509 = vmatprep.subr.bf16.mxu0 0
        %2510 = vmatpush1.bf16.msra.mxu0 0
        %2511 = vmatprep.subr.bf16.mxu0 0
        %2512 = vmatpush1.bf16.msra.mxu0 0
        %2513 = vmatprep.subr.bf16.mxu0 0
        %2514 = vmatpush1.bf16.msra.mxu0 0
        %2515 = vmatprep.subr.bf16.mxu0 0
        %2516 = vmatpush1.bf16.msra.mxu0 0
        %2517 = vmatprep.subr.bf16.mxu0 0
        %2518 = vmatpush1.bf16.msra.mxu0 0
        %2519 = vmatprep.subr.bf16.mxu0 0
        %2520 = vmatpush1.bf16.msra.mxu0 0
        %2521 = vmatprep.subr.bf16.mxu0 0
        %2522 = vmatpush1.bf16.msra.mxu0 0
        %2523 = vmatprep.subr.bf16.mxu0 0
        %2524 = vmatpush1.bf16.msra.mxu0 0
        %2525 = vmatprep.mubr.bf16.mxu0 0
        %2526 = vmatmul.mubr.bf16.gmra.mrb[0].mxu0 %v2491
        %v2527 = vpop.f32.mrb[0].mxu0
        %v2528 = vadd.f32 %v2476, %v2527
        %v2529 = vpop.f32.mrb[0].mxu0
        %v2530 = vpop.f32.mrb[0].mxu0
        %v2531 = vpop.f32.mrb[0].mxu0
        %2532 = vdwg.mxu0
        %v2533 = vmul.f32 %v2528, 0.5
        %v2534 = vmul.f32 %v2528, 0.70710677
        %v2535 = verf.f32.pop %v2534
        %v2536 = vadd.f32 %v2535, 1.0
        %v2537 = vmul.f32 %v2533, %v2536
        %v2538 = vpack.c.bf16 %v2537, %v2537
        %v2539 = vld [vmem:[%s10] sm:$0xf]
        %v2540 = vld [vmem:[%s10 + $0x4] sm:$0xf]
        %v2541 = vld [vmem:[%s10 + $0x8] sm:$0xf]
        %v2542 = vld [vmem:[%s10 + $0xc] sm:$0xf]
        %v2543 = vld [vmem:[%s10 + $0x10] sm:$0xf]
        %v2544 = vld [vmem:[%s10 + $0x14] sm:$0xf]
        %v2545 = vld [vmem:[%s10 + $0x18] sm:$0xf]
        %v2546 = vld [vmem:[%s10 + $0x1c] sm:$0xf]
        %v2547 = vld [vmem:[%s11] sm:$0x1]
        %v2549 = vlaneseq
        %v2550 = vshrl.u32 %v2549, 7
        %v2551 = vsub.s32 0, %v2550
        %v2552 = vrot.slane %v2547, %v2551
        %v2562 = vunpack.c.l.b16 %v2539
        %v2563 = vunpack.c.l.b16 %v2540
        %v2564 = vunpack.c.l.b16 %v2541
        %v2565 = vunpack.c.l.b16 %v2542
        %v2566 = vunpack.c.l.b16 %v2543
        %v2567 = vunpack.c.l.b16 %v2544
        %v2568 = vunpack.c.l.b16 %v2545
        %v2569 = vunpack.c.l.b16 %v2546
        %v2570 = vpack.c.b16 %v2563, %v2562
        %v2571 = vpack.c.b16 %v2565, %v2564
        %v2572 = vpack.c.b16 %v2567, %v2566
        %v2573 = vpack.c.b16 %v2569, %v2568
        %vm2578 = vcmask 523264
        %v2580 = vsel %vm2578, %v2538, 0
        %2582 = vmatprep.subr.bf16.mxu0 0
        %2583 = vmatpush1.bf16.msra.mxu0 %v2570
        %2584 = vmatprep.subr.bf16.mxu0 0
        %2585 = vmatpush1.bf16.msra.mxu0 %v2571
        %2586 = vmatprep.subr.bf16.mxu0 0
        %2587 = vmatpush1.bf16.msra.mxu0 %v2572
        %2588 = vmatprep.subr.bf16.mxu0 0
        %2589 = vmatpush1.bf16.msra.mxu0 %v2573
        %2590 = vmatprep.subr.bf16.mxu0 0
        %2591 = vmatpush1.bf16.msra.mxu0 0
        %2592 = vmatprep.subr.bf16.mxu0 0
        %2593 = vmatpush1.bf16.msra.mxu0 0
        %2594 = vmatprep.subr.bf16.mxu0 0
        %2595 = vmatpush1.bf16.msra.mxu0 0
        %2596 = vmatprep.subr.bf16.mxu0 0
        %2597 = vmatpush1.bf16.msra.mxu0 0
        %2598 = vmatprep.subr.bf16.mxu0 0
        %2599 = vmatpush1.bf16.msra.mxu0 0
        %2600 = vmatprep.subr.bf16.mxu0 0
        %2601 = vmatpush1.bf16.msra.mxu0 0
        %2602 = vmatprep.subr.bf16.mxu0 0
        %2603 = vmatpush1.bf16.msra.mxu0 0
        %2604 = vmatprep.subr.bf16.mxu0 0
        %2605 = vmatpush1.bf16.msra.mxu0 0
        %2606 = vmatprep.subr.bf16.mxu0 0
        %2607 = vmatpush1.bf16.msra.mxu0 0
        %2608 = vmatprep.subr.bf16.mxu0 0
        %2609 = vmatpush1.bf16.msra.mxu0 0
        %2610 = vmatprep.subr.bf16.mxu0 0
        %2611 = vmatpush1.bf16.msra.mxu0 0
        %2612 = vmatprep.subr.bf16.mxu0 0
        %2613 = vmatpush1.bf16.msra.mxu0 0
        %2614 = vmatprep.mubr.bf16.mxu0 0
        %2615 = vmatmul.mubr.bf16.gmra.mrb[0].mxu0 %v2580
        %v2616 = vpop.f32.mrb[0].mxu0
        %v2617 = vadd.f32 %v2552, %v2616
        %v2618 = vpop.f32.mrb[0].mxu0
        %v2619 = vpop.f32.mrb[0].mxu0
        %v2620 = vpop.f32.mrb[0].mxu0
        %2621 = vdwg.mxu0
        %v2622 = vadd.f32 %v2617, %v2436
        %2623 = vst.msk [vmem:[%s404] sm:$0xff] %vm413, %v2622
        %s2624 = sand.u32 %s291, 1
        %s2625 = scalar_lea.sflag [#allocation3], %s2624
        %s2626 = sand.u32 %s291, 1
        %s2627 = smul.addr %s2626, 8
        %s2628 = scalar_lea.vmem [#allocation2], %s2627
        // Predicated region
        $region69: #{transformer_forward.3} parent=67 // pred_check
          %p2629 = pneg %p301
        $region70: #{transformer_forward.3} parent=67 // pred_check_branch
          %2631 = sbr.rel (%p2629) target = $region72
        $region71: #{transformer_forward.3} parent=67 // pred_region
          %s2633 = ssub.s32 128, 128
          %2634 = vsyncadd %s2625, %s2633
          %s2635 = smul.addr %s26, 128
          %s2636 = scalar_lea.hbm %s12, %s2635
          %s2638 = sshll.u32 %s2628, 4
          %s2639 = int_to_ptr.vmem [resolvable:$true] %s2638
          %2641 = dma.vmem_to_hbm [thread:$0]  %s2639, 128, %s2636, %s2625
        $region72: #{transformer_forward.3} parent=67 // pred_fallthru
          _
      $region68: #{transformer_forward.3} parent=5 // pred_fallthru
        _
      %p2642 = scmp.le.s32.totalorder 2, %s21
      // Predicated region
      $region73: #{transformer_forward.3} parent=5 // pred_check
        %p2643 = pneg %p2642
      $region74: #{transformer_forward.3} parent=5 // pred_check_branch
        %2645 = sbr.rel (%p2643) target = $region76
      $region75: #{transformer_forward.3} parent=5 // pred_region
        %s2646 = ssub.s32 %s21, 2
        // Predicated region
        $region77: #{transformer_forward.3} parent=75 // pred_check
          %p2647 = pneg %p307
        $region78: #{transformer_forward.3} parent=75 // pred_check_branch
          %2649 = sbr.rel (%p2647) target = $region80
        $region79: #{transformer_forward.3} parent=75 // pred_region
          %s2650 = sand.u32 %s292, 1
          %s2651 = scalar_lea.sflag [#allocation3], %s2650
          %s2652 = sand.u32 %s292, 1
          %s2653 = smul.addr %s2652, 8
          %s2654 = scalar_lea.vmem [#allocation2], %s2653
          %2655 = dma.done %s2651, 128
        $region80: #{transformer_forward.3} parent=75 // pred_fallthru
          _
      $region76: #{transformer_forward.3} parent=5 // pred_fallthru
        _
    $region6: #{transformer_forward.3} parent=1 // loop_footer
      %s25 = sadd.s32 1, %s21
    $region7: #{transformer_forward.3} parent=1 // loop_footer_branch
      %20 = sbr.rel target = $region3
    $region8: #{transformer_forward.3} parent=1 // loop_exit
      _
    %2656 = vsyncpa [#allocation3], 1
    %s2657 = scalar_lea.sflag [#allocation3], 1
    %2658 = vsyncpa %s2657, 1

// kernel: transformer_forward.2
$region0: #{transformer_forward.2}
  #allocation0 [shape = 'u32[]', space=smem, size = 0x4, offset = 0x4, fixed_abs, tag = 'smem constant byte address 0x4 - core index']
  #allocation1 [shape = 'u32[144,128]{1,0:T(1,128)}', space=vmem, size = 0x12000, scoped, tag = 'internal scratch']
  %s0 = inlined_call_operand.vmem [shape: f32[2,8,32], index: 0, kind: input, shape index: {}]
  %s1 = inlined_call_operand.vmem [shape: f32[1,32], index: 1, kind: input, shape index: {}]
  %s2 = inlined_call_operand.vmem [shape: f32[1,32], index: 2, kind: input, shape index: {}]
  %s3 = inlined_call_operand.vmem [shape: bf16[32,96], index: 3, kind: input, shape index: {}]
  %s4 = inlined_call_operand.vmem [shape: bf16[32,32], index: 4, kind: input, shape index: {}]
  %s5 = inlined_call_operand.hbm [shape: f32[1,32], index: 5, kind: input, shape index: {}]
  %s6 = inlined_call_operand.hbm [shape: f32[1,32], index: 6, kind: input, shape index: {}]
  %s7 = inlined_call_operand.hbm [shape: f32[1,32], index: 7, kind: input, shape index: {}]
  %s8 = inlined_call_operand.vmem [shape: bf16[32,64], index: 8, kind: input, shape index: {}]
  %s9 = inlined_call_operand.hbm [shape: f32[1,64], index: 9, kind: input, shape index: {}]
  %s10 = inlined_call_operand.vmem [shape: bf16[64,32], index: 10, kind: input, shape index: {}]
  %s11 = inlined_call_operand.hbm [shape: f32[1,32], index: 11, kind: input, shape index: {}]
  %s12 = inlined_call_operand.vmem [shape: f32[2,8,32], index: 12, kind: output, shape index: {}]
  %s13 = sld [smem:[#allocation0]]
  $region101: #{transformer_forward.2} parent=0
    _
  %s15 = ssub.s32 1, %s13
  %s16 = scalar_select 0, %s15, %s13
  $region1: #{transformer_forward.2} parent=0
    #allocation2 [shape = 'u8[512]{0}', space=vmem, size = 0x400, scoped, tag = 'input window, operand 5, single buffered']
    #allocation3 [shape = 's32[2]{0}', space=sflag, size = 0x8, scoped, tag = 'scoped memory for transformer_forward.2']
    #allocation4 [shape = 'u8[512]{0}', space=vmem, size = 0x400, scoped, tag = 'input window, operand 6, single buffered']
    #allocation5 [shape = 's32[1]{0}', space=sflag, size = 0x4, scoped, tag = 'scoped memory for transformer_forward.2']
    #allocation6 [shape = 'u8[512]{0}', space=vmem, size = 0x400, scoped, tag = 'input window, operand 7, single buffered']
    #allocation7 [shape = 'u8[512]{0}', space=vmem, size = 0x400, scoped, tag = 'input window, operand 9, single buffered']
    #allocation8 [shape = 's32[1]{0}', space=sflag, size = 0x4, scoped, tag = 'scoped memory for transformer_forward.2']
    #allocation9 [shape = 'u8[512]{0}', space=vmem, size = 0x400, scoped, tag = 'input window, operand 11, single buffered']
    %17 = vsyncpa [#allocation3], 0
    %18 = vsyncpa [#allocation5], 0
    %19 = vsyncpa [#allocation8], 0
    loop: start=0, step=1, limit=4
    $region2: #{transformer_forward.2} parent=1 // loop_pre_header
      _
    $region3: #{transformer_forward.2} parent=1 // loop_header
      %s21 = sphi 0, %s25
      %p22 = scmp.ge.s32.totalorder %s21, 4
      %s31 = sphi 0, %s33
      %s34 = sphi 0, %s31
      %s35 = sphi 0, %s34
      %s51 = sphi 0, %s35
      %s55 = sphi 0, %s55
      %s57 = sphi 0, %s55
      %s58 = sphi 0, %s57
      %s72 = sphi 0, %s58
      %s76 = sphi 0, %s76
      %s78 = sphi 0, %s76
      %s79 = sphi 0, %s78
      %s93 = sphi 0, %s79
      %s97 = sphi 0, %s97
      %s99 = sphi 0, %s97
      %s100 = sphi 0, %s99
      %s114 = sphi 0, %s100
      %s118 = sphi 0, %s118
      %s120 = sphi 0, %s118
      %s121 = sphi 0, %s120
      %s135 = sphi 0, %s121
      %s139 = sphi 0, %s139
      %s141 = sphi 0, %s139
      %s142 = sphi 0, %s141
      %s156 = sphi 0, %s142
      %s160 = sphi 0, %s160
      %s162 = sphi 0, %s160
      %s163 = sphi 0, %s162
      %s177 = sphi 0, %s163
      %s181 = sphi 0, %s181
      %s183 = sphi 0, %s181
      %s184 = sphi 0, %s183
      %s198 = sphi 0, %s184
      %s202 = sphi 0, %s202
      %s204 = sphi 0, %s202
      %s205 = sphi 0, %s204
      %s219 = sphi 0, %s205
      %s223 = sphi 0, %s223
      %s225 = sphi 0, %s223
      %s226 = sphi 0, %s225
      %s240 = sphi 0, %s226
      %s244 = sphi 0, %s244
      %s246 = sphi 0, %s244
      %s247 = sphi 0, %s246
      %s261 = sphi 0, %s247
      %s265 = sphi 0, %s265
      %s267 = sphi 0, %s265
      %s268 = sphi 0, %s267
      %s282 = sphi 0, %s268
      %s288 = sphi 0, %s290
      %s291 = sphi 0, %s288
      %s292 = sphi 0, %s291
      %s308 = sphi 0, %s292
    $region4: #{transformer_forward.2} parent=1 // loop_header_branch
      %24 = sbr.rel (%p22) target = $region8
    $region5: #{transformer_forward.2} parent=1 // loop_body
      %s26 = ssub.s32 %s21, 1
      %s27 = ssub.s32 %s21, 2
      %s28 = sadd.s32 %s21, 1
      %s29 = ssub.s32 %s21, %s28
      %p30 = scmp.eq.s32.totalorder %s29, 0
      %s32 = sadd.s32 %s31, 1
      %s33 = scalar_select %p30, %s31, %s32
      %p36 = pneg %p30
      %p37 = scmp.eq.s32.totalorder %s21, 1
      %p38 = por %p36, %p37
      %p39 = scmp.ne.s32.totalorder %s31, %s34
      %p40 = scmp.eq.s32.totalorder %s21, 0
      %p41 = por %p39, %p40
      %p42 = scmp.ne.s32.totalorder %s31, %s34
      %p43 = scmp.eq.s32.totalorder %s26, 1
      %p44 = por %p42, %p43
      %p45 = scmp.ne.s32.totalorder %s34, %s35
      %p46 = scmp.eq.s32.totalorder %s26, 0
      %p47 = por %p45, %p46
      %p48 = scmp.ne.s32.totalorder %s34, %s35
      %p49 = scmp.eq.s32.totalorder %s27, 1
      %p50 = por %p48, %p49
      %p52 = scmp.ne.s32.totalorder %s35, %s51
      %p53 = scmp.eq.s32.totalorder %s27, 0
      %p54 = por %p52, %p53
      %s56 = sadd.s32 %s55, 1
      %p59 = scmp.eq.s32.totalorder %s21, 1
      %p60 = scmp.ne.s32.totalorder %s55, %s57
      %p61 = scmp.eq.s32.totalorder %s21, 0
      %p62 = por %p60, %p61
      %p63 = scmp.ne.s32.totalorder %s55, %s57
      %p64 = scmp.eq.s32.totalorder %s26, 1
      %p65 = por %p63, %p64
      %p66 = scmp.ne.s32.totalorder %s57, %s58
      %p67 = scmp.eq.s32.totalorder %s26, 0
      %p68 = por %p66, %p67
      %p69 = scmp.ne.s32.totalorder %s57, %s58
      %p70 = scmp.eq.s32.totalorder %s27, 1
      %p71 = por %p69, %p70
      %p73 = scmp.ne.s32.totalorder %s58, %s72
      %p74 = scmp.eq.s32.totalorder %s27, 0
      %p75 = por %p73, %p74
      %s77 = sadd.s32 %s76, 1
      %p80 = scmp.eq.s32.totalorder %s21, 1
      %p81 = scmp.ne.s32.totalorder %s76, %s78
      %p82 = scmp.eq.s32.totalorder %s21, 0
      %p83 = por %p81, %p82
      %p84 = scmp.ne.s32.totalorder %s76, %s78
      %p85 = scmp.eq.s32.totalorder %s26, 1
      %p86 = por %p84, %p85
      %p87 = scmp.ne.s32.totalorder %s78, %s79
      %p88 = scmp.eq.s32.totalorder %s26, 0
      %p89 = por %p87, %p88
      %p90 = scmp.ne.s32.totalorder %s78, %s79
      %p91 = scmp.eq.s32.totalorder %s27, 1
      %p92 = por %p90, %p91
      %p94 = scmp.ne.s32.totalorder %s79, %s93
      %p95 = scmp.eq.s32.totalorder %s27, 0
      %p96 = por %p94, %p95
      %s98 = sadd.s32 %s97, 1
      %p101 = scmp.eq.s32.totalorder %s21, 1
      %p102 = scmp.ne.s32.totalorder %s97, %s99
      %p103 = scmp.eq.s32.totalorder %s21, 0
      %p104 = por %p102, %p103
      %p105 = scmp.ne.s32.totalorder %s97, %s99
      %p106 = scmp.eq.s32.totalorder %s26, 1
      %p107 = por %p105, %p106
      %p108 = scmp.ne.s32.totalorder %s99, %s100
      %p109 = scmp.eq.s32.totalorder %s26, 0
      %p110 = por %p108, %p109
      %p111 = scmp.ne.s32.totalorder %s99, %s100
      %p112 = scmp.eq.s32.totalorder %s27, 1
      %p113 = por %p111, %p112
      %p115 = scmp.ne.s32.totalorder %s100, %s114
      %p116 = scmp.eq.s32.totalorder %s27, 0
      %p117 = por %p115, %p116
      %s119 = sadd.s32 %s118, 1
      %p122 = scmp.eq.s32.totalorder %s21, 1
      %p123 = scmp.ne.s32.totalorder %s118, %s120
      %p124 = scmp.eq.s32.totalorder %s21, 0
      %p125 = por %p123, %p124
      %p126 = scmp.ne.s32.totalorder %s118, %s120
      %p127 = scmp.eq.s32.totalorder %s26, 1
      %p128 = por %p126, %p127
      %p129 = scmp.ne.s32.totalorder %s120, %s121
      %p130 = scmp.eq.s32.totalorder %s26, 0
      %p131 = por %p129, %p130
      %p132 = scmp.ne.s32.totalorder %s120, %s121
      %p133 = scmp.eq.s32.totalorder %s27, 1
      %p134 = por %p132, %p133
      %p136 = scmp.ne.s32.totalorder %s121, %s135
      %p137 = scmp.eq.s32.totalorder %s27, 0
      %p138 = por %p136, %p137
      %s140 = sadd.s32 %s139, 1
      %p143 = scmp.eq.s32.totalorder %s21, 1
      %p144 = scmp.ne.s32.totalorder %s139, %s141
      %p145 = scmp.eq.s32.totalorder %s21, 0
      %p146 = por %p144, %p145
      %p147 = scmp.ne.s32.totalorder %s139, %s141
      %p148 = scmp.eq.s32.totalorder %s26, 1
      %p149 = por %p147, %p148
      %p150 = scmp.ne.s32.totalorder %s141, %s142
      %p151 = scmp.eq.s32.totalorder %s26, 0
      %p152 = por %p150, %p151
      %p153 = scmp.ne.s32.totalorder %s141, %s142
      %p154 = scmp.eq.s32.totalorder %s27, 1
      %p155 = por %p153, %p154
      %p157 = scmp.ne.s32.totalorder %s142, %s156
      %p158 = scmp.eq.s32.totalorder %s27, 0
      %p159 = por %p157, %p158
      %s161 = sadd.s32 %s160, 1
      %p164 = scmp.eq.s32.totalorder %s21, 1
      %p165 = scmp.ne.s32.totalorder %s160, %s162
      %p166 = scmp.eq.s32.totalorder %s21, 0
      %p167 = por %p165, %p166
      %p168 = scmp.ne.s32.totalorder %s160, %s162
      %p169 = scmp.eq.s32.totalorder %s26, 1
      %p170 = por %p168, %p169
      %p171 = scmp.ne.s32.totalorder %s162, %s163
      %p172 = scmp.eq.s32.totalorder %s26, 0
      %p173 = por %p171, %p172
      %p174 = scmp.ne.s32.totalorder %s162, %s163
      %p175 = scmp.eq.s32.totalorder %s27, 1
      %p176 = por %p174, %p175
      %p178 = scmp.ne.s32.totalorder %s163, %s177
      %p179 = scmp.eq.s32.totalorder %s27, 0
      %p180 = por %p178, %p179
      %s182 = sadd.s32 %s181, 1
      %p185 = scmp.eq.s32.totalorder %s21, 1
      %p186 = scmp.ne.s32.totalorder %s181, %s183
      %p187 = scmp.eq.s32.totalorder %s21, 0
      %p188 = por %p186, %p187
      %p189 = scmp.ne.s32.totalorder %s181, %s183
      %p190 = scmp.eq.s32.totalorder %s26, 1
      %p191 = por %p189, %p190
      %p192 = scmp.ne.s32.totalorder %s183, %s184
      %p193 = scmp.eq.s32.totalorder %s26, 0
      %p194 = por %p192, %p193
      %p195 = scmp.ne.s32.totalorder %s183, %s184
      %p196 = scmp.eq.s32.totalorder %s27, 1
      %p197 = por %p195, %p196
      %p199 = scmp.ne.s32.totalorder %s184, %s198
      %p200 = scmp.eq.s32.totalorder %s27, 0
      %p201 = por %p199, %p200
      %s203 = sadd.s32 %s202, 1
      %p206 = scmp.eq.s32.totalorder %s21, 1
      %p207 = scmp.ne.s32.totalorder %s202, %s204
      %p208 = scmp.eq.s32.totalorder %s21, 0
      %p209 = por %p207, %p208
      %p210 = scmp.ne.s32.totalorder %s202, %s204
      %p211 = scmp.eq.s32.totalorder %s26, 1
      %p212 = por %p210, %p211
      %p213 = scmp.ne.s32.totalorder %s204, %s205
      %p214 = scmp.eq.s32.totalorder %s26, 0
      %p215 = por %p213, %p214
      %p216 = scmp.ne.s32.totalorder %s204, %s205
      %p217 = scmp.eq.s32.totalorder %s27, 1
      %p218 = por %p216, %p217
      %p220 = scmp.ne.s32.totalorder %s205, %s219
      %p221 = scmp.eq.s32.totalorder %s27, 0
      %p222 = por %p220, %p221
      %s224 = sadd.s32 %s223, 1
      %p227 = scmp.eq.s32.totalorder %s21, 1
      %p228 = scmp.ne.s32.totalorder %s223, %s225
      %p229 = scmp.eq.s32.totalorder %s21, 0
      %p230 = por %p228, %p229
      %p231 = scmp.ne.s32.totalorder %s223, %s225
      %p232 = scmp.eq.s32.totalorder %s26, 1
      %p233 = por %p231, %p232
      %p234 = scmp.ne.s32.totalorder %s225, %s226
      %p235 = scmp.eq.s32.totalorder %s26, 0
      %p236 = por %p234, %p235
      %p237 = scmp.ne.s32.totalorder %s225, %s226
      %p238 = scmp.eq.s32.totalorder %s27, 1
      %p239 = por %p237, %p238
      %p241 = scmp.ne.s32.totalorder %s226, %s240
      %p242 = scmp.eq.s32.totalorder %s27, 0
      %p243 = por %p241, %p242
      %s245 = sadd.s32 %s244, 1
      %p248 = scmp.eq.s32.totalorder %s21, 1
      %p249 = scmp.ne.s32.totalorder %s244, %s246
      %p250 = scmp.eq.s32.totalorder %s21, 0
      %p251 = por %p249, %p250
      %p252 = scmp.ne.s32.totalorder %s244, %s246
      %p253 = scmp.eq.s32.totalorder %s26, 1
      %p254 = por %p252, %p253
      %p255 = scmp.ne.s32.totalorder %s246, %s247
      %p256 = scmp.eq.s32.totalorder %s26, 0
      %p257 = por %p255, %p256
      %p258 = scmp.ne.s32.totalorder %s246, %s247
      %p259 = scmp.eq.s32.totalorder %s27, 1
      %p260 = por %p258, %p259
      %p262 = scmp.ne.s32.totalorder %s247, %s261
      %p263 = scmp.eq.s32.totalorder %s27, 0
      %p264 = por %p262, %p263
      %s266 = sadd.s32 %s265, 1
      %p269 = scmp.eq.s32.totalorder %s21, 1
      %p270 = scmp.ne.s32.totalorder %s265, %s267
      %p271 = scmp.eq.s32.totalorder %s21, 0
      %p272 = por %p270, %p271
      %p273 = scmp.ne.s32.totalorder %s265, %s267
      %p274 = scmp.eq.s32.totalorder %s26, 1
      %p275 = por %p273, %p274
      %p276 = scmp.ne.s32.totalorder %s267, %s268
      %p277 = scmp.eq.s32.totalorder %s26, 0
      %p278 = por %p276, %p277
      %p279 = scmp.ne.s32.totalorder %s267, %s268
      %p280 = scmp.eq.s32.totalorder %s27, 1
      %p281 = por %p279, %p280
      %p283 = scmp.ne.s32.totalorder %s268, %s282
      %p284 = scmp.eq.s32.totalorder %s27, 0
      %p285 = por %p283, %p284
      %s286 = ssub.s32 %s21, %s28
      %p287 = scmp.eq.s32.totalorder %s286, 0
      %s289 = sadd.s32 %s288, 1
      %s290 = scalar_select %p287, %s288, %s289
      %p293 = pneg %p287
      %p294 = scmp.eq.s32.totalorder %s21, 1
      %p295 = por %p293, %p294
      %p296 = scmp.ne.s32.totalorder %s288, %s291
      %p297 = scmp.eq.s32.totalorder %s21, 0
      %p298 = por %p296, %p297
      %p299 = scmp.ne.s32.totalorder %s288, %s291
      %p300 = scmp.eq.s32.totalorder %s26, 1
      %p301 = por %p299, %p300
      %p302 = scmp.ne.s32.totalorder %s291, %s292
      %p303 = scmp.eq.s32.totalorder %s26, 0
      %p304 = por %p302, %p303
      %p305 = scmp.ne.s32.totalorder %s291, %s292
      %p306 = scmp.eq.s32.totalorder %s27, 1
      %p307 = por %p305, %p306
      %p309 = scmp.ne.s32.totalorder %s292, %s308
      %p310 = scmp.eq.s32.totalorder %s27, 0
      %p311 = por %p309, %p310
      %p312 = scmp.le.s32.totalorder 1, %s21
      %p313 = scmp.lt.s32.totalorder %s21, 3
      %p314 = pnand %p312, %p313
      %p315 = pneg %p314
      // Predicated region
      $region9: #{transformer_forward.2} parent=5 // pred_check
        _
      $region10: #{transformer_forward.2} parent=5 // pred_check_branch
        %317 = sbr.rel (%p314) target = $region12
      $region11: #{transformer_forward.2} parent=5 // pred_region
        %s318 = ssub.s32 %s21, 1
        // Predicated region
        $region13: #{transformer_forward.2} parent=11 // pred_check
          %p319 = pneg %p68
        $region14: #{transformer_forward.2} parent=11 // pred_check_branch
          %321 = sbr.rel (%p319) target = $region16
        $region15: #{transformer_forward.2} parent=11 // pred_region
          _
        $region16: #{transformer_forward.2} parent=11 // pred_fallthru
          _
        // Predicated region
        $region17: #{transformer_forward.2} parent=11 // pred_check
          %p322 = pneg %p89
        $region18: #{transformer_forward.2} parent=11 // pred_check_branch
          %324 = sbr.rel (%p322) target = $region20
        $region19: #{transformer_forward.2} parent=11 // pred_region
          _
        $region20: #{transformer_forward.2} parent=11 // pred_fallthru
          _
        // Predicated region
        $region21: #{transformer_forward.2} parent=11 // pred_check
          %p325 = pneg %p110
        $region22: #{transformer_forward.2} parent=11 // pred_check_branch
          %327 = sbr.rel (%p325) target = $region24
        $region23: #{transformer_forward.2} parent=11 // pred_region
          _
        $region24: #{transformer_forward.2} parent=11 // pred_fallthru
          _
        // Predicated region
        $region25: #{transformer_forward.2} parent=11 // pred_check
          %p328 = pneg %p131
        $region26: #{transformer_forward.2} parent=11 // pred_check_branch
          %330 = sbr.rel (%p328) target = $region28
        $region27: #{transformer_forward.2} parent=11 // pred_region
          _
        $region28: #{transformer_forward.2} parent=11 // pred_fallthru
          _
        // Predicated region
        $region29: #{transformer_forward.2} parent=11 // pred_check
          %p331 = pneg %p152
        $region30: #{transformer_forward.2} parent=11 // pred_check_branch
          %333 = sbr.rel (%p331) target = $region32
        $region31: #{transformer_forward.2} parent=11 // pred_region
          %s335 = ssub.s32 16, 16
          %336 = vsyncadd [#allocation3], %s335
          %s338 = sshll.u32 [#allocation2], 4
          %s339 = int_to_ptr.vmem [resolvable:$true] %s338
          %341 = dma.hbm_to_vmem [thread:$0]  %s5, 16, %s339, [#allocation3]
        $region32: #{transformer_forward.2} parent=11 // pred_fallthru
          _
        // Predicated region
        $region33: #{transformer_forward.2} parent=11 // pred_check
          %p342 = pneg %p173
        $region34: #{transformer_forward.2} parent=11 // pred_check_branch
          %344 = sbr.rel (%p342) target = $region36
        $region35: #{transformer_forward.2} parent=11 // pred_region
          %s346 = ssub.s32 16, 16
          %347 = vsyncadd [#allocation5], %s346
          %s349 = sshll.u32 [#allocation4], 4
          %s350 = int_to_ptr.vmem [resolvable:$true] %s349
          %352 = dma.hbm_to_vmem [thread:$0]  %s6, 16, %s350, [#allocation5]
        $region36: #{transformer_forward.2} parent=11 // pred_fallthru
          _
        // Predicated region
        $region37: #{transformer_forward.2} parent=11 // pred_check
          %p353 = pneg %p194
        $region38: #{transformer_forward.2} parent=11 // pred_check_branch
          %355 = sbr.rel (%p353) target = $region40
        $region39: #{transformer_forward.2} parent=11 // pred_region
          %s357 = ssub.s32 16, 16
          %358 = vsyncadd [#allocation5], %s357
          %s360 = sshll.u32 [#allocation6], 4
          %s361 = int_to_ptr.vmem [resolvable:$true] %s360
          %363 = dma.hbm_to_vmem [thread:$0]  %s7, 16, %s361, [#allocation5]
        $region40: #{transformer_forward.2} parent=11 // pred_fallthru
          _
        // Predicated region
        $region41: #{transformer_forward.2} parent=11 // pred_check
          %p364 = pneg %p215
        $region42: #{transformer_forward.2} parent=11 // pred_check_branch
          %366 = sbr.rel (%p364) target = $region44
        $region43: #{transformer_forward.2} parent=11 // pred_region
          _
        $region44: #{transformer_forward.2} parent=11 // pred_fallthru
          _
        // Predicated region
        $region45: #{transformer_forward.2} parent=11 // pred_check
          %p367 = pneg %p236
        $region46: #{transformer_forward.2} parent=11 // pred_check_branch
          %369 = sbr.rel (%p367) target = $region48
        $region47: #{transformer_forward.2} parent=11 // pred_region
          %s371 = ssub.s32 16, 16
          %372 = vsyncadd [#allocation8], %s371
          %s374 = sshll.u32 [#allocation7], 4
          %s375 = int_to_ptr.vmem [resolvable:$true] %s374
          %377 = dma.hbm_to_vmem [thread:$0]  %s9, 16, %s375, [#allocation8]
        $region48: #{transformer_forward.2} parent=11 // pred_fallthru
          _
        // Predicated region
        $region49: #{transformer_forward.2} parent=11 // pred_check
          %p378 = pneg %p257
        $region50: #{transformer_forward.2} parent=11 // pred_check_branch
          %380 = sbr.rel (%p378) target = $region52
        $region51: #{transformer_forward.2} parent=11 // pred_region
          _
        $region52: #{transformer_forward.2} parent=11 // pred_fallthru
          _
        // Predicated region
        $region53: #{transformer_forward.2} parent=11 // pred_check
          %p381 = pneg %p278
        $region54: #{transformer_forward.2} parent=11 // pred_check_branch
          %383 = sbr.rel (%p381) target = $region56
        $region55: #{transformer_forward.2} parent=11 // pred_region
          %s385 = ssub.s32 16, 16
          %386 = vsyncadd [#allocation8], %s385
          %s388 = sshll.u32 [#allocation9], 4
          %s389 = int_to_ptr.vmem [resolvable:$true] %s388
          %391 = dma.hbm_to_vmem [thread:$0]  %s11, 16, %s389, [#allocation8]
        $region56: #{transformer_forward.2} parent=11 // pred_fallthru
          _
      $region12: #{transformer_forward.2} parent=5 // pred_fallthru
        _
      %p392 = scmp.lt.s32.totalorder %s21, 2
      // Predicated region
      $region57: #{transformer_forward.2} parent=5 // pred_check
        %p393 = pneg %p392
      $region58: #{transformer_forward.2} parent=5 // pred_check_branch
        %395 = sbr.rel (%p393) target = $region60
      $region59: #{transformer_forward.2} parent=5 // pred_region
        // Predicated region
        $region61: #{transformer_forward.2} parent=59 // pred_check
          %p396 = pneg %p41
        $region62: #{transformer_forward.2} parent=59 // pred_check_branch
          %398 = sbr.rel (%p396) target = $region64
        $region63: #{transformer_forward.2} parent=59 // pred_region
          %p399 = scmp.lt.s32.totalorder %s21, 1
          %s400 = scalar_select %p399, %s21, 1
          %s401 = smul.addr %s400, 8
          %s402 = scalar_lea.vmem %s0, %s401
        $region64: #{transformer_forward.2} parent=59 // pred_fallthru
          _
      $region60: #{transformer_forward.2} parent=5 // pred_fallthru
        _
      %p403 = scmp.le.s32.totalorder 1, %s21
      %p404 = scmp.lt.s32.totalorder %s21, 3
      %p405 = pnand %p403, %p404
      %p406 = pneg %p405
      // Predicated region
      $region65: #{transformer_forward.2} parent=5 // pred_check
        _
      $region66: #{transformer_forward.2} parent=5 // pred_check_branch
        %408 = sbr.rel (%p405) target = $region68
      $region67: #{transformer_forward.2} parent=5 // pred_region
        %s409 = ssub.s32 %s21, 1
        // Predicated region
        $region69: #{transformer_forward.2} parent=67 // pred_check
          %p410 = pneg %p152
        $region70: #{transformer_forward.2} parent=67 // pred_check_branch
          %412 = sbr.rel (%p410) target = $region72
        $region71: #{transformer_forward.2} parent=67 // pred_region
          %413 = dma.done [#allocation3], 16
        $region72: #{transformer_forward.2} parent=67 // pred_fallthru
          _
        // Predicated region
        $region73: #{transformer_forward.2} parent=67 // pred_check
          %p414 = pneg %p173
        $region74: #{transformer_forward.2} parent=67 // pred_check_branch
          %416 = sbr.rel (%p414) target = $region76
        $region75: #{transformer_forward.2} parent=67 // pred_region
          %417 = dma.done [#allocation5], 16
        $region76: #{transformer_forward.2} parent=67 // pred_fallthru
          _
        // Predicated region
        $region77: #{transformer_forward.2} parent=67 // pred_check
          %p418 = pneg %p194
        $region78: #{transformer_forward.2} parent=67 // pred_check_branch
          %420 = sbr.rel (%p418) target = $region80
        $region79: #{transformer_forward.2} parent=67 // pred_region
          %421 = dma.done [#allocation5], 16
        $region80: #{transformer_forward.2} parent=67 // pred_fallthru
          _
        // Predicated region
        $region81: #{transformer_forward.2} parent=67 // pred_check
          %p422 = pneg %p236
        $region82: #{transformer_forward.2} parent=67 // pred_check_branch
          %424 = sbr.rel (%p422) target = $region84
        $region83: #{transformer_forward.2} parent=67 // pred_region
          %425 = dma.done [#allocation8], 16
        $region84: #{transformer_forward.2} parent=67 // pred_fallthru
          _
        // Predicated region
        $region85: #{transformer_forward.2} parent=67 // pred_check
          %p426 = pneg %p278
        $region86: #{transformer_forward.2} parent=67 // pred_check_branch
          %428 = sbr.rel (%p426) target = $region88
        $region87: #{transformer_forward.2} parent=67 // pred_region
          %429 = dma.done [#allocation8], 16
        $region88: #{transformer_forward.2} parent=67 // pred_fallthru
          _
        %p430 = scmp.lt.s32.totalorder %s26, 1
        %s431 = scalar_select %p430, %s26, 1
        %s432 = smul.addr %s431, 8
        %s433 = scalar_lea.vmem %s0, %s432
        %p434 = pneg %p47
        %p435 = pneg %p44
        %p436 = pneg %p68
        %p437 = pneg %p65
        %p438 = pneg %p89
        %p439 = pneg %p86
        %p440 = pneg %p110
        %p441 = pneg %p107
        %p442 = pneg %p131
        %p443 = pneg %p128
        %p444 = pneg %p152
        %p445 = pneg %p149
        %p446 = pneg %p173
        %p447 = pneg %p170
        %p448 = pneg %p194
        %p449 = pneg %p191
        %p450 = pneg %p215
        %p451 = pneg %p212
        %p452 = pneg %p236
        %p453 = pneg %p233
        %p454 = pneg %p257
        %p455 = pneg %p254
        %p456 = pneg %p278
        %p457 = pneg %p275
        %p458 = pneg %p304
        %p459 = pneg %p301
        %p460 = scmp.lt.s32.totalorder %s26, 1
        %s461 = scalar_select %p460, %s26, 1
        %s462 = smul.addr %s461, 8
        %s463 = scalar_lea.vmem %s12, %s462
        %p464 = scmp.lt.s32.totalorder %s26, 1
        %s465 = scalar_select %p464, %s26, 1
        %s466 = smul.addr %s465, 8
        %s467 = scalar_lea.vmem %s0, %s466
        %p468 = scmp.lt.s32.totalorder %s26, 1
        %s469 = scalar_select %p468, %s26, 1
        %s470 = smul.addr %s469, 8
        %s471 = scalar_lea.vmem %s12, %s470
        %v473 = vld [vmem:[%s467] sm:$0xff]
        %v474 = vld [vmem:[%s1] sm:$0x1]
        %v475 = vld [vmem:[%s2] sm:$0x1]
        %vm476 = vcmask 261120
        %v477 = vsel %vm476, %v473, 0.0
        %478 = vadd.xlane.f32.xlu0 %v477
        %v479 = vpop.xlane.xlu0 %478
        %v480 = vrcp.pop 32.0
        %v481 = vmul.f32 %v479, %v480
        %v482 = vsub.f32 %v473, %v481
        %v483 = vmul.f32 %v482, %v482
        %v484 = vsel %vm476, %v483, 0.0
        %485 = vadd.xlane.f32.xlu0 %v484
        %v486 = vpop.xlane.xlu0 %485
        %v487 = vmul.f32 %v486, %v480
        %v488 = vadd.f32 %v487, 1e-05
        %v489 = vrsqrt.pop %v488
        %v490 = vmul.f32 %v482, %v489
        %v492 = vlaneseq
        %v493 = vshrl.u32 %v492, 7
        %v494 = vsub.s32 0, %v493
        %v495 = vrot.slane %v474, %v494
        %v497 = vmul.f32 %v490, %v495
        %v499 = vlaneseq
        %v500 = vshrl.u32 %v499, 7
        %v501 = vsub.s32 0, %v500
        %v502 = vrot.slane %v475, %v501
        %v504 = vadd.f32 %v497, %v502
        %v505 = vpack.c.bf16 %v504, %v504
        %v506 = vld [vmem:[%s3] sm:$0xf]
        %v507 = vld [vmem:[%s3 + $0x4] sm:$0xf]
        %v508 = vld [vmem:[%s3 + $0x8] sm:$0xf]
        %v509 = vld [vmem:[%s3 + $0xc] sm:$0xf]
        %v514 = vunpack.c.l.b16 %v506
        %v515 = vunpack.c.l.b16 %v507
        %v516 = vunpack.c.l.b16 %v508
        %v517 = vunpack.c.l.b16 %v509
        %v518 = vpack.c.b16 %v515, %v514
        %v519 = vpack.c.b16 %v517, %v516
        %v523 = vsel %vm476, %v505, 0
        %525 = vmatprep.subr.bf16.mxu0 0
        %526 = vmatpush1.bf16.msra.mxu0 %v518
        %527 = vmatprep.subr.bf16.mxu0 0
        %528 = vmatpush1.bf16.msra.mxu0 %v519
        %529 = vmatprep.subr.bf16.mxu0 0
        %530 = vmatpush1.bf16.msra.mxu0 0
        %531 = vmatprep.subr.bf16.mxu0 0
        %532 = vmatpush1.bf16.msra.mxu0 0
        %533 = vmatprep.subr.bf16.mxu0 0
        %534 = vmatpush1.bf16.msra.mxu0 0
        %535 = vmatprep.subr.bf16.mxu0 0
        %536 = vmatpush1.bf16.msra.mxu0 0
        %537 = vmatprep.subr.bf16.mxu0 0
        %538 = vmatpush1.bf16.msra.mxu0 0
        %539 = vmatprep.subr.bf16.mxu0 0
        %540 = vmatpush1.bf16.msra.mxu0 0
        %541 = vmatprep.subr.bf16.mxu0 0
        %542 = vmatpush1.bf16.msra.mxu0 0
        %543 = vmatprep.subr.bf16.mxu0 0
        %544 = vmatpush1.bf16.msra.mxu0 0
        %545 = vmatprep.subr.bf16.mxu0 0
        %546 = vmatpush1.bf16.msra.mxu0 0
        %547 = vmatprep.subr.bf16.mxu0 0
        %548 = vmatpush1.bf16.msra.mxu0 0
        %549 = vmatprep.subr.bf16.mxu0 0
        %550 = vmatpush1.bf16.msra.mxu0 0
        %551 = vmatprep.subr.bf16.mxu0 0
        %552 = vmatpush1.bf16.msra.mxu0 0
        %553 = vmatprep.subr.bf16.mxu0 0
        %554 = vmatpush1.bf16.msra.mxu0 0
        %555 = vmatprep.subr.bf16.mxu0 0
        %556 = vmatpush1.bf16.msra.mxu0 0
        %557 = vmatprep.mubr.bf16.mxu0 0
        %558 = vmatmul.mubr.bf16.gmra.mrb[0].mxu0 %v523
        %v559 = vpop.f32.mrb[0].mxu0
        %v560 = vadd.f32 0.0, %v559
        %v561 = vpop.f32.mrb[0].mxu0
        %v562 = vpop.f32.mrb[0].mxu0
        %v563 = vpop.f32.mrb[0].mxu0
        %564 = vdwg.mxu0
        %v565 = vmul.f32 %v560, 0.35355338
        %567 = vrot.lane.b32.xlu0 %v565, 120
        %v568 = vpop.permute.xlu0 %567
        %570 = vrot.lane.b32.xlu0 %v565, 112
        %v571 = vpop.permute.xlu0 %570
        %573 = vrot.lane.b32.xlu0 %v565, 104
        %v574 = vpop.permute.xlu0 %573
        %v576 = vcombine.low %v565, %v571
        %v577 = vcombine.high %v565, %v571
        %v579 = vunpack.c.l.s4 1983009808
        %v580 = vunpack.c.0.s8 %v579
        %v581 = vlaneseq
        %v582 = vshrl.u32 %v581, 7
        %v583 = vsub.s32 %v580, %v582
        %v584 = vrot.slane %v576, %v583
        %v586 = vunpack.c.l.s4 1983009808
        %v587 = vunpack.c.0.s8 %v586
        %v588 = vlaneseq
        %v589 = vshrl.u32 %v588, 7
        %v590 = vsub.s32 %v587, %v589
        %v591 = vrot.slane %v577, %v590
        %v592 = vcombine.low %v568, %v574
        %v593 = vcombine.high %v568, %v574
        %v595 = vunpack.c.l.s4 1983009808
        %v596 = vunpack.c.0.s8 %v595
        %v597 = vlaneseq
        %v598 = vshrl.u32 %v597, 7
        %v599 = vsub.s32 %v596, %v598
        %v600 = vrot.slane %v592, %v599
        %v602 = vunpack.c.l.s4 1983009808
        %v603 = vunpack.c.0.s8 %v602
        %v604 = vlaneseq
        %v605 = vshrl.u32 %v604, 7
        %v606 = vsub.s32 %v603, %v605
        %v607 = vrot.slane %v593, %v606
        %v608 = vcombine.low %v584, %v600
        %v609 = vcombine.high %v584, %v600
        %v611 = vunpack.c.l.s4 1934713408
        %v612 = vunpack.c.0.s8 %v611
        %v613 = vlaneseq
        %v614 = vshrl.u32 %v613, 7
        %v615 = vsub.s32 %v612, %v614
        %v616 = vrot.slane %v608, %v615
        %v618 = vunpack.c.l.s4 1934713408
        %v619 = vunpack.c.0.s8 %v618
        %v620 = vlaneseq
        %v621 = vshrl.u32 %v620, 7
        %v622 = vsub.s32 %v619, %v621
        %v623 = vrot.slane %v609, %v622
        %v624 = vcombine.low %v591, %v607
        %v625 = vcombine.high %v591, %v607
        %v627 = vunpack.c.l.s4 1934713408
        %v628 = vunpack.c.0.s8 %v627
        %v629 = vlaneseq
        %v630 = vshrl.u32 %v629, 7
        %v631 = vsub.s32 %v628, %v630
        %v632 = vrot.slane %v624, %v631
        %v634 = vunpack.c.l.s4 1934713408
        %v635 = vunpack.c.0.s8 %v634
        %v636 = vlaneseq
        %v637 = vshrl.u32 %v636, 7
        %v638 = vsub.s32 %v635, %v637
        %v639 = vrot.slane %v625, %v638
        %v640 = vcombine.high %v616, 0.0
        %v641 = vcombine.high %v623, 0.0
        %v642 = vcombine.high %v632, 0.0
        %v643 = vcombine.high %v639, 0.0
        %645 = vrot.lane.b32.xlu0 %v560, 120
        %v646 = vpop.permute.xlu0 %645
        %647 = vrot.lane.b32.xlu0 %v560, 112
        %v648 = vpop.permute.xlu0 %647
        %649 = vrot.lane.b32.xlu0 %v560, 104
        %v650 = vpop.permute.xlu0 %649
        %651 = vrot.lane.b32.xlu0 %v560, 96
        %v652 = vpop.permute.xlu0 %651
        %653 = vrot.lane.b32.xlu0 %v646, 96
        %v654 = vpop.permute.xlu0 %653
        %655 = vrot.lane.b32.xlu0 %v648, 96
        %v656 = vpop.permute.xlu0 %655
        %657 = vrot.lane.b32.xlu0 %v650, 96
        %v658 = vpop.permute.xlu0 %657
        %v663 = vcombine.low %v652, %v656
        %v664 = vcombine.high %v652, %v656
        %v666 = vunpack.c.l.s4 1983009808
        %v667 = vunpack.c.0.s8 %v666
        %v668 = vlaneseq
        %v669 = vshrl.u32 %v668, 7
        %v670 = vsub.s32 %v667, %v669
        %v671 = vrot.slane %v663, %v670
        %v673 = vunpack.c.l.s4 1983009808
        %v674 = vunpack.c.0.s8 %v673
        %v675 = vlaneseq
        %v676 = vshrl.u32 %v675, 7
        %v677 = vsub.s32 %v674, %v676
        %v678 = vrot.slane %v664, %v677
        %v679 = vcombine.low %v654, %v658
        %v680 = vcombine.high %v654, %v658
        %v682 = vunpack.c.l.s4 1983009808
        %v683 = vunpack.c.0.s8 %v682
        %v684 = vlaneseq
        %v685 = vshrl.u32 %v684, 7
        %v686 = vsub.s32 %v683, %v685
        %v687 = vrot.slane %v679, %v686
        %v689 = vunpack.c.l.s4 1983009808
        %v690 = vunpack.c.0.s8 %v689
        %v691 = vlaneseq
        %v692 = vshrl.u32 %v691, 7
        %v693 = vsub.s32 %v690, %v692
        %v694 = vrot.slane %v680, %v693
        %v695 = vcombine.low %v671, %v687
        %v696 = vcombine.high %v671, %v687
        %v698 = vunpack.c.l.s4 1934713408
        %v699 = vunpack.c.0.s8 %v698
        %v700 = vlaneseq
        %v701 = vshrl.u32 %v700, 7
        %v702 = vsub.s32 %v699, %v701
        %v703 = vrot.slane %v695, %v702
        %v705 = vunpack.c.l.s4 1934713408
        %v706 = vunpack.c.0.s8 %v705
        %v707 = vlaneseq
        %v708 = vshrl.u32 %v707, 7
        %v709 = vsub.s32 %v706, %v708
        %v710 = vrot.slane %v696, %v709
        %v711 = vcombine.low %v678, %v694
        %v712 = vcombine.high %v678, %v694
        %v714 = vunpack.c.l.s4 1934713408
        %v715 = vunpack.c.0.s8 %v714
        %v716 = vlaneseq
        %v717 = vshrl.u32 %v716, 7
        %v718 = vsub.s32 %v715, %v717
        %v719 = vrot.slane %v711, %v718
        %v721 = vunpack.c.l.s4 1934713408
        %v722 = vunpack.c.0.s8 %v721
        %v723 = vlaneseq
        %v724 = vshrl.u32 %v723, 7
        %v725 = vsub.s32 %v722, %v724
        %v726 = vrot.slane %v712, %v725
        %v727 = vcombine.high %v703, 0.0
        %v728 = vcombine.high %v710, 0.0
        %v729 = vcombine.high %v719, 0.0
        %v730 = vcombine.high %v726, 0.0
        %731 = vrot.lane.b32.xlu0 %v560, 64
        %v732 = vpop.permute.xlu0 %731
        %733 = vrot.lane.b32.xlu0 %v646, 64
        %v734 = vpop.permute.xlu0 %733
        %735 = vrot.lane.b32.xlu0 %v648, 64
        %v736 = vpop.permute.xlu0 %735
        %737 = vrot.lane.b32.xlu0 %v650, 64
        %v738 = vpop.permute.xlu0 %737
        %v743 = vcombine.low %v732, %v736
        %v744 = vcombine.high %v732, %v736
        %v746 = vunpack.c.l.s4 1983009808
        %v747 = vunpack.c.0.s8 %v746
        %v748 = vlaneseq
        %v749 = vshrl.u32 %v748, 7
        %v750 = vsub.s32 %v747, %v749
        %v751 = vrot.slane %v743, %v750
        %v753 = vunpack.c.l.s4 1983009808
        %v754 = vunpack.c.0.s8 %v753
        %v755 = vlaneseq
        %v756 = vshrl.u32 %v755, 7
        %v757 = vsub.s32 %v754, %v756
        %v758 = vrot.slane %v744, %v757
        %v759 = vcombine.low %v734, %v738
        %v760 = vcombine.high %v734, %v738
        %v762 = vunpack.c.l.s4 1983009808
        %v763 = vunpack.c.0.s8 %v762
        %v764 = vlaneseq
        %v765 = vshrl.u32 %v764, 7
        %v766 = vsub.s32 %v763, %v765
        %v767 = vrot.slane %v759, %v766
        %v769 = vunpack.c.l.s4 1983009808
        %v770 = vunpack.c.0.s8 %v769
        %v771 = vlaneseq
        %v772 = vshrl.u32 %v771, 7
        %v773 = vsub.s32 %v770, %v772
        %v774 = vrot.slane %v760, %v773
        %v775 = vcombine.low %v751, %v767
        %v776 = vcombine.high %v751, %v767
        %v778 = vunpack.c.l.s4 1934713408
        %v779 = vunpack.c.0.s8 %v778
        %v780 = vlaneseq
        %v781 = vshrl.u32 %v780, 7
        %v782 = vsub.s32 %v779, %v781
        %v783 = vrot.slane %v775, %v782
        %v785 = vunpack.c.l.s4 1934713408
        %v786 = vunpack.c.0.s8 %v785
        %v787 = vlaneseq
        %v788 = vshrl.u32 %v787, 7
        %v789 = vsub.s32 %v786, %v788
        %v790 = vrot.slane %v776, %v789
        %v791 = vcombine.low %v758, %v774
        %v792 = vcombine.high %v758, %v774
        %v794 = vunpack.c.l.s4 1934713408
        %v795 = vunpack.c.0.s8 %v794
        %v796 = vlaneseq
        %v797 = vshrl.u32 %v796, 7
        %v798 = vsub.s32 %v795, %v797
        %v799 = vrot.slane %v791, %v798
        %v801 = vunpack.c.l.s4 1934713408
        %v802 = vunpack.c.0.s8 %v801
        %v803 = vlaneseq
        %v804 = vshrl.u32 %v803, 7
        %v805 = vsub.s32 %v802, %v804
        %v806 = vrot.slane %v792, %v805
        %v807 = vcombine.high %v783, 0.0
        %v808 = vcombine.high %v790, 0.0
        %v809 = vcombine.high %v799, 0.0
        %v810 = vcombine.high %v806, 0.0
        %v811 = vpack.c.bf16 %v616, %v616
        %v812 = vpack.c.bf16 %v640, %v640
        %v813 = vpack.c.bf16 %v623, %v623
        %v814 = vpack.c.bf16 %v641, %v641
        %v815 = vpack.c.bf16 %v632, %v632
        %v816 = vpack.c.bf16 %v642, %v642
        %v817 = vpack.c.bf16 %v639, %v639
        %v818 = vpack.c.bf16 %v643, %v643
        %v819 = vpack.c.bf16 %v703, %v703
        %v820 = vpack.c.bf16 %v727, %v727
        %v821 = vpack.c.bf16 %v710, %v710
        %v822 = vpack.c.bf16 %v728, %v728
        %v823 = vpack.c.bf16 %v719, %v719
        %v824 = vpack.c.bf16 %v729, %v729
        %v825 = vpack.c.bf16 %v726, %v726
        %v826 = vpack.c.bf16 %v730, %v730
        %v827 = vcombine.low %v811, %v815
        %v829 = vunpack.c.l.s4 1983009808
        %v830 = vunpack.c.0.s8 %v829
        %v831 = vlaneseq
        %v832 = vshrl.u32 %v831, 7
        %v833 = vsub.s32 %v830, %v832
        %v834 = vrot.slane %v827, %v833
        %v835 = vcombine.low %v813, %v817
        %v837 = vunpack.c.l.s4 1983009808
        %v838 = vunpack.c.0.s8 %v837
        %v839 = vlaneseq
        %v840 = vshrl.u32 %v839, 7
        %v841 = vsub.s32 %v838, %v840
        %v842 = vrot.slane %v835, %v841
        %v843 = vcombine.low %v834, %v842
        %v845 = vunpack.c.l.s4 1934713408
        %v846 = vunpack.c.0.s8 %v845
        %v847 = vlaneseq
        %v848 = vshrl.u32 %v847, 7
        %v849 = vsub.s32 %v846, %v848
        %v850 = vrot.slane %v843, %v849
        %v851 = vcombine.high %v850, 0
        %v852 = vcombine.low %v812, %v816
        %v854 = vunpack.c.l.s4 1983009808
        %v855 = vunpack.c.0.s8 %v854
        %v856 = vlaneseq
        %v857 = vshrl.u32 %v856, 7
        %v858 = vsub.s32 %v855, %v857
        %v859 = vrot.slane %v852, %v858
        %v860 = vcombine.low %v814, %v818
        %v862 = vunpack.c.l.s4 1983009808
        %v863 = vunpack.c.0.s8 %v862
        %v864 = vlaneseq
        %v865 = vshrl.u32 %v864, 7
        %v866 = vsub.s32 %v863, %v865
        %v867 = vrot.slane %v860, %v866
        %v868 = vcombine.low %v859, %v867
        %v870 = vunpack.c.l.s4 1934713408
        %v871 = vunpack.c.0.s8 %v870
        %v872 = vlaneseq
        %v873 = vshrl.u32 %v872, 7
        %v874 = vsub.s32 %v871, %v873
        %v875 = vrot.slane %v868, %v874
        %v876 = vcombine.high %v875, 0
        %v879 = vpack.i.b16 %v875, %v850
        %v880 = vshrl.u32 %v850, 16
        %v881 = vshrl.u32 %v875, 16
        %v882 = vpack.i.b16 %v881, %v880
        %v885 = vpack.i.b16 %v876, %v851
        %v886 = vshrl.u32 %v851, 16
        %v887 = vshrl.u32 %v876, 16
        %v888 = vpack.i.b16 %v887, %v886
        %889 = vxpose.xlu0.c.b16.start [1/8] %v819, 128
        %890 = vxpose.xlu0.c.b16.cont [2/8] 0, 128
        %891 = vxpose.xlu0.c.b16.cont [3/8] 0, 128
        %892 = vxpose.xlu0.c.b16.cont [4/8] 0, 128
        %893 = vxpose.xlu0.c.b16.cont [5/8] 0, 128
        %894 = vxpose.xlu0.c.b16.cont [6/8] 0, 128
        %895 = vxpose.xlu0.c.b16.cont [7/8] 0, 128
        %896 = vxpose.xlu0.c.b16.end [8/8] 0, 128
        %v897 = vpop.trf.xlu0
        %v898 = vpop.trf.xlu0
        %v899 = vpop.trf.xlu0
        %v900 = vpop.trf.xlu0
        %v901 = vpop.trf.xlu0
        %v902 = vpop.trf.xlu0
        %v903 = vpop.trf.xlu0
        %v904 = vpop.trf.xlu0
        %905 = vxpose.xlu0.c.b16.start [1/8] %v820, 128
        %906 = vxpose.xlu0.c.b16.cont [2/8] 0, 128
        %907 = vxpose.xlu0.c.b16.cont [3/8] 0, 128
        %908 = vxpose.xlu0.c.b16.cont [4/8] 0, 128
        %909 = vxpose.xlu0.c.b16.cont [5/8] 0, 128
        %910 = vxpose.xlu0.c.b16.cont [6/8] 0, 128
        %911 = vxpose.xlu0.c.b16.cont [7/8] 0, 128
        %912 = vxpose.xlu0.c.b16.end [8/8] 0, 128
        %v913 = vpop.trf.xlu0
        %v914 = vpop.trf.xlu0
        %v915 = vpop.trf.xlu0
        %v916 = vpop.trf.xlu0
        %v917 = vpop.trf.xlu0
        %v918 = vpop.trf.xlu0
        %v919 = vpop.trf.xlu0
        %v920 = vpop.trf.xlu0
        %921 = vxpose.xlu0.c.b16.start [1/8] %v821, 128
        %922 = vxpose.xlu0.c.b16.cont [2/8] 0, 128
        %923 = vxpose.xlu0.c.b16.cont [3/8] 0, 128
        %924 = vxpose.xlu0.c.b16.cont [4/8] 0, 128
        %925 = vxpose.xlu0.c.b16.cont [5/8] 0, 128
        %926 = vxpose.xlu0.c.b16.cont [6/8] 0, 128
        %927 = vxpose.xlu0.c.b16.cont [7/8] 0, 128
        %928 = vxpose.xlu0.c.b16.end [8/8] 0, 128
        %v929 = vpop.trf.xlu0
        %v930 = vpop.trf.xlu0
        %v931 = vpop.trf.xlu0
        %v932 = vpop.trf.xlu0
        %v933 = vpop.trf.xlu0
        %v934 = vpop.trf.xlu0
        %v935 = vpop.trf.xlu0
        %v936 = vpop.trf.xlu0
        %937 = vxpose.xlu0.c.b16.start [1/8] %v822, 128
        %938 = vxpose.xlu0.c.b16.cont [2/8] 0, 128
        %939 = vxpose.xlu0.c.b16.cont [3/8] 0, 128
        %940 = vxpose.xlu0.c.b16.cont [4/8] 0, 128
        %941 = vxpose.xlu0.c.b16.cont [5/8] 0, 128
        %942 = vxpose.xlu0.c.b16.cont [6/8] 0, 128
        %943 = vxpose.xlu0.c.b16.cont [7/8] 0, 128
        %944 = vxpose.xlu0.c.b16.end [8/8] 0, 128
        %v945 = vpop.trf.xlu0
        %v946 = vpop.trf.xlu0
        %v947 = vpop.trf.xlu0
        %v948 = vpop.trf.xlu0
        %v949 = vpop.trf.xlu0
        %v950 = vpop.trf.xlu0
        %v951 = vpop.trf.xlu0
        %v952 = vpop.trf.xlu0
        %953 = vxpose.xlu0.c.b16.start [1/8] %v823, 128
        %954 = vxpose.xlu0.c.b16.cont [2/8] 0, 128
        %955 = vxpose.xlu0.c.b16.cont [3/8] 0, 128
        %956 = vxpose.xlu0.c.b16.cont [4/8] 0, 128
        %957 = vxpose.xlu0.c.b16.cont [5/8] 0, 128
        %958 = vxpose.xlu0.c.b16.cont [6/8] 0, 128
        %959 = vxpose.xlu0.c.b16.cont [7/8] 0, 128
        %960 = vxpose.xlu0.c.b16.end [8/8] 0, 128
        %v961 = vpop.trf.xlu0
        %v962 = vpop.trf.xlu0
        %v963 = vpop.trf.xlu0
        %v964 = vpop.trf.xlu0
        %v965 = vpop.trf.xlu0
        %v966 = vpop.trf.xlu0
        %v967 = vpop.trf.xlu0
        %v968 = vpop.trf.xlu0
        %969 = vxpose.xlu0.c.b16.start [1/8] %v824, 128
        %970 = vxpose.xlu0.c.b16.cont [2/8] 0, 128
        %971 = vxpose.xlu0.c.b16.cont [3/8] 0, 128
        %972 = vxpose.xlu0.c.b16.cont [4/8] 0, 128
        %973 = vxpose.xlu0.c.b16.cont [5/8] 0, 128
        %974 = vxpose.xlu0.c.b16.cont [6/8] 0, 128
        %975 = vxpose.xlu0.c.b16.cont [7/8] 0, 128
        %976 = vxpose.xlu0.c.b16.end [8/8] 0, 128
        %v977 = vpop.trf.xlu0
        %v978 = vpop.trf.xlu0
        %v979 = vpop.trf.xlu0
        %v980 = vpop.trf.xlu0
        %v981 = vpop.trf.xlu0
        %v982 = vpop.trf.xlu0
        %v983 = vpop.trf.xlu0
        %v984 = vpop.trf.xlu0
        %985 = vxpose.xlu0.c.b16.start [1/8] %v825, 128
        %986 = vxpose.xlu0.c.b16.cont [2/8] 0, 128
        %987 = vxpose.xlu0.c.b16.cont [3/8] 0, 128
        %988 = vxpose.xlu0.c.b16.cont [4/8] 0, 128
        %989 = vxpose.xlu0.c.b16.cont [5/8] 0, 128
        %990 = vxpose.xlu0.c.b16.cont [6/8] 0, 128
        %991 = vxpose.xlu0.c.b16.cont [7/8] 0, 128
        %992 = vxpose.xlu0.c.b16.end [8/8] 0, 128
        %v993 = vpop.trf.xlu0
        %v994 = vpop.trf.xlu0
        %v995 = vpop.trf.xlu0
        %v996 = vpop.trf.xlu0
        %v997 = vpop.trf.xlu0
        %v998 = vpop.trf.xlu0
        %v999 = vpop.trf.xlu0
        %v1000 = vpop.trf.xlu0
        %1001 = vxpose.xlu0.c.b16.start [1/8] %v826, 128
        %1002 = vxpose.xlu0.c.b16.cont [2/8] 0, 128
        %1003 = vxpose.xlu0.c.b16.cont [3/8] 0, 128
        %1004 = vxpose.xlu0.c.b16.cont [4/8] 0, 128
        %1005 = vxpose.xlu0.c.b16.cont [5/8] 0, 128
        %1006 = vxpose.xlu0.c.b16.cont [6/8] 0, 128
        %1007 = vxpose.xlu0.c.b16.cont [7/8] 0, 128
        %1008 = vxpose.xlu0.c.b16.end [8/8] 0, 128
        %v1009 = vpop.trf.xlu0
        %v1010 = vpop.trf.xlu0
        %v1011 = vpop.trf.xlu0
        %v1012 = vpop.trf.xlu0
        %v1013 = vpop.trf.xlu0
        %v1014 = vpop.trf.xlu0
        %v1015 = vpop.trf.xlu0
        %v1016 = vpop.trf.xlu0
        %v1017 = vcombine.low %v897, %v961
        %v1019 = vunpack.c.l.s4 1983009808
        %v1020 = vunpack.c.0.s8 %v1019
        %v1021 = vlaneseq
        %v1022 = vshrl.u32 %v1021, 7
        %v1023 = vsub.s32 %v1020, %v1022
        %v1024 = vrot.slane %v1017, %v1023
        %v1025 = vcombine.low %v929, %v993
        %v1027 = vunpack.c.l.s4 1983009808
        %v1028 = vunpack.c.0.s8 %v1027
        %v1029 = vlaneseq
        %v1030 = vshrl.u32 %v1029, 7
        %v1031 = vsub.s32 %v1028, %v1030
        %v1032 = vrot.slane %v1025, %v1031
        %v1033 = vcombine.low %v1024, %v1032
        %v1034 = vcombine.high %v1024, %v1032
        %v1036 = vunpack.c.l.s4 1934713408
        %v1037 = vunpack.c.0.s8 %v1036
        %v1038 = vlaneseq
        %v1039 = vshrl.u32 %v1038, 7
        %v1040 = vsub.s32 %v1037, %v1039
        %v1041 = vrot.slane %v1033, %v1040
        %v1043 = vunpack.c.l.s4 1934713408
        %v1044 = vunpack.c.0.s8 %v1043
        %v1045 = vlaneseq
        %v1046 = vshrl.u32 %v1045, 7
        %v1047 = vsub.s32 %v1044, %v1046
        %v1048 = vrot.slane %v1034, %v1047
        %v1049 = vcombine.high %v1041, 0
        %v1050 = vcombine.high %v1048, 0
        %v1051 = vcombine.low %v913, %v977
        %v1053 = vunpack.c.l.s4 1983009808
        %v1054 = vunpack.c.0.s8 %v1053
        %v1055 = vlaneseq
        %v1056 = vshrl.u32 %v1055, 7
        %v1057 = vsub.s32 %v1054, %v1056
        %v1058 = vrot.slane %v1051, %v1057
        %v1059 = vcombine.low %v945, %v1009
        %v1061 = vunpack.c.l.s4 1983009808
        %v1062 = vunpack.c.0.s8 %v1061
        %v1063 = vlaneseq
        %v1064 = vshrl.u32 %v1063, 7
        %v1065 = vsub.s32 %v1062, %v1064
        %v1066 = vrot.slane %v1059, %v1065
        %v1067 = vcombine.low %v1058, %v1066
        %v1068 = vcombine.high %v1058, %v1066
        %v1070 = vunpack.c.l.s4 1934713408
        %v1071 = vunpack.c.0.s8 %v1070
        %v1072 = vlaneseq
        %v1073 = vshrl.u32 %v1072, 7
        %v1074 = vsub.s32 %v1071, %v1073
        %v1075 = vrot.slane %v1067, %v1074
        %v1077 = vunpack.c.l.s4 1934713408
        %v1078 = vunpack.c.0.s8 %v1077
        %v1079 = vlaneseq
        %v1080 = vshrl.u32 %v1079, 7
        %v1081 = vsub.s32 %v1078, %v1080
        %v1082 = vrot.slane %v1068, %v1081
        %v1083 = vcombine.high %v1075, 0
        %v1084 = vcombine.high %v1082, 0
        %v1087 = vpack.i.b16 %v1075, %v1041
        %v1089 = vshrl.u32 %v1041, 16
        %v1090 = vshrl.u32 %v1075, 16
        %v1091 = vpack.i.b16 %v1090, %v1089
        %v1095 = vpack.i.b16 %v1083, %v1049
        %v1097 = vshrl.u32 %v1049, 16
        %v1098 = vshrl.u32 %v1083, 16
        %v1099 = vpack.i.b16 %v1098, %v1097
        %v1103 = vpack.i.b16 %v1082, %v1048
        %v1105 = vshrl.u32 %v1048, 16
        %v1106 = vshrl.u32 %v1082, 16
        %v1107 = vpack.i.b16 %v1106, %v1105
        %v1111 = vpack.i.b16 %v1084, %v1050
        %v1113 = vshrl.u32 %v1050, 16
        %v1114 = vshrl.u32 %v1084, 16
        %v1115 = vpack.i.b16 %v1114, %v1113
        %1117 = vxpose.xlu0.c.b16.start [1/8] %v1087, 128
        %1118 = vxpose.xlu0.c.b16.cont [2/8] 0, 128
        %1119 = vxpose.xlu0.c.b16.cont [3/8] 0, 128
        %1120 = vxpose.xlu0.c.b16.cont [4/8] 0, 128
        %1121 = vxpose.xlu0.c.b16.cont [5/8] 0, 128
        %1122 = vxpose.xlu0.c.b16.cont [6/8] 0, 128
        %1123 = vxpose.xlu0.c.b16.cont [7/8] 0, 128
        %1124 = vxpose.xlu0.c.b16.end [8/8] 0, 128
        %v1125 = vpop.trf.xlu0
        %v1126 = vpop.trf.xlu0
        %v1127 = vpop.trf.xlu0
        %v1128 = vpop.trf.xlu0
        %v1129 = vpop.trf.xlu0
        %v1130 = vpop.trf.xlu0
        %v1131 = vpop.trf.xlu0
        %v1132 = vpop.trf.xlu0
        %1133 = vxpose.xlu0.c.b16.start [1/8] %v1091, 128
        %1134 = vxpose.xlu0.c.b16.cont [2/8] 0, 128
        %1135 = vxpose.xlu0.c.b16.cont [3/8] 0, 128
        %1136 = vxpose.xlu0.c.b16.cont [4/8] 0, 128
        %1137 = vxpose.xlu0.c.b16.cont [5/8] 0, 128
        %1138 = vxpose.xlu0.c.b16.cont [6/8] 0, 128
        %1139 = vxpose.xlu0.c.b16.cont [7/8] 0, 128
        %1140 = vxpose.xlu0.c.b16.end [8/8] 0, 128
        %v1141 = vpop.trf.xlu0
        %v1142 = vpop.trf.xlu0
        %v1143 = vpop.trf.xlu0
        %v1144 = vpop.trf.xlu0
        %v1145 = vpop.trf.xlu0
        %v1146 = vpop.trf.xlu0
        %v1147 = vpop.trf.xlu0
        %v1148 = vpop.trf.xlu0
        %1149 = vxpose.xlu0.c.b16.start [1/8] %v1095, 128
        %1150 = vxpose.xlu0.c.b16.cont [2/8] 0, 128
        %1151 = vxpose.xlu0.c.b16.cont [3/8] 0, 128
        %1152 = vxpose.xlu0.c.b16.cont [4/8] 0, 128
        %1153 = vxpose.xlu0.c.b16.cont [5/8] 0, 128
        %1154 = vxpose.xlu0.c.b16.cont [6/8] 0, 128
        %1155 = vxpose.xlu0.c.b16.cont [7/8] 0, 128
        %1156 = vxpose.xlu0.c.b16.end [8/8] 0, 128
        %v1157 = vpop.trf.xlu0
        %v1158 = vpop.trf.xlu0
        %v1159 = vpop.trf.xlu0
        %v1160 = vpop.trf.xlu0
        %v1161 = vpop.trf.xlu0
        %v1162 = vpop.trf.xlu0
        %v1163 = vpop.trf.xlu0
        %v1164 = vpop.trf.xlu0
        %1165 = vxpose.xlu0.c.b16.start [1/8] %v1099, 128
        %1166 = vxpose.xlu0.c.b16.cont [2/8] 0, 128
        %1167 = vxpose.xlu0.c.b16.cont [3/8] 0, 128
        %1168 = vxpose.xlu0.c.b16.cont [4/8] 0, 128
        %1169 = vxpose.xlu0.c.b16.cont [5/8] 0, 128
        %1170 = vxpose.xlu0.c.b16.cont [6/8] 0, 128
        %1171 = vxpose.xlu0.c.b16.cont [7/8] 0, 128
        %1172 = vxpose.xlu0.c.b16.end [8/8] 0, 128
        %v1173 = vpop.trf.xlu0
        %v1174 = vpop.trf.xlu0
        %v1175 = vpop.trf.xlu0
        %v1176 = vpop.trf.xlu0
        %v1177 = vpop.trf.xlu0
        %v1178 = vpop.trf.xlu0
        %v1179 = vpop.trf.xlu0
        %v1180 = vpop.trf.xlu0
        %1181 = vxpose.xlu0.c.b16.start [1/8] %v1103, 128
        %1182 = vxpose.xlu0.c.b16.cont [2/8] 0, 128
        %1183 = vxpose.xlu0.c.b16.cont [3/8] 0, 128
        %1184 = vxpose.xlu0.c.b16.cont [4/8] 0, 128
        %1185 = vxpose.xlu0.c.b16.cont [5/8] 0, 128
        %1186 = vxpose.xlu0.c.b16.cont [6/8] 0, 128
        %1187 = vxpose.xlu0.c.b16.cont [7/8] 0, 128
        %1188 = vxpose.xlu0.c.b16.end [8/8] 0, 128
        %v1189 = vpop.trf.xlu0
        %v1190 = vpop.trf.xlu0
        %v1191 = vpop.trf.xlu0
        %v1192 = vpop.trf.xlu0
        %v1193 = vpop.trf.xlu0
        %v1194 = vpop.trf.xlu0
        %v1195 = vpop.trf.xlu0
        %v1196 = vpop.trf.xlu0
        %1197 = vxpose.xlu0.c.b16.start [1/8] %v1107, 128
        %1198 = vxpose.xlu0.c.b16.cont [2/8] 0, 128
        %1199 = vxpose.xlu0.c.b16.cont [3/8] 0, 128
        %1200 = vxpose.xlu0.c.b16.cont [4/8] 0, 128
        %1201 = vxpose.xlu0.c.b16.cont [5/8] 0, 128
        %1202 = vxpose.xlu0.c.b16.cont [6/8] 0, 128
        %1203 = vxpose.xlu0.c.b16.cont [7/8] 0, 128
        %1204 = vxpose.xlu0.c.b16.end [8/8] 0, 128
        %v1205 = vpop.trf.xlu0
        %v1206 = vpop.trf.xlu0
        %v1207 = vpop.trf.xlu0
        %v1208 = vpop.trf.xlu0
        %v1209 = vpop.trf.xlu0
        %v1210 = vpop.trf.xlu0
        %v1211 = vpop.trf.xlu0
        %v1212 = vpop.trf.xlu0
        %1213 = vxpose.xlu0.c.b16.start [1/8] %v1111, 128
        %1214 = vxpose.xlu0.c.b16.cont [2/8] 0, 128
        %1215 = vxpose.xlu0.c.b16.cont [3/8] 0, 128
        %1216 = vxpose.xlu0.c.b16.cont [4/8] 0, 128
        %1217 = vxpose.xlu0.c.b16.cont [5/8] 0, 128
        %1218 = vxpose.xlu0.c.b16.cont [6/8] 0, 128
        %1219 = vxpose.xlu0.c.b16.cont [7/8] 0, 128
        %1220 = vxpose.xlu0.c.b16.end [8/8] 0, 128
        %v1221 = vpop.trf.xlu0
        %v1222 = vpop.trf.xlu0
        %v1223 = vpop.trf.xlu0
        %v1224 = vpop.trf.xlu0
        %v1225 = vpop.trf.xlu0
        %v1226 = vpop.trf.xlu0
        %v1227 = vpop.trf.xlu0
        %v1228 = vpop.trf.xlu0
        %1229 = vxpose.xlu0.c.b16.start [1/8] %v1115, 128
        %1230 = vxpose.xlu0.c.b16.cont [2/8] 0, 128
        %1231 = vxpose.xlu0.c.b16.cont [3/8] 0, 128
        %1232 = vxpose.xlu0.c.b16.cont [4/8] 0, 128
        %1233 = vxpose.xlu0.c.b16.cont [5/8] 0, 128
        %1234 = vxpose.xlu0.c.b16.cont [6/8] 0, 128
        %1235 = vxpose.xlu0.c.b16.cont [7/8] 0, 128
        %1236 = vxpose.xlu0.c.b16.end [8/8] 0, 128
        %v1237 = vpop.trf.xlu0
        %v1238 = vpop.trf.xlu0
        %v1239 = vpop.trf.xlu0
        %v1240 = vpop.trf.xlu0
        %v1241 = vpop.trf.xlu0
        %v1242 = vpop.trf.xlu0
        %v1243 = vpop.trf.xlu0
        %v1244 = vpop.trf.xlu0
        %v1245 = vcombine.low %v1125, %v1189
        %v1247 = vunpack.c.l.s4 1983009808
        %v1248 = vunpack.c.0.s8 %v1247
        %v1249 = vlaneseq
        %v1250 = vshrl.u32 %v1249, 7
        %v1251 = vsub.s32 %v1248, %v1250
        %v1252 = vrot.slane %v1245, %v1251
        %v1253 = vcombine.low %v1157, %v1221
        %v1255 = vunpack.c.l.s4 1983009808
        %v1256 = vunpack.c.0.s8 %v1255
        %v1257 = vlaneseq
        %v1258 = vshrl.u32 %v1257, 7
        %v1259 = vsub.s32 %v1256, %v1258
        %v1260 = vrot.slane %v1253, %v1259
        %v1261 = vcombine.low %v1252, %v1260
        %v1263 = vunpack.c.l.s4 1934713408
        %v1264 = vunpack.c.0.s8 %v1263
        %v1265 = vlaneseq
        %v1266 = vshrl.u32 %v1265, 7
        %v1267 = vsub.s32 %v1264, %v1266
        %v1268 = vrot.slane %v1261, %v1267
        %v1269 = vcombine.high %v1268, 0
        %v1270 = vcombine.low %v1141, %v1205
        %v1272 = vunpack.c.l.s4 1983009808
        %v1273 = vunpack.c.0.s8 %v1272
        %v1274 = vlaneseq
        %v1275 = vshrl.u32 %v1274, 7
        %v1276 = vsub.s32 %v1273, %v1275
        %v1277 = vrot.slane %v1270, %v1276
        %v1278 = vcombine.low %v1173, %v1237
        %v1280 = vunpack.c.l.s4 1983009808
        %v1281 = vunpack.c.0.s8 %v1280
        %v1282 = vlaneseq
        %v1283 = vshrl.u32 %v1282, 7
        %v1284 = vsub.s32 %v1281, %v1283
        %v1285 = vrot.slane %v1278, %v1284
        %v1286 = vcombine.low %v1277, %v1285
        %v1288 = vunpack.c.l.s4 1934713408
        %v1289 = vunpack.c.0.s8 %v1288
        %v1290 = vlaneseq
        %v1291 = vshrl.u32 %v1290, 7
        %v1292 = vsub.s32 %v1289, %v1291
        %v1293 = vrot.slane %v1286, %v1292
        %v1294 = vcombine.high %v1293, 0
        %v1297 = vpack.i.b16 %v1293, %v1268
        %v1298 = vshrl.u32 %v1268, 16
        %v1299 = vshrl.u32 %v1293, 16
        %v1300 = vpack.i.b16 %v1299, %v1298
        %v1303 = vpack.i.b16 %v1294, %v1269
        %v1304 = vshrl.u32 %v1269, 16
        %v1305 = vshrl.u32 %v1294, 16
        %v1306 = vpack.i.b16 %v1305, %v1304
        %vm1307 = vcmask 64512
        %v1309 = vsel %vm1307, %v879, 0
        %vm1311 = vcmask 1043456
        %v1313 = vsel %vm1311, %v1297, 0
        %1315 = vmatprep.subr.bf16.mxu0 0
        %1316 = vmatpush1.bf16.msra.mxu0 %v1313
        %1317 = vmatprep.subr.bf16.mxu0 0
        %1318 = vmatpush1.bf16.msra.mxu0 0
        %1319 = vmatprep.subr.bf16.mxu0 0
        %1320 = vmatpush1.bf16.msra.mxu0 0
        %1321 = vmatprep.subr.bf16.mxu0 0
        %1322 = vmatpush1.bf16.msra.mxu0 0
        %1323 = vmatprep.subr.bf16.mxu0 0
        %1324 = vmatpush1.bf16.msra.mxu0 0
        %1325 = vmatprep.subr.bf16.mxu0 0
        %1326 = vmatpush1.bf16.msra.mxu0 0
        %1327 = vmatprep.subr.bf16.mxu0 0
        %1328 = vmatpush1.bf16.msra.mxu0 0
        %1329 = vmatprep.subr.bf16.mxu0 0
        %1330 = vmatpush1.bf16.msra.mxu0 0
        %1331 = vmatprep.subr.bf16.mxu0 0
        %1332 = vmatpush1.bf16.msra.mxu0 0
        %1333 = vmatprep.subr.bf16.mxu0 0
        %1334 = vmatpush1.bf16.msra.mxu0 0
        %1335 = vmatprep.subr.bf16.mxu0 0
        %1336 = vmatpush1.bf16.msra.mxu0 0
        %1337 = vmatprep.subr.bf16.mxu0 0
        %1338 = vmatpush1.bf16.msra.mxu0 0
        %1339 = vmatprep.subr.bf16.mxu0 0
        %1340 = vmatpush1.bf16.msra.mxu0 0
        %1341 = vmatprep.subr.bf16.mxu0 0
        %1342 = vmatpush1.bf16.msra.mxu0 0
        %1343 = vmatprep.subr.bf16.mxu0 0
        %1344 = vmatpush1.bf16.msra.mxu0 0
        %1345 = vmatprep.subr.bf16.mxu0 0
        %1346 = vmatpush1.bf16.msra.mxu0 0
        %1347 = vmatprep.mubr.bf16.mxu0 0
        %1348 = vmatmul.mubr.bf16.gmra.mrb[0].mxu0 %v1309
        %v1349 = vpop.f32.mrb[0].mxu0
        %v1350 = vadd.f32 0.0, %v1349
        %v1351 = vpop.f32.mrb[0].mxu0
        %v1352 = vpop.f32.mrb[0].mxu0
        %v1353 = vpop.f32.mrb[0].mxu0
        %1354 = vdwg.mxu0
        %v1356 = vsel %vm1307, %v882, 0
        %v1359 = vsel %vm1311, %v1300, 0
        %1361 = vmatprep.subr.bf16.mxu0 0
        %1362 = vmatpush1.bf16.msra.mxu0 %v1359
        %1363 = vmatprep.subr.bf16.mxu0 0
        %1364 = vmatpush1.bf16.msra.mxu0 0
        %1365 = vmatprep.subr.bf16.mxu0 0
        %1366 = vmatpush1.bf16.msra.mxu0 0
        %1367 = vmatprep.subr.bf16.mxu0 0
        %1368 = vmatpush1.bf16.msra.mxu0 0
        %1369 = vmatprep.subr.bf16.mxu0 0
        %1370 = vmatpush1.bf16.msra.mxu0 0
        %1371 = vmatprep.subr.bf16.mxu0 0
        %1372 = vmatpush1.bf16.msra.mxu0 0
        %1373 = vmatprep.subr.bf16.mxu0 0
        %1374 = vmatpush1.bf16.msra.mxu0 0
        %1375 = vmatprep.subr.bf16.mxu0 0
        %1376 = vmatpush1.bf16.msra.mxu0 0
        %1377 = vmatprep.subr.bf16.mxu0 0
        %1378 = vmatpush1.bf16.msra.mxu0 0
        %1379 = vmatprep.subr.bf16.mxu0 0
        %1380 = vmatpush1.bf16.msra.mxu0 0
        %1381 = vmatprep.subr.bf16.mxu0 0
        %1382 = vmatpush1.bf16.msra.mxu0 0
        %1383 = vmatprep.subr.bf16.mxu0 0
        %1384 = vmatpush1.bf16.msra.mxu0 0
        %1385 = vmatprep.subr.bf16.mxu0 0
        %1386 = vmatpush1.bf16.msra.mxu0 0
        %1387 = vmatprep.subr.bf16.mxu0 0
        %1388 = vmatpush1.bf16.msra.mxu0 0
        %1389 = vmatprep.subr.bf16.mxu0 0
        %1390 = vmatpush1.bf16.msra.mxu0 0
        %1391 = vmatprep.subr.bf16.mxu0 0
        %1392 = vmatpush1.bf16.msra.mxu0 0
        %1393 = vmatprep.mubr.bf16.mxu0 0
        %1394 = vmatmul.mubr.bf16.gmra.mrb[0].mxu0 %v1356
        %v1395 = vpop.f32.mrb[0].mxu0
        %v1396 = vadd.f32 0.0, %v1395
        %v1397 = vpop.f32.mrb[0].mxu0
        %v1398 = vpop.f32.mrb[0].mxu0
        %v1399 = vpop.f32.mrb[0].mxu0
        %1400 = vdwg.mxu0
        %v1402 = vsel %vm1307, %v885, 0
        %v1405 = vsel %vm1311, %v1303, 0
        %1407 = vmatprep.subr.bf16.mxu0 0
        %1408 = vmatpush1.bf16.msra.mxu0 %v1405
        %1409 = vmatprep.subr.bf16.mxu0 0
        %1410 = vmatpush1.bf16.msra.mxu0 0
        %1411 = vmatprep.subr.bf16.mxu0 0
        %1412 = vmatpush1.bf16.msra.mxu0 0
        %1413 = vmatprep.subr.bf16.mxu0 0
        %1414 = vmatpush1.bf16.msra.mxu0 0
        %1415 = vmatprep.subr.bf16.mxu0 0
        %1416 = vmatpush1.bf16.msra.mxu0 0
        %1417 = vmatprep.subr.bf16.mxu0 0
        %1418 = vmatpush1.bf16.msra.mxu0 0
        %1419 = vmatprep.subr.bf16.mxu0 0
        %1420 = vmatpush1.bf16.msra.mxu0 0
        %1421 = vmatprep.subr.bf16.mxu0 0
        %1422 = vmatpush1.bf16.msra.mxu0 0
        %1423 = vmatprep.subr.bf16.mxu0 0
        %1424 = vmatpush1.bf16.msra.mxu0 0
        %1425 = vmatprep.subr.bf16.mxu0 0
        %1426 = vmatpush1.bf16.msra.mxu0 0
        %1427 = vmatprep.subr.bf16.mxu0 0
        %1428 = vmatpush1.bf16.msra.mxu0 0
        %1429 = vmatprep.subr.bf16.mxu0 0
        %1430 = vmatpush1.bf16.msra.mxu0 0
        %1431 = vmatprep.subr.bf16.mxu0 0
        %1432 = vmatpush1.bf16.msra.mxu0 0
        %1433 = vmatprep.subr.bf16.mxu0 0
        %1434 = vmatpush1.bf16.msra.mxu0 0
        %1435 = vmatprep.subr.bf16.mxu0 0
        %1436 = vmatpush1.bf16.msra.mxu0 0
        %1437 = vmatprep.subr.bf16.mxu0 0
        %1438 = vmatpush1.bf16.msra.mxu0 0
        %1439 = vmatprep.mubr.bf16.mxu0 0
        %1440 = vmatmul.mubr.bf16.gmra.mrb[0].mxu0 %v1402
        %v1441 = vpop.f32.mrb[0].mxu0
        %v1442 = vadd.f32 0.0, %v1441
        %v1443 = vpop.f32.mrb[0].mxu0
        %v1444 = vpop.f32.mrb[0].mxu0
        %v1445 = vpop.f32.mrb[0].mxu0
        %1446 = vdwg.mxu0
        %v1448 = vsel %vm1307, %v888, 0
        %v1451 = vsel %vm1311, %v1306, 0
        %1453 = vmatprep.subr.bf16.mxu0 0
        %1454 = vmatpush1.bf16.msra.mxu0 %v1451
        %1455 = vmatprep.subr.bf16.mxu0 0
        %1456 = vmatpush1.bf16.msra.mxu0 0
        %1457 = vmatprep.subr.bf16.mxu0 0
        %1458 = vmatpush1.bf16.msra.mxu0 0
        %1459 = vmatprep.subr.bf16.mxu0 0
        %1460 = vmatpush1.bf16.msra.mxu0 0
        %1461 = vmatprep.subr.bf16.mxu0 0
        %1462 = vmatpush1.bf16.msra.mxu0 0
        %1463 = vmatprep.subr.bf16.mxu0 0
        %1464 = vmatpush1.bf16.msra.mxu0 0
        %1465 = vmatprep.subr.bf16.mxu0 0
        %1466 = vmatpush1.bf16.msra.mxu0 0
        %1467 = vmatprep.subr.bf16.mxu0 0
        %1468 = vmatpush1.bf16.msra.mxu0 0
        %1469 = vmatprep.subr.bf16.mxu0 0
        %1470 = vmatpush1.bf16.msra.mxu0 0
        %1471 = vmatprep.subr.bf16.mxu0 0
        %1472 = vmatpush1.bf16.msra.mxu0 0
        %1473 = vmatprep.subr.bf16.mxu0 0
        %1474 = vmatpush1.bf16.msra.mxu0 0
        %1475 = vmatprep.subr.bf16.mxu0 0
        %1476 = vmatpush1.bf16.msra.mxu0 0
        %1477 = vmatprep.subr.bf16.mxu0 0
        %1478 = vmatpush1.bf16.msra.mxu0 0
        %1479 = vmatprep.subr.bf16.mxu0 0
        %1480 = vmatpush1.bf16.msra.mxu0 0
        %1481 = vmatprep.subr.bf16.mxu0 0
        %1482 = vmatpush1.bf16.msra.mxu0 0
        %1483 = vmatprep.subr.bf16.mxu0 0
        %1484 = vmatpush1.bf16.msra.mxu0 0
        %1485 = vmatprep.mubr.bf16.mxu0 0
        %1486 = vmatmul.mubr.bf16.gmra.mrb[0].mxu0 %v1448
        %v1487 = vpop.f32.mrb[0].mxu0
        %v1488 = vadd.f32 0.0, %v1487
        %v1489 = vpop.f32.mrb[0].mxu0
        %v1490 = vpop.f32.mrb[0].mxu0
        %v1491 = vpop.f32.mrb[0].mxu0
        %1492 = vdwg.mxu0
        %v1493 = vsel %vm1307, %v1350, -inf
        %1494 = vmax.xlane.f32.xlu0 %v1493
        %v1495 = vpop.xlane.xlu0 %1494
        %v1496 = vsel %vm1307, %v1396, -inf
        %1497 = vmax.xlane.f32.xlu0 %v1496
        %v1498 = vpop.xlane.xlu0 %1497
        %v1499 = vsel %vm1307, %v1442, -inf
        %1500 = vmax.xlane.f32.xlu0 %v1499
        %v1501 = vpop.xlane.xlu0 %1500
        %v1502 = vsel %vm1307, %v1488, -inf
        %1503 = vmax.xlane.f32.xlu0 %v1502
        %v1504 = vpop.xlane.xlu0 %1503
        %v1505 = vsub.f32 %v1350, %v1495
        %v1506 = vsub.f32 %v1396, %v1498
        %v1507 = vsub.f32 %v1442, %v1501
        %v1508 = vsub.f32 %v1488, %v1504
        %v1509 = vmul.f32 %v1505, 1.442695
        %v1510 = vpow.pop %v1509
        %v1511 = vmul.f32 %v1506, 1.442695
        %v1512 = vpow.pop %v1511
        %v1513 = vmul.f32 %v1507, 1.442695
        %v1514 = vpow.pop %v1513
        %v1515 = vmul.f32 %v1508, 1.442695
        %v1516 = vpow.pop %v1515
        %v1517 = vsel %vm1307, %v1510, 0.0
        %1518 = vadd.xlane.f32.xlu0 %v1517
        %v1519 = vpop.xlane.xlu0 %1518
        %v1520 = vsel %vm1307, %v1512, 0.0
        %1521 = vadd.xlane.f32.xlu0 %v1520
        %v1522 = vpop.xlane.xlu0 %1521
        %v1523 = vsel %vm1307, %v1514, 0.0
        %1524 = vadd.xlane.f32.xlu0 %v1523
        %v1525 = vpop.xlane.xlu0 %1524
        %v1526 = vsel %vm1307, %v1516, 0.0
        %1527 = vadd.xlane.f32.xlu0 %v1526
        %v1528 = vpop.xlane.xlu0 %1527
        %v1529 = vrcp.pop %v1519
        %v1530 = vrcp.pop %v1522
        %v1531 = vrcp.pop %v1525
        %v1532 = vrcp.pop %v1528
        %v1533 = vmul.f32 %v1510, %v1529
        %v1534 = vmul.f32 %v1512, %v1530
        %v1535 = vmul.f32 %v1514, %v1531
        %v1536 = vmul.f32 %v1516, %v1532
        %v1537 = vpack.c.bf16 %v1533, %v1533
        %v1538 = vpack.c.bf16 %v1534, %v1534
        %v1539 = vpack.c.bf16 %v1535, %v1535
        %v1540 = vpack.c.bf16 %v1536, %v1536
        %v1541 = vpack.c.bf16 %v783, %v783
        %v1542 = vpack.c.bf16 %v807, %v807
        %v1543 = vpack.c.bf16 %v790, %v790
        %v1544 = vpack.c.bf16 %v808, %v808
        %v1545 = vpack.c.bf16 %v799, %v799
        %v1546 = vpack.c.bf16 %v809, %v809
        %v1547 = vpack.c.bf16 %v806, %v806
        %v1548 = vpack.c.bf16 %v810, %v810
        %1549 = vxpose.xlu0.c.b16.start [1/8] %v1541, 128
        %1550 = vxpose.xlu0.c.b16.cont [2/8] 0, 128
        %1551 = vxpose.xlu0.c.b16.cont [3/8] 0, 128
        %1552 = vxpose.xlu0.c.b16.cont [4/8] 0, 128
        %1553 = vxpose.xlu0.c.b16.cont [5/8] 0, 128
        %1554 = vxpose.xlu0.c.b16.cont [6/8] 0, 128
        %1555 = vxpose.xlu0.c.b16.cont [7/8] 0, 128
        %1556 = vxpose.xlu0.c.b16.end [8/8] 0, 128
        %v1557 = vpop.trf.xlu0
        %v1558 = vpop.trf.xlu0
        %v1559 = vpop.trf.xlu0
        %v1560 = vpop.trf.xlu0
        %v1561 = vpop.trf.xlu0
        %v1562 = vpop.trf.xlu0
        %v1563 = vpop.trf.xlu0
        %v1564 = vpop.trf.xlu0
        %1565 = vxpose.xlu0.c.b16.start [1/8] %v1542, 128
        %1566 = vxpose.xlu0.c.b16.cont [2/8] 0, 128
        %1567 = vxpose.xlu0.c.b16.cont [3/8] 0, 128
        %1568 = vxpose.xlu0.c.b16.cont [4/8] 0, 128
        %1569 = vxpose.xlu0.c.b16.cont [5/8] 0, 128
        %1570 = vxpose.xlu0.c.b16.cont [6/8] 0, 128
        %1571 = vxpose.xlu0.c.b16.cont [7/8] 0, 128
        %1572 = vxpose.xlu0.c.b16.end [8/8] 0, 128
        %v1573 = vpop.trf.xlu0
        %v1574 = vpop.trf.xlu0
        %v1575 = vpop.trf.xlu0
        %v1576 = vpop.trf.xlu0
        %v1577 = vpop.trf.xlu0
        %v1578 = vpop.trf.xlu0
        %v1579 = vpop.trf.xlu0
        %v1580 = vpop.trf.xlu0
        %1581 = vxpose.xlu0.c.b16.start [1/8] %v1543, 128
        %1582 = vxpose.xlu0.c.b16.cont [2/8] 0, 128
        %1583 = vxpose.xlu0.c.b16.cont [3/8] 0, 128
        %1584 = vxpose.xlu0.c.b16.cont [4/8] 0, 128
        %1585 = vxpose.xlu0.c.b16.cont [5/8] 0, 128
        %1586 = vxpose.xlu0.c.b16.cont [6/8] 0, 128
        %1587 = vxpose.xlu0.c.b16.cont [7/8] 0, 128
        %1588 = vxpose.xlu0.c.b16.end [8/8] 0, 128
        %v1589 = vpop.trf.xlu0
        %v1590 = vpop.trf.xlu0
        %v1591 = vpop.trf.xlu0
        %v1592 = vpop.trf.xlu0
        %v1593 = vpop.trf.xlu0
        %v1594 = vpop.trf.xlu0
        %v1595 = vpop.trf.xlu0
        %v1596 = vpop.trf.xlu0
        %1597 = vxpose.xlu0.c.b16.start [1/8] %v1544, 128
        %1598 = vxpose.xlu0.c.b16.cont [2/8] 0, 128
        %1599 = vxpose.xlu0.c.b16.cont [3/8] 0, 128
        %1600 = vxpose.xlu0.c.b16.cont [4/8] 0, 128
        %1601 = vxpose.xlu0.c.b16.cont [5/8] 0, 128
        %1602 = vxpose.xlu0.c.b16.cont [6/8] 0, 128
        %1603 = vxpose.xlu0.c.b16.cont [7/8] 0, 128
        %1604 = vxpose.xlu0.c.b16.end [8/8] 0, 128
        %v1605 = vpop.trf.xlu0
        %v1606 = vpop.trf.xlu0
        %v1607 = vpop.trf.xlu0
        %v1608 = vpop.trf.xlu0
        %v1609 = vpop.trf.xlu0
        %v1610 = vpop.trf.xlu0
        %v1611 = vpop.trf.xlu0
        %v1612 = vpop.trf.xlu0
        %1613 = vxpose.xlu0.c.b16.start [1/8] %v1545, 128
        %1614 = vxpose.xlu0.c.b16.cont [2/8] 0, 128
        %1615 = vxpose.xlu0.c.b16.cont [3/8] 0, 128
        %1616 = vxpose.xlu0.c.b16.cont [4/8] 0, 128
        %1617 = vxpose.xlu0.c.b16.cont [5/8] 0, 128
        %1618 = vxpose.xlu0.c.b16.cont [6/8] 0, 128
        %1619 = vxpose.xlu0.c.b16.cont [7/8] 0, 128
        %1620 = vxpose.xlu0.c.b16.end [8/8] 0, 128
        %v1621 = vpop.trf.xlu0
        %v1622 = vpop.trf.xlu0
        %v1623 = vpop.trf.xlu0
        %v1624 = vpop.trf.xlu0
        %v1625 = vpop.trf.xlu0
        %v1626 = vpop.trf.xlu0
        %v1627 = vpop.trf.xlu0
        %v1628 = vpop.trf.xlu0
        %1629 = vxpose.xlu0.c.b16.start [1/8] %v1546, 128
        %1630 = vxpose.xlu0.c.b16.cont [2/8] 0, 128
        %1631 = vxpose.xlu0.c.b16.cont [3/8] 0, 128
        %1632 = vxpose.xlu0.c.b16.cont [4/8] 0, 128
        %1633 = vxpose.xlu0.c.b16.cont [5/8] 0, 128
        %1634 = vxpose.xlu0.c.b16.cont [6/8] 0, 128
        %1635 = vxpose.xlu0.c.b16.cont [7/8] 0, 128
        %1636 = vxpose.xlu0.c.b16.end [8/8] 0, 128
        %v1637 = vpop.trf.xlu0
        %v1638 = vpop.trf.xlu0
        %v1639 = vpop.trf.xlu0
        %v1640 = vpop.trf.xlu0
        %v1641 = vpop.trf.xlu0
        %v1642 = vpop.trf.xlu0
        %v1643 = vpop.trf.xlu0
        %v1644 = vpop.trf.xlu0
        %1645 = vxpose.xlu0.c.b16.start [1/8] %v1547, 128
        %1646 = vxpose.xlu0.c.b16.cont [2/8] 0, 128
        %1647 = vxpose.xlu0.c.b16.cont [3/8] 0, 128
        %1648 = vxpose.xlu0.c.b16.cont [4/8] 0, 128
        %1649 = vxpose.xlu0.c.b16.cont [5/8] 0, 128
        %1650 = vxpose.xlu0.c.b16.cont [6/8] 0, 128
        %1651 = vxpose.xlu0.c.b16.cont [7/8] 0, 128
        %1652 = vxpose.xlu0.c.b16.end [8/8] 0, 128
        %v1653 = vpop.trf.xlu0
        %v1654 = vpop.trf.xlu0
        %v1655 = vpop.trf.xlu0
        %v1656 = vpop.trf.xlu0
        %v1657 = vpop.trf.xlu0
        %v1658 = vpop.trf.xlu0
        %v1659 = vpop.trf.xlu0
        %v1660 = vpop.trf.xlu0
        %1661 = vxpose.xlu0.c.b16.start [1/8] %v1548, 128
        %1662 = vxpose.xlu0.c.b16.cont [2/8] 0, 128
        %1663 = vxpose.xlu0.c.b16.cont [3/8] 0, 128
        %1664 = vxpose.xlu0.c.b16.cont [4/8] 0, 128
        %1665 = vxpose.xlu0.c.b16.cont [5/8] 0, 128
        %1666 = vxpose.xlu0.c.b16.cont [6/8] 0, 128
        %1667 = vxpose.xlu0.c.b16.cont [7/8] 0, 128
        %1668 = vxpose.xlu0.c.b16.end [8/8] 0, 128
        %v1669 = vpop.trf.xlu0
        %v1670 = vpop.trf.xlu0
        %v1671 = vpop.trf.xlu0
        %v1672 = vpop.trf.xlu0
        %v1673 = vpop.trf.xlu0
        %v1674 = vpop.trf.xlu0
        %v1675 = vpop.trf.xlu0
        %v1676 = vpop.trf.xlu0
        %v1677 = vcombine.low %v1557, %v1621
        %v1679 = vunpack.c.l.s4 1983009808
        %v1680 = vunpack.c.0.s8 %v1679
        %v1681 = vlaneseq
        %v1682 = vshrl.u32 %v1681, 7
        %v1683 = vsub.s32 %v1680, %v1682
        %v1684 = vrot.slane %v1677, %v1683
        %v1685 = vcombine.low %v1589, %v1653
        %v1687 = vunpack.c.l.s4 1983009808
        %v1688 = vunpack.c.0.s8 %v1687
        %v1689 = vlaneseq
        %v1690 = vshrl.u32 %v1689, 7
        %v1691 = vsub.s32 %v1688, %v1690
        %v1692 = vrot.slane %v1685, %v1691
        %v1693 = vcombine.low %v1684, %v1692
        %v1694 = vcombine.high %v1684, %v1692
        %v1696 = vunpack.c.l.s4 1934713408
        %v1697 = vunpack.c.0.s8 %v1696
        %v1698 = vlaneseq
        %v1699 = vshrl.u32 %v1698, 7
        %v1700 = vsub.s32 %v1697, %v1699
        %v1701 = vrot.slane %v1693, %v1700
        %v1703 = vunpack.c.l.s4 1934713408
        %v1704 = vunpack.c.0.s8 %v1703
        %v1705 = vlaneseq
        %v1706 = vshrl.u32 %v1705, 7
        %v1707 = vsub.s32 %v1704, %v1706
        %v1708 = vrot.slane %v1694, %v1707
        %v1709 = vcombine.high %v1701, 0
        %v1710 = vcombine.high %v1708, 0
        %v1711 = vcombine.low %v1573, %v1637
        %v1713 = vunpack.c.l.s4 1983009808
        %v1714 = vunpack.c.0.s8 %v1713
        %v1715 = vlaneseq
        %v1716 = vshrl.u32 %v1715, 7
        %v1717 = vsub.s32 %v1714, %v1716
        %v1718 = vrot.slane %v1711, %v1717
        %v1719 = vcombine.low %v1605, %v1669
        %v1721 = vunpack.c.l.s4 1983009808
        %v1722 = vunpack.c.0.s8 %v1721
        %v1723 = vlaneseq
        %v1724 = vshrl.u32 %v1723, 7
        %v1725 = vsub.s32 %v1722, %v1724
        %v1726 = vrot.slane %v1719, %v1725
        %v1727 = vcombine.low %v1718, %v1726
        %v1728 = vcombine.high %v1718, %v1726
        %v1730 = vunpack.c.l.s4 1934713408
        %v1731 = vunpack.c.0.s8 %v1730
        %v1732 = vlaneseq
        %v1733 = vshrl.u32 %v1732, 7
        %v1734 = vsub.s32 %v1731, %v1733
        %v1735 = vrot.slane %v1727, %v1734
        %v1737 = vunpack.c.l.s4 1934713408
        %v1738 = vunpack.c.0.s8 %v1737
        %v1739 = vlaneseq
        %v1740 = vshrl.u32 %v1739, 7
        %v1741 = vsub.s32 %v1738, %v1740
        %v1742 = vrot.slane %v1728, %v1741
        %v1743 = vcombine.high %v1735, 0
        %v1744 = vcombine.high %v1742, 0
        %v1747 = vpack.i.b16 %v1735, %v1701
        %v1749 = vshrl.u32 %v1701, 16
        %v1750 = vshrl.u32 %v1735, 16
        %v1751 = vpack.i.b16 %v1750, %v1749
        %v1755 = vpack.i.b16 %v1743, %v1709
        %v1757 = vshrl.u32 %v1709, 16
        %v1758 = vshrl.u32 %v1743, 16
        %v1759 = vpack.i.b16 %v1758, %v1757
        %v1763 = vpack.i.b16 %v1742, %v1708
        %v1765 = vshrl.u32 %v1708, 16
        %v1766 = vshrl.u32 %v1742, 16
        %v1767 = vpack.i.b16 %v1766, %v1765
        %v1771 = vpack.i.b16 %v1744, %v1710
        %v1773 = vshrl.u32 %v1710, 16
        %v1774 = vshrl.u32 %v1744, 16
        %v1775 = vpack.i.b16 %v1774, %v1773
        %1777 = vxpose.xlu0.c.b16.start [1/8] %v1747, 128
        %1778 = vxpose.xlu0.c.b16.cont [2/8] 0, 128
        %1779 = vxpose.xlu0.c.b16.cont [3/8] 0, 128
        %1780 = vxpose.xlu0.c.b16.cont [4/8] 0, 128
        %1781 = vxpose.xlu0.c.b16.cont [5/8] 0, 128
        %1782 = vxpose.xlu0.c.b16.cont [6/8] 0, 128
        %1783 = vxpose.xlu0.c.b16.cont [7/8] 0, 128
        %1784 = vxpose.xlu0.c.b16.end [8/8] 0, 128
        %v1785 = vpop.trf.xlu0
        %v1786 = vpop.trf.xlu0
        %v1787 = vpop.trf.xlu0
        %v1788 = vpop.trf.xlu0
        %v1789 = vpop.trf.xlu0
        %v1790 = vpop.trf.xlu0
        %v1791 = vpop.trf.xlu0
        %v1792 = vpop.trf.xlu0
        %1793 = vxpose.xlu0.c.b16.start [1/8] %v1751, 128
        %1794 = vxpose.xlu0.c.b16.cont [2/8] 0, 128
        %1795 = vxpose.xlu0.c.b16.cont [3/8] 0, 128
        %1796 = vxpose.xlu0.c.b16.cont [4/8] 0, 128
        %1797 = vxpose.xlu0.c.b16.cont [5/8] 0, 128
        %1798 = vxpose.xlu0.c.b16.cont [6/8] 0, 128
        %1799 = vxpose.xlu0.c.b16.cont [7/8] 0, 128
        %1800 = vxpose.xlu0.c.b16.end [8/8] 0, 128
        %v1801 = vpop.trf.xlu0
        %v1802 = vpop.trf.xlu0
        %v1803 = vpop.trf.xlu0
        %v1804 = vpop.trf.xlu0
        %v1805 = vpop.trf.xlu0
        %v1806 = vpop.trf.xlu0
        %v1807 = vpop.trf.xlu0
        %v1808 = vpop.trf.xlu0
        %1809 = vxpose.xlu0.c.b16.start [1/8] %v1755, 128
        %1810 = vxpose.xlu0.c.b16.cont [2/8] 0, 128
        %1811 = vxpose.xlu0.c.b16.cont [3/8] 0, 128
        %1812 = vxpose.xlu0.c.b16.cont [4/8] 0, 128
        %1813 = vxpose.xlu0.c.b16.cont [5/8] 0, 128
        %1814 = vxpose.xlu0.c.b16.cont [6/8] 0, 128
        %1815 = vxpose.xlu0.c.b16.cont [7/8] 0, 128
        %1816 = vxpose.xlu0.c.b16.end [8/8] 0, 128
        %v1817 = vpop.trf.xlu0
        %v1818 = vpop.trf.xlu0
        %v1819 = vpop.trf.xlu0
        %v1820 = vpop.trf.xlu0
        %v1821 = vpop.trf.xlu0
        %v1822 = vpop.trf.xlu0
        %v1823 = vpop.trf.xlu0
        %v1824 = vpop.trf.xlu0
        %1825 = vxpose.xlu0.c.b16.start [1/8] %v1759, 128
        %1826 = vxpose.xlu0.c.b16.cont [2/8] 0, 128
        %1827 = vxpose.xlu0.c.b16.cont [3/8] 0, 128
        %1828 = vxpose.xlu0.c.b16.cont [4/8] 0, 128
        %1829 = vxpose.xlu0.c.b16.cont [5/8] 0, 128
        %1830 = vxpose.xlu0.c.b16.cont [6/8] 0, 128
        %1831 = vxpose.xlu0.c.b16.cont [7/8] 0, 128
        %1832 = vxpose.xlu0.c.b16.end [8/8] 0, 128
        %v1833 = vpop.trf.xlu0
        %v1834 = vpop.trf.xlu0
        %v1835 = vpop.trf.xlu0
        %v1836 = vpop.trf.xlu0
        %v1837 = vpop.trf.xlu0
        %v1838 = vpop.trf.xlu0
        %v1839 = vpop.trf.xlu0
        %v1840 = vpop.trf.xlu0
        %1841 = vxpose.xlu0.c.b16.start [1/8] %v1763, 128
        %1842 = vxpose.xlu0.c.b16.cont [2/8] 0, 128
        %1843 = vxpose.xlu0.c.b16.cont [3/8] 0, 128
        %1844 = vxpose.xlu0.c.b16.cont [4/8] 0, 128
        %1845 = vxpose.xlu0.c.b16.cont [5/8] 0, 128
        %1846 = vxpose.xlu0.c.b16.cont [6/8] 0, 128
        %1847 = vxpose.xlu0.c.b16.cont [7/8] 0, 128
        %1848 = vxpose.xlu0.c.b16.end [8/8] 0, 128
        %v1849 = vpop.trf.xlu0
        %v1850 = vpop.trf.xlu0
        %v1851 = vpop.trf.xlu0
        %v1852 = vpop.trf.xlu0
        %v1853 = vpop.trf.xlu0
        %v1854 = vpop.trf.xlu0
        %v1855 = vpop.trf.xlu0
        %v1856 = vpop.trf.xlu0
        %1857 = vxpose.xlu0.c.b16.start [1/8] %v1767, 128
        %1858 = vxpose.xlu0.c.b16.cont [2/8] 0, 128
        %1859 = vxpose.xlu0.c.b16.cont [3/8] 0, 128
        %1860 = vxpose.xlu0.c.b16.cont [4/8] 0, 128
        %1861 = vxpose.xlu0.c.b16.cont [5/8] 0, 128
        %1862 = vxpose.xlu0.c.b16.cont [6/8] 0, 128
        %1863 = vxpose.xlu0.c.b16.cont [7/8] 0, 128
        %1864 = vxpose.xlu0.c.b16.end [8/8] 0, 128
        %v1865 = vpop.trf.xlu0
        %v1866 = vpop.trf.xlu0
        %v1867 = vpop.trf.xlu0
        %v1868 = vpop.trf.xlu0
        %v1869 = vpop.trf.xlu0
        %v1870 = vpop.trf.xlu0
        %v1871 = vpop.trf.xlu0
        %v1872 = vpop.trf.xlu0
        %1873 = vxpose.xlu0.c.b16.start [1/8] %v1771, 128
        %1874 = vxpose.xlu0.c.b16.cont [2/8] 0, 128
        %1875 = vxpose.xlu0.c.b16.cont [3/8] 0, 128
        %1876 = vxpose.xlu0.c.b16.cont [4/8] 0, 128
        %1877 = vxpose.xlu0.c.b16.cont [5/8] 0, 128
        %1878 = vxpose.xlu0.c.b16.cont [6/8] 0, 128
        %1879 = vxpose.xlu0.c.b16.cont [7/8] 0, 128
        %1880 = vxpose.xlu0.c.b16.end [8/8] 0, 128
        %v1881 = vpop.trf.xlu0
        %v1882 = vpop.trf.xlu0
        %v1883 = vpop.trf.xlu0
        %v1884 = vpop.trf.xlu0
        %v1885 = vpop.trf.xlu0
        %v1886 = vpop.trf.xlu0
        %v1887 = vpop.trf.xlu0
        %v1888 = vpop.trf.xlu0
        %1889 = vxpose.xlu0.c.b16.start [1/8] %v1775, 128
        %1890 = vxpose.xlu0.c.b16.cont [2/8] 0, 128
        %1891 = vxpose.xlu0.c.b16.cont [3/8] 0, 128
        %1892 = vxpose.xlu0.c.b16.cont [4/8] 0, 128
        %1893 = vxpose.xlu0.c.b16.cont [5/8] 0, 128
        %1894 = vxpose.xlu0.c.b16.cont [6/8] 0, 128
        %1895 = vxpose.xlu0.c.b16.cont [7/8] 0, 128
        %1896 = vxpose.xlu0.c.b16.end [8/8] 0, 128
        %v1897 = vpop.trf.xlu0
        %v1898 = vpop.trf.xlu0
        %v1899 = vpop.trf.xlu0
        %v1900 = vpop.trf.xlu0
        %v1901 = vpop.trf.xlu0
        %v1902 = vpop.trf.xlu0
        %v1903 = vpop.trf.xlu0
        %v1904 = vpop.trf.xlu0
        %v1905 = vcombine.low %v1785, %v1849
        %v1907 = vunpack.c.l.s4 1983009808
        %v1908 = vunpack.c.0.s8 %v1907
        %v1909 = vlaneseq
        %v1910 = vshrl.u32 %v1909, 7
        %v1911 = vsub.s32 %v1908, %v1910
        %v1912 = vrot.slane %v1905, %v1911
        %v1913 = vcombine.low %v1817, %v1881
        %v1915 = vunpack.c.l.s4 1983009808
        %v1916 = vunpack.c.0.s8 %v1915
        %v1917 = vlaneseq
        %v1918 = vshrl.u32 %v1917, 7
        %v1919 = vsub.s32 %v1916, %v1918
        %v1920 = vrot.slane %v1913, %v1919
        %v1921 = vcombine.low %v1912, %v1920
        %v1923 = vunpack.c.l.s4 1934713408
        %v1924 = vunpack.c.0.s8 %v1923
        %v1925 = vlaneseq
        %v1926 = vshrl.u32 %v1925, 7
        %v1927 = vsub.s32 %v1924, %v1926
        %v1928 = vrot.slane %v1921, %v1927
        %v1929 = vcombine.high %v1928, 0
        %v1930 = vcombine.low %v1801, %v1865
        %v1932 = vunpack.c.l.s4 1983009808
        %v1933 = vunpack.c.0.s8 %v1932
        %v1934 = vlaneseq
        %v1935 = vshrl.u32 %v1934, 7
        %v1936 = vsub.s32 %v1933, %v1935
        %v1937 = vrot.slane %v1930, %v1936
        %v1938 = vcombine.low %v1833, %v1897
        %v1940 = vunpack.c.l.s4 1983009808
        %v1941 = vunpack.c.0.s8 %v1940
        %v1942 = vlaneseq
        %v1943 = vshrl.u32 %v1942, 7
        %v1944 = vsub.s32 %v1941, %v1943
        %v1945 = vrot.slane %v1938, %v1944
        %v1946 = vcombine.low %v1937, %v1945
        %v1948 = vunpack.c.l.s4 1934713408
        %v1949 = vunpack.c.0.s8 %v1948
        %v1950 = vlaneseq
        %v1951 = vshrl.u32 %v1950, 7
        %v1952 = vsub.s32 %v1949, %v1951
        %v1953 = vrot.slane %v1946, %v1952
        %v1954 = vcombine.high %v1953, 0
        %v1957 = vpack.i.b16 %v1953, %v1928
        %v1958 = vshrl.u32 %v1928, 16
        %v1959 = vshrl.u32 %v1953, 16
        %v1960 = vpack.i.b16 %v1959, %v1958
        %v1963 = vpack.i.b16 %v1954, %v1929
        %v1964 = vshrl.u32 %v1929, 16
        %v1965 = vshrl.u32 %v1954, 16
        %v1966 = vpack.i.b16 %v1965, %v1964
        %v1968 = vsel %vm1307, %v1957, 0
        %v1971 = vsel %vm1307, %v1537, 0
        %1973 = vmatprep.subr.bf16.mxu0 0
        %1974 = vmatpush1.bf16.xpose.msra.mxu0 %v1971
        %1975 = vmatprep.subr.bf16.mxu0 0
        %1976 = vmatpush1.bf16.xpose.msra.mxu0 0
        %1977 = vmatprep.subr.bf16.mxu0 0
        %1978 = vmatpush1.bf16.xpose.msra.mxu0 0
        %1979 = vmatprep.subr.bf16.mxu0 0
        %1980 = vmatpush1.bf16.xpose.msra.mxu0 0
        %1981 = vmatprep.subr.bf16.mxu0 0
        %1982 = vmatpush1.bf16.xpose.msra.mxu0 0
        %1983 = vmatprep.subr.bf16.mxu0 0
        %1984 = vmatpush1.bf16.xpose.msra.mxu0 0
        %1985 = vmatprep.subr.bf16.mxu0 0
        %1986 = vmatpush1.bf16.xpose.msra.mxu0 0
        %1987 = vmatprep.subr.bf16.mxu0 0
        %1988 = vmatpush1.bf16.xpose.msra.mxu0 0
        %1989 = vmatprep.subr.bf16.mxu0 0
        %1990 = vmatpush1.bf16.xpose.msra.mxu0 0
        %1991 = vmatprep.subr.bf16.mxu0 0
        %1992 = vmatpush1.bf16.xpose.msra.mxu0 0
        %1993 = vmatprep.subr.bf16.mxu0 0
        %1994 = vmatpush1.bf16.xpose.msra.mxu0 0
        %1995 = vmatprep.subr.bf16.mxu0 0
        %1996 = vmatpush1.bf16.xpose.msra.mxu0 0
        %1997 = vmatprep.subr.bf16.mxu0 0
        %1998 = vmatpush1.bf16.xpose.msra.mxu0 0
        %1999 = vmatprep.subr.bf16.mxu0 0
        %2000 = vmatpush1.bf16.xpose.msra.mxu0 0
        %2001 = vmatprep.subr.bf16.mxu0 0
        %2002 = vmatpush1.bf16.xpose.msra.mxu0 0
        %2003 = vmatprep.subr.bf16.mxu0 0
        %2004 = vmatpush1.bf16.xpose.msra.mxu0 0
        %2005 = vmatprep.mubr.bf16.mxu0 0
        %2006 = vmatmul.mubr.bf16.gmra.mrb[0].mxu0 %v1968
        %v2007 = vpop.f32.mrb[0].mxu0
        %v2008 = vadd.f32 0.0, %v2007
        %v2009 = vpop.f32.mrb[0].mxu0
        %v2010 = vpop.f32.mrb[0].mxu0
        %v2011 = vpop.f32.mrb[0].mxu0
        %2012 = vdwg.mxu0
        %v2014 = vsel %vm1307, %v1960, 0
        %v2017 = vsel %vm1307, %v1538, 0
        %2019 = vmatprep.subr.bf16.mxu0 0
        %2020 = vmatpush1.bf16.xpose.msra.mxu0 %v2017
        %2021 = vmatprep.subr.bf16.mxu0 0
        %2022 = vmatpush1.bf16.xpose.msra.mxu0 0
        %2023 = vmatprep.subr.bf16.mxu0 0
        %2024 = vmatpush1.bf16.xpose.msra.mxu0 0
        %2025 = vmatprep.subr.bf16.mxu0 0
        %2026 = vmatpush1.bf16.xpose.msra.mxu0 0
        %2027 = vmatprep.subr.bf16.mxu0 0
        %2028 = vmatpush1.bf16.xpose.msra.mxu0 0
        %2029 = vmatprep.subr.bf16.mxu0 0
        %2030 = vmatpush1.bf16.xpose.msra.mxu0 0
        %2031 = vmatprep.subr.bf16.mxu0 0
        %2032 = vmatpush1.bf16.xpose.msra.mxu0 0
        %2033 = vmatprep.subr.bf16.mxu0 0
        %2034 = vmatpush1.bf16.xpose.msra.mxu0 0
        %2035 = vmatprep.subr.bf16.mxu0 0
        %2036 = vmatpush1.bf16.xpose.msra.mxu0 0
        %2037 = vmatprep.subr.bf16.mxu0 0
        %2038 = vmatpush1.bf16.xpose.msra.mxu0 0
        %2039 = vmatprep.subr.bf16.mxu0 0
        %2040 = vmatpush1.bf16.xpose.msra.mxu0 0
        %2041 = vmatprep.subr.bf16.mxu0 0
        %2042 = vmatpush1.bf16.xpose.msra.mxu0 0
        %2043 = vmatprep.subr.bf16.mxu0 0
        %2044 = vmatpush1.bf16.xpose.msra.mxu0 0
        %2045 = vmatprep.subr.bf16.mxu0 0
        %2046 = vmatpush1.bf16.xpose.msra.mxu0 0
        %2047 = vmatprep.subr.bf16.mxu0 0
        %2048 = vmatpush1.bf16.xpose.msra.mxu0 0
        %2049 = vmatprep.subr.bf16.mxu0 0
        %2050 = vmatpush1.bf16.xpose.msra.mxu0 0
        %2051 = vmatprep.mubr.bf16.mxu0 0
        %2052 = vmatmul.mubr.bf16.gmra.mrb[0].mxu0 %v2014
        %v2053 = vpop.f32.mrb[0].mxu0
        %v2054 = vadd.f32 0.0, %v2053
        %v2055 = vpop.f32.mrb[0].mxu0
        %v2056 = vpop.f32.mrb[0].mxu0
        %v2057 = vpop.f32.mrb[0].mxu0
        %2058 = vdwg.mxu0
        %v2060 = vsel %vm1307, %v1963, 0
        %v2063 = vsel %vm1307, %v1539, 0
        %2065 = vmatprep.subr.bf16.mxu0 0
        %2066 = vmatpush1.bf16.xpose.msra.mxu0 %v2063
        %2067 = vmatprep.subr.bf16.mxu0 0
        %2068 = vmatpush1.bf16.xpose.msra.mxu0 0
        %2069 = vmatprep.subr.bf16.mxu0 0
        %2070 = vmatpush1.bf16.xpose.msra.mxu0 0
        %2071 = vmatprep.subr.bf16.mxu0 0
        %2072 = vmatpush1.bf16.xpose.msra.mxu0 0
        %2073 = vmatprep.subr.bf16.mxu0 0
        %2074 = vmatpush1.bf16.xpose.msra.mxu0 0
        %2075 = vmatprep.subr.bf16.mxu0 0
        %2076 = vmatpush1.bf16.xpose.msra.mxu0 0
        %2077 = vmatprep.subr.bf16.mxu0 0
        %2078 = vmatpush1.bf16.xpose.msra.mxu0 0
        %2079 = vmatprep.subr.bf16.mxu0 0
        %2080 = vmatpush1.bf16.xpose.msra.mxu0 0
        %2081 = vmatprep.subr.bf16.mxu0 0
        %2082 = vmatpush1.bf16.xpose.msra.mxu0 0
        %2083 = vmatprep.subr.bf16.mxu0 0
        %2084 = vmatpush1.bf16.xpose.msra.mxu0 0
        %2085 = vmatprep.subr.bf16.mxu0 0
        %2086 = vmatpush1.bf16.xpose.msra.mxu0 0
        %2087 = vmatprep.subr.bf16.mxu0 0
        %2088 = vmatpush1.bf16.xpose.msra.mxu0 0
        %2089 = vmatprep.subr.bf16.mxu0 0
        %2090 = vmatpush1.bf16.xpose.msra.mxu0 0
        %2091 = vmatprep.subr.bf16.mxu0 0
        %2092 = vmatpush1.bf16.xpose.msra.mxu0 0
        %2093 = vmatprep.subr.bf16.mxu0 0
        %2094 = vmatpush1.bf16.xpose.msra.mxu0 0
        %2095 = vmatprep.subr.bf16.mxu0 0
        %2096 = vmatpush1.bf16.xpose.msra.mxu0 0
        %2097 = vmatprep.mubr.bf16.mxu0 0
        %2098 = vmatmul.mubr.bf16.gmra.mrb[0].mxu0 %v2060
        %v2099 = vpop.f32.mrb[0].mxu0
        %v2100 = vadd.f32 0.0, %v2099
        %v2101 = vpop.f32.mrb[0].mxu0
        %v2102 = vpop.f32.mrb[0].mxu0
        %v2103 = vpop.f32.mrb[0].mxu0
        %2104 = vdwg.mxu0
        %v2106 = vsel %vm1307, %v1966, 0
        %v2109 = vsel %vm1307, %v1540, 0
        %2111 = vmatprep.subr.bf16.mxu0 0
        %2112 = vmatpush1.bf16.xpose.msra.mxu0 %v2109
        %2113 = vmatprep.subr.bf16.mxu0 0
        %2114 = vmatpush1.bf16.xpose.msra.mxu0 0
        %2115 = vmatprep.subr.bf16.mxu0 0
        %2116 = vmatpush1.bf16.xpose.msra.mxu0 0
        %2117 = vmatprep.subr.bf16.mxu0 0
        %2118 = vmatpush1.bf16.xpose.msra.mxu0 0
        %2119 = vmatprep.subr.bf16.mxu0 0
        %2120 = vmatpush1.bf16.xpose.msra.mxu0 0
        %2121 = vmatprep.subr.bf16.mxu0 0
        %2122 = vmatpush1.bf16.xpose.msra.mxu0 0
        %2123 = vmatprep.subr.bf16.mxu0 0
        %2124 = vmatpush1.bf16.xpose.msra.mxu0 0
        %2125 = vmatprep.subr.bf16.mxu0 0
        %2126 = vmatpush1.bf16.xpose.msra.mxu0 0
        %2127 = vmatprep.subr.bf16.mxu0 0
        %2128 = vmatpush1.bf16.xpose.msra.mxu0 0
        %2129 = vmatprep.subr.bf16.mxu0 0
        %2130 = vmatpush1.bf16.xpose.msra.mxu0 0
        %2131 = vmatprep.subr.bf16.mxu0 0
        %2132 = vmatpush1.bf16.xpose.msra.mxu0 0
        %2133 = vmatprep.subr.bf16.mxu0 0
        %2134 = vmatpush1.bf16.xpose.msra.mxu0 0
        %2135 = vmatprep.subr.bf16.mxu0 0
        %2136 = vmatpush1.bf16.xpose.msra.mxu0 0
        %2137 = vmatprep.subr.bf16.mxu0 0
        %2138 = vmatpush1.bf16.xpose.msra.mxu0 0
        %2139 = vmatprep.subr.bf16.mxu0 0
        %2140 = vmatpush1.bf16.xpose.msra.mxu0 0
        %2141 = vmatprep.subr.bf16.mxu0 0
        %2142 = vmatpush1.bf16.xpose.msra.mxu0 0
        %2143 = vmatprep.mubr.bf16.mxu0 0
        %2144 = vmatmul.mubr.bf16.gmra.mrb[0].mxu0 %v2106
        %v2145 = vpop.f32.mrb[0].mxu0
        %v2146 = vadd.f32 0.0, %v2145
        %v2147 = vpop.f32.mrb[0].mxu0
        %v2148 = vpop.f32.mrb[0].mxu0
        %v2149 = vpop.f32.mrb[0].mxu0
        %2150 = vdwg.mxu0
        %2151 = vxpose.xlu0.b32.start [1/16] %v2008, 128
        %2152 = vxpose.xlu0.b32.cont [2/16] 0.0, 128
        %2153 = vxpose.xlu0.b32.cont [3/16] 0.0, 128
        %2154 = vxpose.xlu0.b32.cont [4/16] 0.0, 128
        %2155 = vxpose.xlu0.b32.cont [5/16] 0.0, 128
        %2156 = vxpose.xlu0.b32.cont [6/16] 0.0, 128
        %2157 = vxpose.xlu0.b32.cont [7/16] 0.0, 128
        %2158 = vxpose.xlu0.b32.cont [8/16] 0.0, 128
        %2159 = vxpose.xlu0.b32.cont [9/16] 0.0, 128
        %2160 = vxpose.xlu0.b32.cont [10/16] 0.0, 128
        %2161 = vxpose.xlu0.b32.cont [11/16] 0.0, 128
        %2162 = vxpose.xlu0.b32.cont [12/16] 0.0, 128
        %2163 = vxpose.xlu0.b32.cont [13/16] 0.0, 128
        %2164 = vxpose.xlu0.b32.cont [14/16] 0.0, 128
        %2165 = vxpose.xlu0.b32.cont [15/16] 0.0, 128
        %2166 = vxpose.xlu0.b32.end [16/16] 0.0, 128
        %v2167 = vpop.trf.xlu0
        %v2168 = vpop.trf.xlu0
        %v2169 = vpop.trf.xlu0
        %v2170 = vpop.trf.xlu0
        %v2171 = vpop.trf.xlu0
        %v2172 = vpop.trf.xlu0
        %v2173 = vpop.trf.xlu0
        %v2174 = vpop.trf.xlu0
        %v2175 = vpop.trf.xlu0
        %v2176 = vpop.trf.xlu0
        %v2177 = vpop.trf.xlu0
        %v2178 = vpop.trf.xlu0
        %v2179 = vpop.trf.xlu0
        %v2180 = vpop.trf.xlu0
        %v2181 = vpop.trf.xlu0
        %v2182 = vpop.trf.xlu0
        %2183 = vxpose.xlu0.b32.start [1/16] %v2054, 128
        %2184 = vxpose.xlu0.b32.cont [2/16] 0.0, 128
        %2185 = vxpose.xlu0.b32.cont [3/16] 0.0, 128
        %2186 = vxpose.xlu0.b32.cont [4/16] 0.0, 128
        %2187 = vxpose.xlu0.b32.cont [5/16] 0.0, 128
        %2188 = vxpose.xlu0.b32.cont [6/16] 0.0, 128
        %2189 = vxpose.xlu0.b32.cont [7/16] 0.0, 128
        %2190 = vxpose.xlu0.b32.cont [8/16] 0.0, 128
        %2191 = vxpose.xlu0.b32.cont [9/16] 0.0, 128
        %2192 = vxpose.xlu0.b32.cont [10/16] 0.0, 128
        %2193 = vxpose.xlu0.b32.cont [11/16] 0.0, 128
        %2194 = vxpose.xlu0.b32.cont [12/16] 0.0, 128
        %2195 = vxpose.xlu0.b32.cont [13/16] 0.0, 128
        %2196 = vxpose.xlu0.b32.cont [14/16] 0.0, 128
        %2197 = vxpose.xlu0.b32.cont [15/16] 0.0, 128
        %2198 = vxpose.xlu0.b32.end [16/16] 0.0, 128
        %v2199 = vpop.trf.xlu0
        %v2200 = vpop.trf.xlu0
        %v2201 = vpop.trf.xlu0
        %v2202 = vpop.trf.xlu0
        %v2203 = vpop.trf.xlu0
        %v2204 = vpop.trf.xlu0
        %v2205 = vpop.trf.xlu0
        %v2206 = vpop.trf.xlu0
        %v2207 = vpop.trf.xlu0
        %v2208 = vpop.trf.xlu0
        %v2209 = vpop.trf.xlu0
        %v2210 = vpop.trf.xlu0
        %v2211 = vpop.trf.xlu0
        %v2212 = vpop.trf.xlu0
        %v2213 = vpop.trf.xlu0
        %v2214 = vpop.trf.xlu0
        %2215 = vxpose.xlu0.b32.start [1/16] %v2100, 128
        %2216 = vxpose.xlu0.b32.cont [2/16] 0.0, 128
        %2217 = vxpose.xlu0.b32.cont [3/16] 0.0, 128
        %2218 = vxpose.xlu0.b32.cont [4/16] 0.0, 128
        %2219 = vxpose.xlu0.b32.cont [5/16] 0.0, 128
        %2220 = vxpose.xlu0.b32.cont [6/16] 0.0, 128
        %2221 = vxpose.xlu0.b32.cont [7/16] 0.0, 128
        %2222 = vxpose.xlu0.b32.cont [8/16] 0.0, 128
        %2223 = vxpose.xlu0.b32.cont [9/16] 0.0, 128
        %2224 = vxpose.xlu0.b32.cont [10/16] 0.0, 128
        %2225 = vxpose.xlu0.b32.cont [11/16] 0.0, 128
        %2226 = vxpose.xlu0.b32.cont [12/16] 0.0, 128
        %2227 = vxpose.xlu0.b32.cont [13/16] 0.0, 128
        %2228 = vxpose.xlu0.b32.cont [14/16] 0.0, 128
        %2229 = vxpose.xlu0.b32.cont [15/16] 0.0, 128
        %2230 = vxpose.xlu0.b32.end [16/16] 0.0, 128
        %v2231 = vpop.trf.xlu0
        %v2232 = vpop.trf.xlu0
        %v2233 = vpop.trf.xlu0
        %v2234 = vpop.trf.xlu0
        %v2235 = vpop.trf.xlu0
        %v2236 = vpop.trf.xlu0
        %v2237 = vpop.trf.xlu0
        %v2238 = vpop.trf.xlu0
        %v2239 = vpop.trf.xlu0
        %v2240 = vpop.trf.xlu0
        %v2241 = vpop.trf.xlu0
        %v2242 = vpop.trf.xlu0
        %v2243 = vpop.trf.xlu0
        %v2244 = vpop.trf.xlu0
        %v2245 = vpop.trf.xlu0
        %v2246 = vpop.trf.xlu0
        %2247 = vxpose.xlu0.b32.start [1/16] %v2146, 128
        %2248 = vxpose.xlu0.b32.cont [2/16] 0.0, 128
        %2249 = vxpose.xlu0.b32.cont [3/16] 0.0, 128
        %2250 = vxpose.xlu0.b32.cont [4/16] 0.0, 128
        %2251 = vxpose.xlu0.b32.cont [5/16] 0.0, 128
        %2252 = vxpose.xlu0.b32.cont [6/16] 0.0, 128
        %2253 = vxpose.xlu0.b32.cont [7/16] 0.0, 128
        %2254 = vxpose.xlu0.b32.cont [8/16] 0.0, 128
        %2255 = vxpose.xlu0.b32.cont [9/16] 0.0, 128
        %2256 = vxpose.xlu0.b32.cont [10/16] 0.0, 128
        %2257 = vxpose.xlu0.b32.cont [11/16] 0.0, 128
        %2258 = vxpose.xlu0.b32.cont [12/16] 0.0, 128
        %2259 = vxpose.xlu0.b32.cont [13/16] 0.0, 128
        %2260 = vxpose.xlu0.b32.cont [14/16] 0.0, 128
        %2261 = vxpose.xlu0.b32.cont [15/16] 0.0, 128
        %2262 = vxpose.xlu0.b32.end [16/16] 0.0, 128
        %v2263 = vpop.trf.xlu0
        %v2264 = vpop.trf.xlu0
        %v2265 = vpop.trf.xlu0
        %v2266 = vpop.trf.xlu0
        %v2267 = vpop.trf.xlu0
        %v2268 = vpop.trf.xlu0
        %v2269 = vpop.trf.xlu0
        %v2270 = vpop.trf.xlu0
        %v2271 = vpop.trf.xlu0
        %v2272 = vpop.trf.xlu0
        %v2273 = vpop.trf.xlu0
        %v2274 = vpop.trf.xlu0
        %v2275 = vpop.trf.xlu0
        %v2276 = vpop.trf.xlu0
        %v2277 = vpop.trf.xlu0
        %v2278 = vpop.trf.xlu0
        %v2279 = vcombine.low %v2167, %v2231
        %v2280 = vcombine.high %v2167, %v2231
        %v2282 = vunpack.c.l.s4 1983009808
        %v2283 = vunpack.c.0.s8 %v2282
        %v2284 = vlaneseq
        %v2285 = vshrl.u32 %v2284, 7
        %v2286 = vsub.s32 %v2283, %v2285
        %v2287 = vrot.slane %v2279, %v2286
        %v2289 = vunpack.c.l.s4 1983009808
        %v2290 = vunpack.c.0.s8 %v2289
        %v2291 = vlaneseq
        %v2292 = vshrl.u32 %v2291, 7
        %v2293 = vsub.s32 %v2290, %v2292
        %v2294 = vrot.slane %v2280, %v2293
        %v2295 = vcombine.low %v2199, %v2263
        %v2296 = vcombine.high %v2199, %v2263
        %v2298 = vunpack.c.l.s4 1983009808
        %v2299 = vunpack.c.0.s8 %v2298
        %v2300 = vlaneseq
        %v2301 = vshrl.u32 %v2300, 7
        %v2302 = vsub.s32 %v2299, %v2301
        %v2303 = vrot.slane %v2295, %v2302
        %v2305 = vunpack.c.l.s4 1983009808
        %v2306 = vunpack.c.0.s8 %v2305
        %v2307 = vlaneseq
        %v2308 = vshrl.u32 %v2307, 7
        %v2309 = vsub.s32 %v2306, %v2308
        %v2310 = vrot.slane %v2296, %v2309
        %v2311 = vcombine.low %v2287, %v2303
        %v2312 = vcombine.high %v2287, %v2303
        %v2314 = vunpack.c.l.s4 1934713408
        %v2315 = vunpack.c.0.s8 %v2314
        %v2316 = vlaneseq
        %v2317 = vshrl.u32 %v2316, 7
        %v2318 = vsub.s32 %v2315, %v2317
        %v2319 = vrot.slane %v2311, %v2318
        %v2321 = vunpack.c.l.s4 1934713408
        %v2322 = vunpack.c.0.s8 %v2321
        %v2323 = vlaneseq
        %v2324 = vshrl.u32 %v2323, 7
        %v2325 = vsub.s32 %v2322, %v2324
        %v2326 = vrot.slane %v2312, %v2325
        %v2327 = vcombine.low %v2294, %v2310
        %v2328 = vcombine.high %v2294, %v2310
        %v2330 = vunpack.c.l.s4 1934713408
        %v2331 = vunpack.c.0.s8 %v2330
        %v2332 = vlaneseq
        %v2333 = vshrl.u32 %v2332, 7
        %v2334 = vsub.s32 %v2331, %v2333
        %v2335 = vrot.slane %v2327, %v2334
        %v2337 = vunpack.c.l.s4 1934713408
        %v2338 = vunpack.c.0.s8 %v2337
        %v2339 = vlaneseq
        %v2340 = vshrl.u32 %v2339, 7
        %v2341 = vsub.s32 %v2338, %v2340
        %v2342 = vrot.slane %v2328, %v2341
        %v2343 = vcombine.high %v2319, 0.0
        %v2344 = vcombine.high %v2326, 0.0
        %v2345 = vcombine.high %v2335, 0.0
        %v2346 = vcombine.high %v2342, 0.0
        %v2347 = vcombine.low %v2319, %v2326
        %v2349 = vunpack.c.l.s4 1983009808
        %v2350 = vunpack.c.0.s8 %v2349
        %v2351 = vlaneseq
        %v2352 = vshrl.u32 %v2351, 7
        %v2353 = vsub.s32 %v2350, %v2352
        %v2354 = vrot.slane %v2347, %v2353
        %v2355 = vcombine.low %v2343, %v2344
        %v2357 = vunpack.c.l.s4 1983009808
        %v2358 = vunpack.c.0.s8 %v2357
        %v2359 = vlaneseq
        %v2360 = vshrl.u32 %v2359, 7
        %v2361 = vsub.s32 %v2358, %v2360
        %v2362 = vrot.slane %v2355, %v2361
        %v2363 = vcombine.low %v2335, %v2342
        %v2365 = vunpack.c.l.s4 1983009808
        %v2366 = vunpack.c.0.s8 %v2365
        %v2367 = vlaneseq
        %v2368 = vshrl.u32 %v2367, 7
        %v2369 = vsub.s32 %v2366, %v2368
        %v2370 = vrot.slane %v2363, %v2369
        %v2371 = vcombine.low %v2345, %v2346
        %v2373 = vunpack.c.l.s4 1983009808
        %v2374 = vunpack.c.0.s8 %v2373
        %v2375 = vlaneseq
        %v2376 = vshrl.u32 %v2375, 7
        %v2377 = vsub.s32 %v2374, %v2376
        %v2378 = vrot.slane %v2371, %v2377
        %v2379 = vcombine.low %v2354, %v2362
        %v2380 = vcombine.high %v2354, %v2362
        %v2382 = vunpack.c.l.s4 1934713408
        %v2383 = vunpack.c.0.s8 %v2382
        %v2384 = vlaneseq
        %v2385 = vshrl.u32 %v2384, 7
        %v2386 = vsub.s32 %v2383, %v2385
        %v2387 = vrot.slane %v2379, %v2386
        %v2389 = vunpack.c.l.s4 1934713408
        %v2390 = vunpack.c.0.s8 %v2389
        %v2391 = vlaneseq
        %v2392 = vshrl.u32 %v2391, 7
        %v2393 = vsub.s32 %v2390, %v2392
        %v2394 = vrot.slane %v2380, %v2393
        %v2395 = vcombine.low %v2370, %v2378
        %v2396 = vcombine.high %v2370, %v2378
        %v2398 = vunpack.c.l.s4 1934713408
        %v2399 = vunpack.c.0.s8 %v2398
        %v2400 = vlaneseq
        %v2401 = vshrl.u32 %v2400, 7
        %v2402 = vsub.s32 %v2399, %v2401
        %v2403 = vrot.slane %v2395, %v2402
        %v2405 = vunpack.c.l.s4 1934713408
        %v2406 = vunpack.c.0.s8 %v2405
        %v2407 = vlaneseq
        %v2408 = vshrl.u32 %v2407, 7
        %v2409 = vsub.s32 %v2406, %v2408
        %v2410 = vrot.slane %v2396, %v2409
        %v2411 = vcombine.low %v2387, %v2403
        %v2412 = vcombine.high %v2387, %v2403
        %v2413 = vcombine.low %v2394, %v2410
        %v2414 = vcombine.high %v2394, %v2410
        %2416 = vrot.lane.b32.xlu0 %v2412, 8
        %v2417 = vpop.permute.xlu0 %2416
        %2420 = vrot.lane.b32.xlu0 %v2413, 16
        %v2421 = vpop.permute.xlu0 %2420
        %2424 = vrot.lane.b32.xlu0 %v2414, 24
        %v2425 = vpop.permute.xlu0 %2424
        %v2427 = vsel %vm1307, %v2411, %v2417
        %vm2428 = vcmask 130048
        %v2429 = vsel %vm2428, %v2427, %v2421
        %vm2430 = vcmask 195584
        %v2431 = vsel %vm2430, %v2429, %v2425
        %v2432 = vpack.c.bf16 %v2431, %v2431
        %v2433 = vld [vmem:[%s4] sm:$0xf]
        %v2434 = vld [vmem:[%s4 + $0x4] sm:$0xf]
        %v2435 = vld [vmem:[%s4 + $0x8] sm:$0xf]
        %v2436 = vld [vmem:[%s4 + $0xc] sm:$0xf]
        %v2437 = vld [vmem:[#allocation2] sm:$0x1]
        %v2439 = vlaneseq
        %v2440 = vshrl.u32 %v2439, 7
        %v2441 = vsub.s32 0, %v2440
        %v2442 = vrot.slane %v2437, %v2441
        %v2448 = vunpack.c.l.b16 %v2433
        %v2449 = vunpack.c.l.b16 %v2434
        %v2450 = vunpack.c.l.b16 %v2435
        %v2451 = vunpack.c.l.b16 %v2436
        %v2452 = vpack.c.b16 %v2449, %v2448
        %v2453 = vpack.c.b16 %v2451, %v2450
        %v2457 = vsel %vm476, %v2432, 0
        %2459 = vmatprep.subr.bf16.mxu0 0
        %2460 = vmatpush1.bf16.msra.mxu0 %v2452
        %2461 = vmatprep.subr.bf16.mxu0 0
        %2462 = vmatpush1.bf16.msra.mxu0 %v2453
        %2463 = vmatprep.subr.bf16.mxu0 0
        %2464 = vmatpush1.bf16.msra.mxu0 0
        %2465 = vmatprep.subr.bf16.mxu0 0
        %2466 = vmatpush1.bf16.msra.mxu0 0
        %2467 = vmatprep.subr.bf16.mxu0 0
        %2468 = vmatpush1.bf16.msra.mxu0 0
        %2469 = vmatprep.subr.bf16.mxu0 0
        %2470 = vmatpush1.bf16.msra.mxu0 0
        %2471 = vmatprep.subr.bf16.mxu0 0
        %2472 = vmatpush1.bf16.msra.mxu0 0
        %2473 = vmatprep.subr.bf16.mxu0 0
        %2474 = vmatpush1.bf16.msra.mxu0 0
        %2475 = vmatprep.subr.bf16.mxu0 0
        %2476 = vmatpush1.bf16.msra.mxu0 0
        %2477 = vmatprep.subr.bf16.mxu0 0
        %2478 = vmatpush1.bf16.msra.mxu0 0
        %2479 = vmatprep.subr.bf16.mxu0 0
        %2480 = vmatpush1.bf16.msra.mxu0 0
        %2481 = vmatprep.subr.bf16.mxu0 0
        %2482 = vmatpush1.bf16.msra.mxu0 0
        %2483 = vmatprep.subr.bf16.mxu0 0
        %2484 = vmatpush1.bf16.msra.mxu0 0
        %2485 = vmatprep.subr.bf16.mxu0 0
        %2486 = vmatpush1.bf16.msra.mxu0 0
        %2487 = vmatprep.subr.bf16.mxu0 0
        %2488 = vmatpush1.bf16.msra.mxu0 0
        %2489 = vmatprep.subr.bf16.mxu0 0
        %2490 = vmatpush1.bf16.msra.mxu0 0
        %2491 = vmatprep.mubr.bf16.mxu0 0
        %2492 = vmatmul.mubr.bf16.gmra.mrb[0].mxu0 %v2457
        %v2493 = vpop.f32.mrb[0].mxu0
        %v2494 = vadd.f32 %v2442, %v2493
        %v2495 = vpop.f32.mrb[0].mxu0
        %v2496 = vpop.f32.mrb[0].mxu0
        %v2497 = vpop.f32.mrb[0].mxu0
        %2498 = vdwg.mxu0
        %v2499 = vadd.f32 %v2494, %v473
        %v2500 = vld [vmem:[#allocation4] sm:$0x1]
        %v2501 = vld [vmem:[#allocation6] sm:$0x1]
        %v2502 = vsel %vm476, %v2499, 0.0
        %2503 = vadd.xlane.f32.xlu0 %v2502
        %v2504 = vpop.xlane.xlu0 %2503
        %v2505 = vmul.f32 %v2504, %v480
        %v2506 = vsub.f32 %v2499, %v2505
        %v2507 = vmul.f32 %v2506, %v2506
        %v2508 = vsel %vm476, %v2507, 0.0
        %2509 = vadd.xlane.f32.xlu0 %v2508
        %v2510 = vpop.xlane.xlu0 %2509
        %v2511 = vmul.f32 %v2510, %v480
        %v2512 = vadd.f32 %v2511, 1e-05
        %v2513 = vrsqrt.pop %v2512
        %v2514 = vmul.f32 %v2506, %v2513
        %v2516 = vlaneseq
        %v2517 = vshrl.u32 %v2516, 7
        %v2518 = vsub.s32 0, %v2517
        %v2519 = vrot.slane %v2500, %v2518
        %v2521 = vmul.f32 %v2514, %v2519
        %v2523 = vlaneseq
        %v2524 = vshrl.u32 %v2523, 7
        %v2525 = vsub.s32 0, %v2524
        %v2526 = vrot.slane %v2501, %v2525
        %v2528 = vadd.f32 %v2521, %v2526
        %v2529 = vpack.c.bf16 %v2528, %v2528
        %v2530 = vld [vmem:[%s8] sm:$0xf]
        %v2531 = vld [vmem:[%s8 + $0x4] sm:$0xf]
        %v2532 = vld [vmem:[%s8 + $0x8] sm:$0xf]
        %v2533 = vld [vmem:[%s8 + $0xc] sm:$0xf]
        %v2534 = vld [vmem:[#allocation7] sm:$0x1]
        %v2536 = vlaneseq
        %v2537 = vshrl.u32 %v2536, 7
        %v2538 = vsub.s32 0, %v2537
        %v2539 = vrot.slane %v2534, %v2538
        %v2545 = vunpack.c.l.b16 %v2530
        %v2546 = vunpack.c.l.b16 %v2531
        %v2547 = vunpack.c.l.b16 %v2532
        %v2548 = vunpack.c.l.b16 %v2533
        %v2549 = vpack.c.b16 %v2546, %v2545
        %v2550 = vpack.c.b16 %v2548, %v2547
        %v2554 = vsel %vm476, %v2529, 0
        %2556 = vmatprep.subr.bf16.mxu0 0
        %2557 = vmatpush1.bf16.msra.mxu0 %v2549
        %2558 = vmatprep.subr.bf16.mxu0 0
        %2559 = vmatpush1.bf16.msra.mxu0 %v2550
        %2560 = vmatprep.subr.bf16.mxu0 0
        %2561 = vmatpush1.bf16.msra.mxu0 0
        %2562 = vmatprep.subr.bf16.mxu0 0
        %2563 = vmatpush1.bf16.msra.mxu0 0
        %2564 = vmatprep.subr.bf16.mxu0 0
        %2565 = vmatpush1.bf16.msra.mxu0 0
        %2566 = vmatprep.subr.bf16.mxu0 0
        %2567 = vmatpush1.bf16.msra.mxu0 0
        %2568 = vmatprep.subr.bf16.mxu0 0
        %2569 = vmatpush1.bf16.msra.mxu0 0
        %2570 = vmatprep.subr.bf16.mxu0 0
        %2571 = vmatpush1.bf16.msra.mxu0 0
        %2572 = vmatprep.subr.bf16.mxu0 0
        %2573 = vmatpush1.bf16.msra.mxu0 0
        %2574 = vmatprep.subr.bf16.mxu0 0
        %2575 = vmatpush1.bf16.msra.mxu0 0
        %2576 = vmatprep.subr.bf16.mxu0 0
        %2577 = vmatpush1.bf16.msra.mxu0 0
        %2578 = vmatprep.subr.bf16.mxu0 0
        %2579 = vmatpush1.bf16.msra.mxu0 0
        %2580 = vmatprep.subr.bf16.mxu0 0
        %2581 = vmatpush1.bf16.msra.mxu0 0
        %2582 = vmatprep.subr.bf16.mxu0 0
        %2583 = vmatpush1.bf16.msra.mxu0 0
        %2584 = vmatprep.subr.bf16.mxu0 0
        %2585 = vmatpush1.bf16.msra.mxu0 0
        %2586 = vmatprep.subr.bf16.mxu0 0
        %2587 = vmatpush1.bf16.msra.mxu0 0
        %2588 = vmatprep.mubr.bf16.mxu0 0
        %2589 = vmatmul.mubr.bf16.gmra.mrb[0].mxu0 %v2554
        %v2590 = vpop.f32.mrb[0].mxu0
        %v2591 = vadd.f32 %v2539, %v2590
        %v2592 = vpop.f32.mrb[0].mxu0
        %v2593 = vpop.f32.mrb[0].mxu0
        %v2594 = vpop.f32.mrb[0].mxu0
        %2595 = vdwg.mxu0
        %v2596 = vmul.f32 %v2591, 0.5
        %v2597 = vmul.f32 %v2591, 0.70710677
        %v2598 = verf.f32.pop %v2597
        %v2599 = vadd.f32 %v2598, 1.0
        %v2600 = vmul.f32 %v2596, %v2599
        %v2601 = vpack.c.bf16 %v2600, %v2600
        %v2602 = vld [vmem:[%s10] sm:$0xf]
        %v2603 = vld [vmem:[%s10 + $0x4] sm:$0xf]
        %v2604 = vld [vmem:[%s10 + $0x8] sm:$0xf]
        %v2605 = vld [vmem:[%s10 + $0xc] sm:$0xf]
        %v2606 = vld [vmem:[%s10 + $0x10] sm:$0xf]
        %v2607 = vld [vmem:[%s10 + $0x14] sm:$0xf]
        %v2608 = vld [vmem:[%s10 + $0x18] sm:$0xf]
        %v2609 = vld [vmem:[%s10 + $0x1c] sm:$0xf]
        %v2610 = vld [vmem:[#allocation9] sm:$0x1]
        %v2612 = vlaneseq
        %v2613 = vshrl.u32 %v2612, 7
        %v2614 = vsub.s32 0, %v2613
        %v2615 = vrot.slane %v2610, %v2614
        %v2625 = vunpack.c.l.b16 %v2602
        %v2626 = vunpack.c.l.b16 %v2603
        %v2627 = vunpack.c.l.b16 %v2604
        %v2628 = vunpack.c.l.b16 %v2605
        %v2629 = vunpack.c.l.b16 %v2606
        %v2630 = vunpack.c.l.b16 %v2607
        %v2631 = vunpack.c.l.b16 %v2608
        %v2632 = vunpack.c.l.b16 %v2609
        %v2633 = vpack.c.b16 %v2626, %v2625
        %v2634 = vpack.c.b16 %v2628, %v2627
        %v2635 = vpack.c.b16 %v2630, %v2629
        %v2636 = vpack.c.b16 %v2632, %v2631
        %vm2641 = vcmask 523264
        %v2643 = vsel %vm2641, %v2601, 0
        %2645 = vmatprep.subr.bf16.mxu0 0
        %2646 = vmatpush1.bf16.msra.mxu0 %v2633
        %2647 = vmatprep.subr.bf16.mxu0 0
        %2648 = vmatpush1.bf16.msra.mxu0 %v2634
        %2649 = vmatprep.subr.bf16.mxu0 0
        %2650 = vmatpush1.bf16.msra.mxu0 %v2635
        %2651 = vmatprep.subr.bf16.mxu0 0
        %2652 = vmatpush1.bf16.msra.mxu0 %v2636
        %2653 = vmatprep.subr.bf16.mxu0 0
        %2654 = vmatpush1.bf16.msra.mxu0 0
        %2655 = vmatprep.subr.bf16.mxu0 0
        %2656 = vmatpush1.bf16.msra.mxu0 0
        %2657 = vmatprep.subr.bf16.mxu0 0
        %2658 = vmatpush1.bf16.msra.mxu0 0
        %2659 = vmatprep.subr.bf16.mxu0 0
        %2660 = vmatpush1.bf16.msra.mxu0 0
        %2661 = vmatprep.subr.bf16.mxu0 0
        %2662 = vmatpush1.bf16.msra.mxu0 0
        %2663 = vmatprep.subr.bf16.mxu0 0
        %2664 = vmatpush1.bf16.msra.mxu0 0
        %2665 = vmatprep.subr.bf16.mxu0 0
        %2666 = vmatpush1.bf16.msra.mxu0 0
        %2667 = vmatprep.subr.bf16.mxu0 0
        %2668 = vmatpush1.bf16.msra.mxu0 0
        %2669 = vmatprep.subr.bf16.mxu0 0
        %2670 = vmatpush1.bf16.msra.mxu0 0
        %2671 = vmatprep.subr.bf16.mxu0 0
        %2672 = vmatpush1.bf16.msra.mxu0 0
        %2673 = vmatprep.subr.bf16.mxu0 0
        %2674 = vmatpush1.bf16.msra.mxu0 0
        %2675 = vmatprep.subr.bf16.mxu0 0
        %2676 = vmatpush1.bf16.msra.mxu0 0
        %2677 = vmatprep.mubr.bf16.mxu0 0
        %2678 = vmatmul.mubr.bf16.gmra.mrb[0].mxu0 %v2643
        %v2679 = vpop.f32.mrb[0].mxu0
        %v2680 = vadd.f32 %v2615, %v2679
        %v2681 = vpop.f32.mrb[0].mxu0
        %v2682 = vpop.f32.mrb[0].mxu0
        %v2683 = vpop.f32.mrb[0].mxu0
        %2684 = vdwg.mxu0
        %v2685 = vadd.f32 %v2680, %v2499
        %2686 = vst.msk [vmem:[%s471] sm:$0xff] %vm476, %v2685
        %p2687 = scmp.lt.s32.totalorder %s26, 1
        %s2688 = scalar_select %p2687, %s26, 1
        %s2689 = smul.addr %s2688, 8
        %s2690 = scalar_lea.vmem %s12, %s2689
        // Predicated region
        $region89: #{transformer_forward.2} parent=67 // pred_check
          %p2691 = pneg %p301
        $region90: #{transformer_forward.2} parent=67 // pred_check_branch
          %2693 = sbr.rel (%p2691) target = $region92
        $region91: #{transformer_forward.2} parent=67 // pred_region
          _
        $region92: #{transformer_forward.2} parent=67 // pred_fallthru
          _
      $region68: #{transformer_forward.2} parent=5 // pred_fallthru
        _
      %p2694 = scmp.le.s32.totalorder 2, %s21
      // Predicated region
      $region93: #{transformer_forward.2} parent=5 // pred_check
        %p2695 = pneg %p2694
      $region94: #{transformer_forward.2} parent=5 // pred_check_branch
        %2697 = sbr.rel (%p2695) target = $region96
      $region95: #{transformer_forward.2} parent=5 // pred_region
        %s2698 = ssub.s32 %s21, 2
        // Predicated region
        $region97: #{transformer_forward.2} parent=95 // pred_check
          %p2699 = pneg %p307
        $region98: #{transformer_forward.2} parent=95 // pred_check_branch
          %2701 = sbr.rel (%p2699) target = $region100
        $region99: #{transformer_forward.2} parent=95 // pred_region
          %p2702 = scmp.lt.s32.totalorder %s27, 1
          %s2703 = scalar_select %p2702, %s27, 1
          %s2704 = smul.addr %s2703, 8
          %s2705 = scalar_lea.vmem %s12, %s2704
        $region100: #{transformer_forward.2} parent=95 // pred_fallthru
          _
      $region96: #{transformer_forward.2} parent=5 // pred_fallthru
        _
    $region6: #{transformer_forward.2} parent=1 // loop_footer
      %s25 = sadd.s32 1, %s21
    $region7: #{transformer_forward.2} parent=1 // loop_footer_branch
      %20 = sbr.rel target = $region3
    $region8: #{transformer_forward.2} parent=1 // loop_exit
      _
    %2706 = vsyncpa [#allocation3], 1
    %s2707 = scalar_lea.sflag [#allocation3], 1
    %2708 = vsyncpa %s2707, 1
    %2709 = vsyncpa [#allocation5], 1
    %2710 = vsyncpa [#allocation8], 1

</llo_original>
